<compile_context>
chip_gen: v5e
topology: v5e:2x2
jax: 0.10.0
libtpu: 0.0.40
codegen_flags: <defaults>
</compile_context>

<pallas_src>
import functools

import jax
import jax.numpy as jnp
from jax.experimental import pallas as pl
from jax.experimental.pallas import tpu as pltpu


def _round_up(n: int, m: int) -> int:
    return (n + m - 1) // m * m


def _projection_head_kernel(x_ref, w1_ref, g1_ref, b1_ref,
                            w2_ref, g2_ref, b2_ref, o_ref,
                            *, true_batch: int, padded_batch: int):
    """One ProjectionHead forward for the current grid step (= one head)."""
    eps = 1e-5
    inv_n = 1.0 / true_batch          # trace-time constant — no mask operand needed

    # ---- Linear 1 (no bias): bf16 MXU operands, f32 accumulation ----
    h = jnp.dot(x_ref[...], w1_ref[...], preferred_element_type=jnp.float32)

    # ---- BatchNorm1d #1 (training-mode batch stats, biased variance), one pass.
    # Padded batch rows of h are exactly zero (x pad rows are zero, no bias), so
    # unmasked column sums already equal the sums over the true batch.
    s1 = jnp.sum(h, axis=0, keepdims=True)
    q1 = jnp.sum(h * h, axis=0, keepdims=True)
    mean1 = s1 * inv_n
    var1 = jnp.maximum(q1 * inv_n - mean1 * mean1, 0.0)   # clamp: one-pass var can dip <0
    h = (h - mean1) * (jax.lax.rsqrt(var1 + eps) * g1_ref[...]) + b1_ref[...]

    # ---- ReLU (f32 VPU math; v5e has no bf16 VPU/EUP) ----
    h = jnp.maximum(h, 0.0)
    if true_batch != padded_batch:
        # Zero out pad rows so they don't pollute BN2's statistics.  Built from the
        # trace-time-known row count — no extra DMA'd operand.
        row = jax.lax.broadcasted_iota(jnp.int32, (padded_batch, 1), 0)
        h = jnp.where(row < true_batch, h, 0.0)

    # ---- Linear 2 (no bias): bf16 MXU operands, f32 accumulation ----
    z = jnp.dot(h.astype(jnp.bfloat16), w2_ref[...],
                preferred_element_type=jnp.float32)

    # ---- BatchNorm1d #2, same one-pass stats ----
    s2 = jnp.sum(z, axis=0, keepdims=True)
    q2 = jnp.sum(z * z, axis=0, keepdims=True)
    mean2 = s2 * inv_n
    var2 = jnp.maximum(q2 * inv_n - mean2 * mean2, 0.0)
    z = (z - mean2) * (jax.lax.rsqrt(var2 + eps) * g2_ref[...]) + b2_ref[...]

    o_ref[...] = z.astype(o_ref.dtype)


def prepare_projection_heads(heads):
    """One-time parameter preparation, hoisted out of the per-call path.

    heads: list of (w1, g1, b1, w2, g2, b2) with w1: (in, hidden), w2: (hidden, out)
    — i.e. transposed vs nn.Linear storage so the kernel computes x @ W.
    Returns stacked, lane-padded, bf16-cast parameters (one leading axis per head).
    """
    Fin, H = heads[0][0].shape
    Fout = heads[0][3].shape[1]
    Finp, Hp, Foutp = _round_up(Fin, 128), _round_up(H, 128), _round_up(Fout, 128)

    def pad2(a, rows, cols):
        pr, pc = rows - a.shape[0], cols - a.shape[1]
        if pr or pc:                       # no-op pads are elided at trace time
            a = jnp.pad(a, ((0, pr), (0, pc)))
        return a

    w1s, g1s, b1s, w2s, g2s, b2s = [], [], [], [], [], []
    for (w1, g1, b1, w2, g2, b2) in heads:
        w1s.append(pad2(w1.astype(jnp.bfloat16), Finp, Hp))
        w2s.append(pad2(w2.astype(jnp.bfloat16), Hp, Foutp))
        g1s.append(pad2(jnp.reshape(g1, (1, H)).astype(jnp.float32), 1, Hp))
        b1s.append(pad2(jnp.reshape(b1, (1, H)).astype(jnp.float32), 1, Hp))
        g2s.append(pad2(jnp.reshape(g2, (1, Fout)).astype(jnp.float32), 1, Foutp))
        b2s.append(pad2(jnp.reshape(b2, (1, Fout)).astype(jnp.float32), 1, Foutp))

    return {
        "w1": jnp.stack(w1s), "g1": jnp.stack(g1s), "b1": jnp.stack(b1s),
        "w2": jnp.stack(w2s), "g2": jnp.stack(g2s), "b2": jnp.stack(b2s),
        "dims": (Fin, H, Fout),
    }


def projection_heads_forward(xs, params):
    """xs: (n_heads, B, in) f32 — one input per head (MultiModal has 3 projector
    heads fed by the xray / ecg / text encoders).  params: output of
    prepare_projection_heads.  Returns (n_heads, B, out) f32.

    All heads run in one pallas_call with a leading 'parallel' grid axis, so the
    per-call launch/dispatch overhead is amortized and v7x's two TensorCores can
    split the heads."""
    Fin, H, Fout = params["dims"]
    Nh, B, _ = xs.shape
    Bp = _round_up(B, 8)                       # f32 sublane granularity
    Finp = params["w1"].shape[1]
    Hp = params["w1"].shape[2]
    Foutp = params["w2"].shape[2]

    # Only x is cast/padded per call (weights were prepared once, above).
    xp = xs.astype(jnp.bfloat16)
    if Bp != B or Finp != Fin:
        xp = jnp.pad(xp, ((0, 0), (0, Bp - B), (0, Finp - Fin)))

    kernel = functools.partial(_projection_head_kernel,
                               true_batch=B, padded_batch=Bp)

    operands = (xp, params["w1"], params["g1"], params["b1"],
                params["w2"], params["g2"], params["b2"])

    # VMEM budget: double-buffered per-grid-step operands/outputs + f32
    # intermediates + a few MiB headroom, capped at v7x's 64 MiB physical VMEM.
    per_step_in = (Bp * Finp + Finp * Hp + Hp * Foutp) * 2 + (2 * Hp + 2 * Foutp) * 4
    per_step_out = Bp * Foutp * 4
    intermediates = Bp * Hp * 4 + Bp * Foutp * 4
    vmem_limit = int(min(64 << 20,
                         2 * (per_step_in + per_step_out) + intermediates + (8 << 20)))

    out = pl.pallas_call(
        kernel,
        out_shape=jax.ShapeDtypeStruct((Nh, Bp, Foutp), jnp.float32),
        grid=(Nh,),
        in_specs=[
            pl.BlockSpec((None, Bp, Finp), lambda h: (h, 0, 0)),   # x (per head)
            pl.BlockSpec((None, Finp, Hp), lambda h: (h, 0, 0)),   # w1
            pl.BlockSpec((None, 1, Hp), lambda h: (h, 0, 0)),      # gamma1
            pl.BlockSpec((None, 1, Hp), lambda h: (h, 0, 0)),      # beta1
            pl.BlockSpec((None, Hp, Foutp), lambda h: (h, 0, 0)),  # w2
            pl.BlockSpec((None, 1, Foutp), lambda h: (h, 0, 0)),   # gamma2
            pl.BlockSpec((None, 1, Foutp), lambda h: (h, 0, 0)),   # beta2
        ],
        out_specs=pl.BlockSpec((None, Bp, Foutp), lambda h: (h, 0, 0)),
        compiler_params=pltpu.CompilerParams(
            dimension_semantics=("parallel",),
            vmem_limit_bytes=vmem_limit,
        ),
    )(*operands)

    if Bp != B or Foutp != Fout:
        out = out[:, :B, :Fout]
    return out


def reference(x, w1, g1, b1, w2, g2, b2):
    """Pure-JAX f32 reference matching PyTorch training-mode BatchNorm1d."""
    eps = 1e-5

    def bn(t, g, b):
        m = t.mean(0, keepdims=True)
        v = ((t - m) ** 2).mean(0, keepdims=True)   # biased variance
        return (t - m) / jnp.sqrt(v + eps) * g.reshape(1, -1) + b.reshape(1, -1)

    h = jnp.maximum(bn(x @ w1, g1, b1), 0.0)
    return bn(h @ w2, g2, b2)


if __name__ == "__main__":
    # MultiModal's three projector heads: ProjectionHead(768, 128, 768)
    #   in_features=768, hidden_features=768, out_features=128.
    batch, in_f, hid_f, out_f = 16, 768, 768, 128
    n_heads = 3   # projector_xray_text, projector_ecg_text, projector_text

    key = jax.random.PRNGKey(0)
    kx, kw = jax.random.split(key)
    xkeys = jax.random.split(kx, n_heads)
    wkeys = jax.random.split(kw, 2 * n_heads)

    xs = jnp.stack([jax.random.normal(xkeys[i], (batch, in_f), dtype=jnp.float32)
                    for i in range(n_heads)])

    heads = []
    for i in range(n_heads):
        w1 = jax.random.uniform(wkeys[2 * i], (in_f, hid_f), jnp.float32,
                                minval=-1.0, maxval=1.0) / jnp.sqrt(in_f)
        w2 = jax.random.uniform(wkeys[2 * i + 1], (hid_f, out_f), jnp.float32,
                                minval=-1.0, maxval=1.0) / jnp.sqrt(hid_f)
        g1 = jnp.ones((hid_f,), jnp.float32)
        b1 = jnp.zeros((hid_f,), jnp.float32)
        g2 = jnp.ones((out_f,), jnp.float32)
        b2 = jnp.zeros((out_f,), jnp.float32)
        heads.append((w1, g1, b1, w2, g2, b2))

    # One-time prep (hoisted weight bf16 cast + lane padding + per-head stacking).
    params = prepare_projection_heads(heads)

    # Run 1: aligned batch — no pads, no mask; all 3 heads in one pallas_call.
    out = jax.block_until_ready(projection_heads_forward(xs, params))
    assert out.shape == (n_heads, batch, out_f)
    for i in range(n_heads):
        ref = reference(xs[i], *heads[i])
        assert jnp.allclose(out[i], ref, atol=5e-2, rtol=5e-2), \
            f"head {i}: mismatch vs f32 reference (aligned batch)"

    # Run 2: unaligned batch (12 rows) — exercises sublane padding + in-kernel iota
    # row mask (BN stats must be over the true 12 rows, not the padded 16).
    xs12 = xs[:, :12]
    out12 = jax.block_until_ready(projection_heads_forward(xs12, params))
    assert out12.shape == (n_heads, 12, out_f)
    for i in range(n_heads):
        ref = reference(xs12[i], *heads[i])
        assert jnp.allclose(out12[i], ref, atol=5e-2, rtol=5e-2), \
            f"head {i}: mismatch vs f32 reference (padded batch)"

    print("KERNEL_OK")
</pallas_src>

<mosaic_0001>
module attributes {stable_mosaic.version = 11 : i64} {
  func.func @_projection_head_kernel(%arg0: i32, %arg1: memref<1x16x768xbf16, #tpu.memory_space<vmem>>, %arg2: memref<1x768x768xbf16, #tpu.memory_space<vmem>>, %arg3: memref<1x1x768xf32, #tpu.memory_space<vmem>>, %arg4: memref<1x1x768xf32, #tpu.memory_space<vmem>>, %arg5: memref<1x768x128xbf16, #tpu.memory_space<vmem>>, %arg6: memref<1x1x128xf32, #tpu.memory_space<vmem>>, %arg7: memref<1x1x128xf32, #tpu.memory_space<vmem>>, %arg8: memref<1x16x128xf32, #tpu.memory_space<vmem>>) attributes {dimension_semantics = [#tpu.dimension_semantics<parallel>], iteration_bounds = array<i64: 3>, scalar_prefetch = 0 : i64, scratch_operands = 0 : i64, tpu.core_type = #tpu.core_type<tc>, window_params = [{transform_indices = @transform_0, window_bounds = array<i64: 1, 16, 768>}, {transform_indices = @transform_1, window_bounds = array<i64: 1, 768, 768>}, {transform_indices = @transform_2, window_bounds = array<i64: 1, 1, 768>}, {transform_indices = @transform_3, window_bounds = array<i64: 1, 1, 768>}, {transform_indices = @transform_4, window_bounds = array<i64: 1, 768, 128>}, {transform_indices = @transform_5, window_bounds = array<i64: 1, 1, 128>}, {transform_indices = @transform_6, window_bounds = array<i64: 1, 1, 128>}, {transform_indices = @transform_7, window_bounds = array<i64: 1, 16, 128>}]} {
    %c0 = arith.constant 0 : index
    %c0_0 = arith.constant 0 : index
    %c0_1 = arith.constant 0 : index
    %0 = vector.load %arg1[%c0, %c0_0, %c0_1] : memref<1x16x768xbf16, #tpu.memory_space<vmem>>, vector<1x16x768xbf16>
    %1 = vector.shape_cast %0 : vector<1x16x768xbf16> to vector<16x768xbf16>
    %c0_2 = arith.constant 0 : index
    %c0_3 = arith.constant 0 : index
    %c0_4 = arith.constant 0 : index
    %2 = vector.load %arg2[%c0_2, %c0_3, %c0_4] : memref<1x768x768xbf16, #tpu.memory_space<vmem>>, vector<1x768x768xbf16>
    %3 = vector.shape_cast %2 : vector<1x768x768xbf16> to vector<768x768xbf16>
    %cst = arith.constant dense<0.000000e+00> : vector<16x768xf32>
    %4 = tpu.matmul %1, %3, %cst {dimension_numbers = #tpu.dot_dimension_numbers<[1], [0], [0], [1], [0, 0, 1, 1], [], []>} : vector<16x768xbf16>, vector<768x768xbf16>, vector<16x768xf32> -> vector<16x768xf32>
    %cst_5 = arith.constant dense<0.000000e+00> : vector<768xf32>
    %5 = vector.multi_reduction <add>, %4, %cst_5 [0] : vector<16x768xf32> to vector<768xf32>
    %6 = vector.shape_cast %5 : vector<768xf32> to vector<1x768xf32>
    %7 = arith.mulf %4, %4 : vector<16x768xf32>
    %cst_6 = arith.constant dense<0.000000e+00> : vector<768xf32>
    %8 = vector.multi_reduction <add>, %7, %cst_6 [0] : vector<16x768xf32> to vector<768xf32>
    %9 = vector.shape_cast %8 : vector<768xf32> to vector<1x768xf32>
    %cst_7 = arith.constant 6.250000e-02 : f32
    %10 = vector.broadcast %cst_7 : f32 to vector<1x768xf32>
    %11 = arith.mulf %6, %10 : vector<1x768xf32>
    %cst_8 = arith.constant 6.250000e-02 : f32
    %12 = vector.broadcast %cst_8 : f32 to vector<1x768xf32>
    %13 = arith.mulf %9, %12 : vector<1x768xf32>
    %14 = arith.mulf %11, %11 : vector<1x768xf32>
    %15 = arith.subf %13, %14 : vector<1x768xf32>
    %cst_9 = arith.constant 0.000000e+00 : f32
    %16 = vector.broadcast %cst_9 : f32 to vector<1x768xf32>
    %17 = arith.maximumf %15, %16 : vector<1x768xf32>
    %18 = vector.broadcast %11 : vector<1x768xf32> to vector<16x768xf32>
    %19 = arith.subf %4, %18 : vector<16x768xf32>
    %cst_10 = arith.constant 9.99999974E-6 : f32
    %20 = vector.broadcast %cst_10 : f32 to vector<1x768xf32>
    %21 = arith.addf %17, %20 : vector<1x768xf32>
    %22 = math.rsqrt %21 : vector<1x768xf32>
    %c0_11 = arith.constant 0 : index
    %c0_12 = arith.constant 0 : index
    %c0_13 = arith.constant 0 : index
    %23 = vector.load %arg3[%c0_11, %c0_12, %c0_13] : memref<1x1x768xf32, #tpu.memory_space<vmem>>, vector<1x1x768xf32>
    %24 = vector.shape_cast %23 : vector<1x1x768xf32> to vector<1x768xf32>
    %25 = arith.mulf %22, %24 : vector<1x768xf32>
    %26 = vector.broadcast %25 : vector<1x768xf32> to vector<16x768xf32>
    %27 = arith.mulf %19, %26 : vector<16x768xf32>
    %c0_14 = arith.constant 0 : index
    %c0_15 = arith.constant 0 : index
    %c0_16 = arith.constant 0 : index
    %28 = vector.load %arg4[%c0_14, %c0_15, %c0_16] : memref<1x1x768xf32, #tpu.memory_space<vmem>>, vector<1x1x768xf32>
    %29 = vector.shape_cast %28 : vector<1x1x768xf32> to vector<1x768xf32>
    %30 = vector.broadcast %29 : vector<1x768xf32> to vector<16x768xf32>
    %31 = arith.addf %27, %30 : vector<16x768xf32>
    %cst_17 = arith.constant 0.000000e+00 : f32
    %32 = vector.broadcast %cst_17 : f32 to vector<16x768xf32>
    %33 = arith.maximumf %31, %32 : vector<16x768xf32>
    %34 = arith.truncf %33 : vector<16x768xf32> to vector<16x768xbf16>
    %c0_18 = arith.constant 0 : index
    %c0_19 = arith.constant 0 : index
    %c0_20 = arith.constant 0 : index
    %35 = vector.load %arg5[%c0_18, %c0_19, %c0_20] : memref<1x768x128xbf16, #tpu.memory_space<vmem>>, vector<1x768x128xbf16>
    %36 = vector.shape_cast %35 : vector<1x768x128xbf16> to vector<768x128xbf16>
    %cst_21 = arith.constant dense<0.000000e+00> : vector<16x128xf32>
    %37 = tpu.matmul %34, %36, %cst_21 {dimension_numbers = #tpu.dot_dimension_numbers<[1], [0], [0], [1], [0, 0, 1, 1], [], []>} : vector<16x768xbf16>, vector<768x128xbf16>, vector<16x128xf32> -> vector<16x128xf32>
    %cst_22 = arith.constant dense<0.000000e+00> : vector<128xf32>
    %38 = vector.multi_reduction <add>, %37, %cst_22 [0] : vector<16x128xf32> to vector<128xf32>
    %39 = vector.shape_cast %38 : vector<128xf32> to vector<1x128xf32>
    %40 = arith.mulf %37, %37 : vector<16x128xf32>
    %cst_23 = arith.constant dense<0.000000e+00> : vector<128xf32>
    %41 = vector.multi_reduction <add>, %40, %cst_23 [0] : vector<16x128xf32> to vector<128xf32>
    %42 = vector.shape_cast %41 : vector<128xf32> to vector<1x128xf32>
    %cst_24 = arith.constant 6.250000e-02 : f32
    %43 = vector.broadcast %cst_24 : f32 to vector<1x128xf32>
    %44 = arith.mulf %39, %43 : vector<1x128xf32>
    %cst_25 = arith.constant 6.250000e-02 : f32
    %45 = vector.broadcast %cst_25 : f32 to vector<1x128xf32>
    %46 = arith.mulf %42, %45 : vector<1x128xf32>
    %47 = arith.mulf %44, %44 : vector<1x128xf32>
    %48 = arith.subf %46, %47 : vector<1x128xf32>
    %cst_26 = arith.constant 0.000000e+00 : f32
    %49 = vector.broadcast %cst_26 : f32 to vector<1x128xf32>
    %50 = arith.maximumf %48, %49 : vector<1x128xf32>
    %51 = vector.broadcast %44 : vector<1x128xf32> to vector<16x128xf32>
    %52 = arith.subf %37, %51 : vector<16x128xf32>
    %cst_27 = arith.constant 9.99999974E-6 : f32
    %53 = vector.broadcast %cst_27 : f32 to vector<1x128xf32>
    %54 = arith.addf %50, %53 : vector<1x128xf32>
    %55 = math.rsqrt %54 : vector<1x128xf32>
    %c0_28 = arith.constant 0 : index
    %c0_29 = arith.constant 0 : index
    %c0_30 = arith.constant 0 : index
    %56 = vector.load %arg6[%c0_28, %c0_29, %c0_30] : memref<1x1x128xf32, #tpu.memory_space<vmem>>, vector<1x1x128xf32>
    %57 = vector.shape_cast %56 : vector<1x1x128xf32> to vector<1x128xf32>
    %58 = arith.mulf %55, %57 : vector<1x128xf32>
    %59 = vector.broadcast %58 : vector<1x128xf32> to vector<16x128xf32>
    %60 = arith.mulf %52, %59 : vector<16x128xf32>
    %c0_31 = arith.constant 0 : index
    %c0_32 = arith.constant 0 : index
    %c0_33 = arith.constant 0 : index
    %61 = vector.load %arg7[%c0_31, %c0_32, %c0_33] : memref<1x1x128xf32, #tpu.memory_space<vmem>>, vector<1x1x128xf32>
    %62 = vector.shape_cast %61 : vector<1x1x128xf32> to vector<1x128xf32>
    %63 = vector.broadcast %62 : vector<1x128xf32> to vector<16x128xf32>
    %64 = arith.addf %60, %63 : vector<16x128xf32>
    %c0_34 = arith.constant 0 : index
    %c0_35 = arith.constant 0 : index
    %c0_36 = arith.constant 0 : index
    %65 = vector.load %arg8[%c0_34, %c0_35, %c0_36] : memref<1x16x128xf32, #tpu.memory_space<vmem>>, vector<1x16x128xf32>
    %66 = vector.shape_cast %65 : vector<1x16x128xf32> to vector<16x128xf32>
    %67 = vector.shape_cast %64 : vector<16x128xf32> to vector<1x16x128xf32>
    tpu.vector_store %arg8[%c0_34, %c0_35, %c0_36], %67 {strides = array<i32>} : memref<1x16x128xf32, #tpu.memory_space<vmem>>, vector<1x16x128xf32>,
    return
  }
  func.func @transform_0(%arg0: i32) -> (i32, i32, i32) {
    %c0_i32 = arith.constant 0 : i32
    %c0_i32_0 = arith.constant 0 : i32
    %c0_i32_1 = arith.constant 0 : i32
    return %arg0, %c0_i32, %c0_i32_0 : i32, i32, i32
  }
  func.func @transform_1(%arg0: i32) -> (i32, i32, i32) {
    %c0_i32 = arith.constant 0 : i32
    %c0_i32_0 = arith.constant 0 : i32
    %c0_i32_1 = arith.constant 0 : i32
    return %arg0, %c0_i32, %c0_i32_0 : i32, i32, i32
  }
  func.func @transform_2(%arg0: i32) -> (i32, i32, i32) {
    %c0_i32 = arith.constant 0 : i32
    %c0_i32_0 = arith.constant 0 : i32
    %c0_i32_1 = arith.constant 0 : i32
    return %arg0, %c0_i32, %c0_i32_0 : i32, i32, i32
  }
  func.func @transform_3(%arg0: i32) -> (i32, i32, i32) {
    %c0_i32 = arith.constant 0 : i32
    %c0_i32_0 = arith.constant 0 : i32
    %c0_i32_1 = arith.constant 0 : i32
    return %arg0, %c0_i32, %c0_i32_0 : i32, i32, i32
  }
  func.func @transform_4(%arg0: i32) -> (i32, i32, i32) {
    %c0_i32 = arith.constant 0 : i32
    %c0_i32_0 = arith.constant 0 : i32
    %c0_i32_1 = arith.constant 0 : i32
    return %arg0, %c0_i32, %c0_i32_0 : i32, i32, i32
  }
  func.func @transform_5(%arg0: i32) -> (i32, i32, i32) {
    %c0_i32 = arith.constant 0 : i32
    %c0_i32_0 = arith.constant 0 : i32
    %c0_i32_1 = arith.constant 0 : i32
    return %arg0, %c0_i32, %c0_i32_0 : i32, i32, i32
  }
  func.func @transform_6(%arg0: i32) -> (i32, i32, i32) {
    %c0_i32 = arith.constant 0 : i32
    %c0_i32_0 = arith.constant 0 : i32
    %c0_i32_1 = arith.constant 0 : i32
    return %arg0, %c0_i32, %c0_i32_0 : i32, i32, i32
  }
  func.func @transform_7(%arg0: i32) -> (i32, i32, i32) {
    %c0_i32 = arith.constant 0 : i32
    %c0_i32_0 = arith.constant 0 : i32
    %c0_i32_1 = arith.constant 0 : i32
    return %arg0, %c0_i32, %c0_i32_0 : i32, i32, i32
  }
}

</mosaic_0001>

<llo_original>
// kernel: tpu_custom_call.1
$region0: #{tpu_custom_call.1}
  #allocation0 [shape = 'u32[]', space=smem, size = 0x4, offset = 0x4, fixed_abs, tag = 'smem constant byte address 0x4 - core index']
  #allocation1 [shape = 'u32[72,128]{1,0:T(1,128)}', space=vmem, size = 0x9000, scoped, tag = 'internal scratch']
  %s0 = inlined_call_operand.hbm [shape: bf16[3,16,768], index: 0, kind: input, shape index: {}]
  %s1 = inlined_call_operand.hbm [shape: bf16[3,768,768], index: 1, kind: input, shape index: {}]
  %s2 = inlined_call_operand.hbm [shape: f32[3,1,768], index: 2, kind: input, shape index: {}]
  %s3 = inlined_call_operand.hbm [shape: f32[3,1,768], index: 3, kind: input, shape index: {}]
  %s4 = inlined_call_operand.hbm [shape: bf16[3,768,128], index: 4, kind: input, shape index: {}]
  %s5 = inlined_call_operand.hbm [shape: f32[3,1,128], index: 5, kind: input, shape index: {}]
  %s6 = inlined_call_operand.hbm [shape: f32[3,1,128], index: 6, kind: input, shape index: {}]
  %s7 = inlined_call_operand.hbm [shape: f32[3,16,128], index: 7, kind: output, shape index: {}]
  %s8 = sld [smem:[#allocation0]]
  $region89: #{tpu_custom_call.1} parent=0
    _
  %s10 = ssub.s32 1, %s8
  %s11 = scalar_select 0, %s10, %s8
  $region1: #{tpu_custom_call.1} parent=0
    #allocation2 [shape = 'u8[49152]{0}', space=vmem, size = 0xc000, scoped, tag = 'input window, operand 0']
    #allocation3 [shape = 's32[2]{0}', space=sflag, size = 0x8, scoped, tag = 'scoped memory for tpu_custom_call.1']
    #allocation4 [shape = 's32[2]{0}', space=sflag, size = 0x8, scoped, tag = 'scoped memory for tpu_custom_call.1']
    #allocation5 [shape = 'u8[2359296]{0}', space=vmem, size = 0x240000, scoped, tag = 'input window, operand 1']
    #allocation6 [shape = 's32[2]{0}', space=sflag, size = 0x8, scoped, tag = 'scoped memory for tpu_custom_call.1']
    #allocation7 [shape = 'u8[6144]{0}', space=vmem, size = 0x1800, scoped, tag = 'input window, operand 2']
    #allocation8 [shape = 'u8[6144]{0}', space=vmem, size = 0x1800, scoped, tag = 'input window, operand 3']
    #allocation9 [shape = 's32[2]{0}', space=sflag, size = 0x8, scoped, tag = 'scoped memory for tpu_custom_call.1']
    #allocation10 [shape = 'u8[393216]{0}', space=vmem, size = 0x60000, scoped, tag = 'input window, operand 4']
    #allocation11 [shape = 'u8[1024]{0}', space=vmem, size = 0x400, scoped, tag = 'input window, operand 5']
    #allocation12 [shape = 's32[2]{0}', space=sflag, size = 0x8, scoped, tag = 'scoped memory for tpu_custom_call.1']
    #allocation13 [shape = 'u8[1024]{0}', space=vmem, size = 0x400, scoped, tag = 'input window, operand 6']
    #allocation14 [shape = 'u8[16384]{0}', space=vmem, size = 0x4000, scoped, tag = 'output window, operand 0']
    %12 = vsyncpa [#allocation3], 0
    %s13 = scalar_lea.sflag [#allocation3], 1
    %14 = vsyncpa %s13, 0
    %15 = vsyncpa [#allocation6], 0
    %s16 = scalar_lea.sflag [#allocation6], 1
    %17 = vsyncpa %s16, 0
    %18 = vsyncpa [#allocation9], 0
    %s19 = scalar_lea.sflag [#allocation9], 1
    %20 = vsyncpa %s19, 0
    %21 = vsyncpa [#allocation12], 0
    %s22 = scalar_lea.sflag [#allocation12], 1
    %23 = vsyncpa %s22, 0
    %24 = vsyncpa [#allocation4], 0
    %s25 = scalar_lea.sflag [#allocation4], 1
    %26 = vsyncpa %s25, 0
    loop: start=0, step=1, limit=5
    $region2: #{tpu_custom_call.1} parent=1 // loop_pre_header
      _
    $region3: #{tpu_custom_call.1} parent=1 // loop_header
      %s28 = sphi 0, %s32
      %p29 = scmp.ge.s32.totalorder %s28, 5
      %s38 = sphi 0, %s40
      %s41 = sphi 0, %s38
      %s42 = sphi 0, %s41
      %s58 = sphi 0, %s42
      %s64 = sphi 0, %s66
      %s67 = sphi 0, %s64
      %s68 = sphi 0, %s67
      %s84 = sphi 0, %s68
      %s90 = sphi 0, %s92
      %s93 = sphi 0, %s90
      %s94 = sphi 0, %s93
      %s110 = sphi 0, %s94
      %s116 = sphi 0, %s118
      %s119 = sphi 0, %s116
      %s120 = sphi 0, %s119
      %s136 = sphi 0, %s120
      %s142 = sphi 0, %s144
      %s145 = sphi 0, %s142
      %s146 = sphi 0, %s145
      %s162 = sphi 0, %s146
      %s168 = sphi 0, %s170
      %s171 = sphi 0, %s168
      %s172 = sphi 0, %s171
      %s188 = sphi 0, %s172
      %s194 = sphi 0, %s196
      %s197 = sphi 0, %s194
      %s198 = sphi 0, %s197
      %s214 = sphi 0, %s198
      %s220 = sphi 0, %s222
      %s223 = sphi 0, %s220
      %s224 = sphi 0, %s223
      %s240 = sphi 0, %s224
    $region4: #{tpu_custom_call.1} parent=1 // loop_header_branch
      %31 = sbr.rel (%p29) target = $region8
    $region5: #{tpu_custom_call.1} parent=1 // loop_body
      %s33 = ssub.s32 %s28, 1
      %s34 = ssub.s32 %s28, 2
      %s35 = sadd.s32 %s28, 1
      %s36 = ssub.s32 %s28, %s35
      %p37 = scmp.eq.s32.totalorder %s36, 0
      %s39 = sadd.s32 %s38, 1
      %s40 = scalar_select %p37, %s38, %s39
      %p43 = pneg %p37
      %p44 = scmp.eq.s32.totalorder %s28, 2
      %p45 = por %p43, %p44
      %p46 = scmp.ne.s32.totalorder %s38, %s41
      %p47 = scmp.eq.s32.totalorder %s28, 0
      %p48 = por %p46, %p47
      %p49 = scmp.ne.s32.totalorder %s38, %s41
      %p50 = scmp.eq.s32.totalorder %s33, 2
      %p51 = por %p49, %p50
      %p52 = scmp.ne.s32.totalorder %s41, %s42
      %p53 = scmp.eq.s32.totalorder %s33, 0
      %p54 = por %p52, %p53
      %p55 = scmp.ne.s32.totalorder %s41, %s42
      %p56 = scmp.eq.s32.totalorder %s34, 2
      %p57 = por %p55, %p56
      %p59 = scmp.ne.s32.totalorder %s42, %s58
      %p60 = scmp.eq.s32.totalorder %s34, 0
      %p61 = por %p59, %p60
      %s62 = ssub.s32 %s28, %s35
      %p63 = scmp.eq.s32.totalorder %s62, 0
      %s65 = sadd.s32 %s64, 1
      %s66 = scalar_select %p63, %s64, %s65
      %p69 = pneg %p63
      %p70 = scmp.eq.s32.totalorder %s28, 2
      %p71 = por %p69, %p70
      %p72 = scmp.ne.s32.totalorder %s64, %s67
      %p73 = scmp.eq.s32.totalorder %s28, 0
      %p74 = por %p72, %p73
      %p75 = scmp.ne.s32.totalorder %s64, %s67
      %p76 = scmp.eq.s32.totalorder %s33, 2
      %p77 = por %p75, %p76
      %p78 = scmp.ne.s32.totalorder %s67, %s68
      %p79 = scmp.eq.s32.totalorder %s33, 0
      %p80 = por %p78, %p79
      %p81 = scmp.ne.s32.totalorder %s67, %s68
      %p82 = scmp.eq.s32.totalorder %s34, 2
      %p83 = por %p81, %p82
      %p85 = scmp.ne.s32.totalorder %s68, %s84
      %p86 = scmp.eq.s32.totalorder %s34, 0
      %p87 = por %p85, %p86
      %s88 = ssub.s32 %s28, %s35
      %p89 = scmp.eq.s32.totalorder %s88, 0
      %s91 = sadd.s32 %s90, 1
      %s92 = scalar_select %p89, %s90, %s91
      %p95 = pneg %p89
      %p96 = scmp.eq.s32.totalorder %s28, 2
      %p97 = por %p95, %p96
      %p98 = scmp.ne.s32.totalorder %s90, %s93
      %p99 = scmp.eq.s32.totalorder %s28, 0
      %p100 = por %p98, %p99
      %p101 = scmp.ne.s32.totalorder %s90, %s93
      %p102 = scmp.eq.s32.totalorder %s33, 2
      %p103 = por %p101, %p102
      %p104 = scmp.ne.s32.totalorder %s93, %s94
      %p105 = scmp.eq.s32.totalorder %s33, 0
      %p106 = por %p104, %p105
      %p107 = scmp.ne.s32.totalorder %s93, %s94
      %p108 = scmp.eq.s32.totalorder %s34, 2
      %p109 = por %p107, %p108
      %p111 = scmp.ne.s32.totalorder %s94, %s110
      %p112 = scmp.eq.s32.totalorder %s34, 0
      %p113 = por %p111, %p112
      %s114 = ssub.s32 %s28, %s35
      %p115 = scmp.eq.s32.totalorder %s114, 0
      %s117 = sadd.s32 %s116, 1
      %s118 = scalar_select %p115, %s116, %s117
      %p121 = pneg %p115
      %p122 = scmp.eq.s32.totalorder %s28, 2
      %p123 = por %p121, %p122
      %p124 = scmp.ne.s32.totalorder %s116, %s119
      %p125 = scmp.eq.s32.totalorder %s28, 0
      %p126 = por %p124, %p125
      %p127 = scmp.ne.s32.totalorder %s116, %s119
      %p128 = scmp.eq.s32.totalorder %s33, 2
      %p129 = por %p127, %p128
      %p130 = scmp.ne.s32.totalorder %s119, %s120
      %p131 = scmp.eq.s32.totalorder %s33, 0
      %p132 = por %p130, %p131
      %p133 = scmp.ne.s32.totalorder %s119, %s120
      %p134 = scmp.eq.s32.totalorder %s34, 2
      %p135 = por %p133, %p134
      %p137 = scmp.ne.s32.totalorder %s120, %s136
      %p138 = scmp.eq.s32.totalorder %s34, 0
      %p139 = por %p137, %p138
      %s140 = ssub.s32 %s28, %s35
      %p141 = scmp.eq.s32.totalorder %s140, 0
      %s143 = sadd.s32 %s142, 1
      %s144 = scalar_select %p141, %s142, %s143
      %p147 = pneg %p141
      %p148 = scmp.eq.s32.totalorder %s28, 2
      %p149 = por %p147, %p148
      %p150 = scmp.ne.s32.totalorder %s142, %s145
      %p151 = scmp.eq.s32.totalorder %s28, 0
      %p152 = por %p150, %p151
      %p153 = scmp.ne.s32.totalorder %s142, %s145
      %p154 = scmp.eq.s32.totalorder %s33, 2
      %p155 = por %p153, %p154
      %p156 = scmp.ne.s32.totalorder %s145, %s146
      %p157 = scmp.eq.s32.totalorder %s33, 0
      %p158 = por %p156, %p157
      %p159 = scmp.ne.s32.totalorder %s145, %s146
      %p160 = scmp.eq.s32.totalorder %s34, 2
      %p161 = por %p159, %p160
      %p163 = scmp.ne.s32.totalorder %s146, %s162
      %p164 = scmp.eq.s32.totalorder %s34, 0
      %p165 = por %p163, %p164
      %s166 = ssub.s32 %s28, %s35
      %p167 = scmp.eq.s32.totalorder %s166, 0
      %s169 = sadd.s32 %s168, 1
      %s170 = scalar_select %p167, %s168, %s169
      %p173 = pneg %p167
      %p174 = scmp.eq.s32.totalorder %s28, 2
      %p175 = por %p173, %p174
      %p176 = scmp.ne.s32.totalorder %s168, %s171
      %p177 = scmp.eq.s32.totalorder %s28, 0
      %p178 = por %p176, %p177
      %p179 = scmp.ne.s32.totalorder %s168, %s171
      %p180 = scmp.eq.s32.totalorder %s33, 2
      %p181 = por %p179, %p180
      %p182 = scmp.ne.s32.totalorder %s171, %s172
      %p183 = scmp.eq.s32.totalorder %s33, 0
      %p184 = por %p182, %p183
      %p185 = scmp.ne.s32.totalorder %s171, %s172
      %p186 = scmp.eq.s32.totalorder %s34, 2
      %p187 = por %p185, %p186
      %p189 = scmp.ne.s32.totalorder %s172, %s188
      %p190 = scmp.eq.s32.totalorder %s34, 0
      %p191 = por %p189, %p190
      %s192 = ssub.s32 %s28, %s35
      %p193 = scmp.eq.s32.totalorder %s192, 0
      %s195 = sadd.s32 %s194, 1
      %s196 = scalar_select %p193, %s194, %s195
      %p199 = pneg %p193
      %p200 = scmp.eq.s32.totalorder %s28, 2
      %p201 = por %p199, %p200
      %p202 = scmp.ne.s32.totalorder %s194, %s197
      %p203 = scmp.eq.s32.totalorder %s28, 0
      %p204 = por %p202, %p203
      %p205 = scmp.ne.s32.totalorder %s194, %s197
      %p206 = scmp.eq.s32.totalorder %s33, 2
      %p207 = por %p205, %p206
      %p208 = scmp.ne.s32.totalorder %s197, %s198
      %p209 = scmp.eq.s32.totalorder %s33, 0
      %p210 = por %p208, %p209
      %p211 = scmp.ne.s32.totalorder %s197, %s198
      %p212 = scmp.eq.s32.totalorder %s34, 2
      %p213 = por %p211, %p212
      %p215 = scmp.ne.s32.totalorder %s198, %s214
      %p216 = scmp.eq.s32.totalorder %s34, 0
      %p217 = por %p215, %p216
      %s218 = ssub.s32 %s28, %s35
      %p219 = scmp.eq.s32.totalorder %s218, 0
      %s221 = sadd.s32 %s220, 1
      %s222 = scalar_select %p219, %s220, %s221
      %p225 = pneg %p219
      %p226 = scmp.eq.s32.totalorder %s28, 2
      %p227 = por %p225, %p226
      %p228 = scmp.ne.s32.totalorder %s220, %s223
      %p229 = scmp.eq.s32.totalorder %s28, 0
      %p230 = por %p228, %p229
      %p231 = scmp.ne.s32.totalorder %s220, %s223
      %p232 = scmp.eq.s32.totalorder %s33, 2
      %p233 = por %p231, %p232
      %p234 = scmp.ne.s32.totalorder %s223, %s224
      %p235 = scmp.eq.s32.totalorder %s33, 0
      %p236 = por %p234, %p235
      %p237 = scmp.ne.s32.totalorder %s223, %s224
      %p238 = scmp.eq.s32.totalorder %s34, 2
      %p239 = por %p237, %p238
      %p241 = scmp.ne.s32.totalorder %s224, %s240
      %p242 = scmp.eq.s32.totalorder %s34, 0
      %p243 = por %p241, %p242
      %p244 = scmp.le.s32.totalorder 1, %s28
      %p245 = scmp.lt.s32.totalorder %s28, 4
      %p246 = pnand %p244, %p245
      %p247 = pneg %p246
      // Predicated region
      $region9: #{tpu_custom_call.1} parent=5 // pred_check
        _
      $region10: #{tpu_custom_call.1} parent=5 // pred_check_branch
        %249 = sbr.rel (%p246) target = $region12
      $region11: #{tpu_custom_call.1} parent=5 // pred_region
        %s250 = ssub.s32 %s28, 1
      $region12: #{tpu_custom_call.1} parent=5 // pred_fallthru
        _
      %p251 = scmp.lt.s32.totalorder %s28, 3
      // Predicated region
      $region13: #{tpu_custom_call.1} parent=5 // pred_check
        %p252 = pneg %p251
      $region14: #{tpu_custom_call.1} parent=5 // pred_check_branch
        %254 = sbr.rel (%p252) target = $region16
      $region15: #{tpu_custom_call.1} parent=5 // pred_region
        // Predicated region
        $region17: #{tpu_custom_call.1} parent=15 // pred_check
          %p255 = pneg %p48
        $region18: #{tpu_custom_call.1} parent=15 // pred_check_branch
          %257 = sbr.rel (%p255) target = $region20
        $region19: #{tpu_custom_call.1} parent=15 // pred_region
          %s258 = sand.u32 %s38, 1
          %s259 = scalar_lea.sflag [#allocation3], %s258
          %s260 = sand.u32 %s38, 1
          %s261 = smul.addr %s260, 48
          %s262 = scalar_lea.vmem [#allocation2], %s261
          %264 = vsyncadd %s259, 0
          %s265 = smul.addr %s28, 12
          %s266 = smul.addr %s265, 4
          %s267 = scalar_lea.hbm %s0, %s266
          %s268 = sshll.u32 %s267, 4
          %s269 = int_to_ptr.hbm [resolvable:$true] %s268
          %s270 = sshll.u32 %s262, 4
          %s271 = int_to_ptr.vmem [resolvable:$true] %s270
          %276 = dma.hbm_to_vmem [thread:$0]  %s269, 768, %s271, %s259, 384, 384, 24
        $region20: #{tpu_custom_call.1} parent=15 // pred_fallthru
          _
        // Predicated region
        $region21: #{tpu_custom_call.1} parent=15 // pred_check
          %p277 = pneg %p74
        $region22: #{tpu_custom_call.1} parent=15 // pred_check_branch
          %279 = sbr.rel (%p277) target = $region24
        $region23: #{tpu_custom_call.1} parent=15 // pred_region
          %s280 = sand.u32 %s28, 1
          %s281 = scalar_lea.sflag [#allocation6], %s280
          %s282 = sand.u32 %s64, 1
          %s283 = smul.addr %s282, 2304
          %s284 = scalar_lea.vmem [#allocation5], %s283
          %286 = vsyncadd %s281, 0
          %s287 = smul.addr %s28, 576
          %s288 = smul.addr %s287, 4
          %s289 = scalar_lea.hbm %s1, %s288
          %s290 = sshll.u32 %s289, 4
          %s291 = int_to_ptr.hbm [resolvable:$true] %s290
          %s292 = sshll.u32 %s284, 4
          %s293 = int_to_ptr.vmem [resolvable:$true] %s292
          %298 = dma.hbm_to_vmem [thread:$0]  %s291, 36864, %s293, %s281, 384, 384, 24
        $region24: #{tpu_custom_call.1} parent=15 // pred_fallthru
          _
        // Predicated region
        $region25: #{tpu_custom_call.1} parent=15 // pred_check
          %p299 = pneg %p100
        $region26: #{tpu_custom_call.1} parent=15 // pred_check_branch
          %301 = sbr.rel (%p299) target = $region28
        $region27: #{tpu_custom_call.1} parent=15 // pred_region
          %s302 = sand.u32 %s28, 1
          %s303 = scalar_lea.sflag [#allocation6], %s302
          %s304 = sand.u32 %s90, 1
          %s305 = smul.addr %s304, 6
          %s306 = scalar_lea.vmem [#allocation7], %s305
          %308 = vsyncadd %s303, 0
          %s309 = smul.addr %s28, 6
          %s310 = scalar_lea.hbm %s2, %s309
          %s312 = sshll.u32 %s310, 4
          %s313 = int_to_ptr.hbm [resolvable:$true] %s312
          %s314 = sshll.u32 %s306, 4
          %s315 = int_to_ptr.vmem [resolvable:$true] %s314
          %317 = dma.hbm_to_vmem [thread:$0]  %s313, 96, %s315, %s303
        $region28: #{tpu_custom_call.1} parent=15 // pred_fallthru
          _
        // Predicated region
        $region29: #{tpu_custom_call.1} parent=15 // pred_check
          %p318 = pneg %p126
        $region30: #{tpu_custom_call.1} parent=15 // pred_check_branch
          %320 = sbr.rel (%p318) target = $region32
        $region31: #{tpu_custom_call.1} parent=15 // pred_region
          %s321 = sand.u32 %s28, 1
          %s322 = scalar_lea.sflag [#allocation9], %s321
          %s323 = sand.u32 %s116, 1
          %s324 = smul.addr %s323, 6
          %s325 = scalar_lea.vmem [#allocation8], %s324
          %327 = vsyncadd %s322, 0
          %s328 = smul.addr %s28, 6
          %s329 = scalar_lea.hbm %s3, %s328
          %s331 = sshll.u32 %s329, 4
          %s332 = int_to_ptr.hbm [resolvable:$true] %s331
          %s333 = sshll.u32 %s325, 4
          %s334 = int_to_ptr.vmem [resolvable:$true] %s333
          %336 = dma.hbm_to_vmem [thread:$0]  %s332, 96, %s334, %s322
        $region32: #{tpu_custom_call.1} parent=15 // pred_fallthru
          _
        // Predicated region
        $region33: #{tpu_custom_call.1} parent=15 // pred_check
          %p337 = pneg %p152
        $region34: #{tpu_custom_call.1} parent=15 // pred_check_branch
          %339 = sbr.rel (%p337) target = $region36
        $region35: #{tpu_custom_call.1} parent=15 // pred_region
          %s340 = sand.u32 %s28, 1
          %s341 = scalar_lea.sflag [#allocation9], %s340
          %s342 = sand.u32 %s142, 1
          %s343 = smul.addr %s342, 384
          %s344 = scalar_lea.vmem [#allocation10], %s343
          %346 = vsyncadd %s341, 0
          %s347 = smul.addr %s28, 96
          %s348 = smul.addr %s347, 4
          %s349 = scalar_lea.hbm %s4, %s348
          %s350 = sshll.u32 %s349, 4
          %s351 = int_to_ptr.hbm [resolvable:$true] %s350
          %s352 = sshll.u32 %s344, 4
          %s353 = int_to_ptr.vmem [resolvable:$true] %s352
          %358 = dma.hbm_to_vmem [thread:$0]  %s351, 6144, %s353, %s341, 64, 64, 4
        $region36: #{tpu_custom_call.1} parent=15 // pred_fallthru
          _
        // Predicated region
        $region37: #{tpu_custom_call.1} parent=15 // pred_check
          %p359 = pneg %p178
        $region38: #{tpu_custom_call.1} parent=15 // pred_check_branch
          %361 = sbr.rel (%p359) target = $region40
        $region39: #{tpu_custom_call.1} parent=15 // pred_region
          %s362 = sand.u32 %s28, 1
          %s363 = scalar_lea.sflag [#allocation12], %s362
          %s364 = sand.u32 %s168, 1
          %s365 = scalar_lea.vmem [#allocation11], %s364
          %367 = vsyncadd %s363, 0
          %s368 = scalar_lea.hbm %s5, %s28
          %s370 = sshll.u32 %s368, 4
          %s371 = int_to_ptr.hbm [resolvable:$true] %s370
          %s372 = sshll.u32 %s365, 4
          %s373 = int_to_ptr.vmem [resolvable:$true] %s372
          %375 = dma.hbm_to_vmem [thread:$0]  %s371, 16, %s373, %s363
        $region40: #{tpu_custom_call.1} parent=15 // pred_fallthru
          _
        // Predicated region
        $region41: #{tpu_custom_call.1} parent=15 // pred_check
          %p376 = pneg %p204
        $region42: #{tpu_custom_call.1} parent=15 // pred_check_branch
          %378 = sbr.rel (%p376) target = $region44
        $region43: #{tpu_custom_call.1} parent=15 // pred_region
          %s379 = sand.u32 %s28, 1
          %s380 = scalar_lea.sflag [#allocation12], %s379
          %s381 = sand.u32 %s194, 1
          %s382 = scalar_lea.vmem [#allocation13], %s381
          %384 = vsyncadd %s380, 0
          %s385 = scalar_lea.hbm %s6, %s28
          %s387 = sshll.u32 %s385, 4
          %s388 = int_to_ptr.hbm [resolvable:$true] %s387
          %s389 = sshll.u32 %s382, 4
          %s390 = int_to_ptr.vmem [resolvable:$true] %s389
          %392 = dma.hbm_to_vmem [thread:$0]  %s388, 16, %s390, %s380
        $region44: #{tpu_custom_call.1} parent=15 // pred_fallthru
          _
      $region16: #{tpu_custom_call.1} parent=5 // pred_fallthru
        _
      %p393 = scmp.le.s32.totalorder 1, %s28
      %p394 = scmp.lt.s32.totalorder %s28, 4
      %p395 = pnand %p393, %p394
      %p396 = pneg %p395
      // Predicated region
      $region45: #{tpu_custom_call.1} parent=5 // pred_check
        _
      $region46: #{tpu_custom_call.1} parent=5 // pred_check_branch
        %398 = sbr.rel (%p395) target = $region48
      $region47: #{tpu_custom_call.1} parent=5 // pred_region
        %s399 = ssub.s32 %s28, 1
        %s400 = sand.u32 %s41, 1
        %s401 = scalar_lea.sflag [#allocation3], %s400
        %s402 = sand.u32 %s41, 1
        %s403 = smul.addr %s402, 48
        %s404 = scalar_lea.vmem [#allocation2], %s403
        // Predicated region
        $region49: #{tpu_custom_call.1} parent=47 // pred_check
          %p405 = pneg %p54
        $region50: #{tpu_custom_call.1} parent=47 // pred_check_branch
          %407 = sbr.rel (%p405) target = $region52
        $region51: #{tpu_custom_call.1} parent=47 // pred_region
          %409 = dma.done %s401, 768
        $region52: #{tpu_custom_call.1} parent=47 // pred_fallthru
          _
        %s410 = sand.u32 %s33, 1
        %s411 = scalar_lea.sflag [#allocation6], %s410
        %s412 = sand.u32 %s67, 1
        %s413 = smul.addr %s412, 2304
        %s414 = scalar_lea.vmem [#allocation5], %s413
        // Predicated region
        $region53: #{tpu_custom_call.1} parent=47 // pred_check
          %p415 = pneg %p80
        $region54: #{tpu_custom_call.1} parent=47 // pred_check_branch
          %417 = sbr.rel (%p415) target = $region56
        $region55: #{tpu_custom_call.1} parent=47 // pred_region
          %419 = dma.done %s411, 36864
        $region56: #{tpu_custom_call.1} parent=47 // pred_fallthru
          _
        %s420 = sand.u32 %s33, 1
        %s421 = scalar_lea.sflag [#allocation6], %s420
        %s422 = sand.u32 %s93, 1
        %s423 = smul.addr %s422, 6
        %s424 = scalar_lea.vmem [#allocation7], %s423
        // Predicated region
        $region57: #{tpu_custom_call.1} parent=47 // pred_check
          %p425 = pneg %p106
        $region58: #{tpu_custom_call.1} parent=47 // pred_check_branch
          %427 = sbr.rel (%p425) target = $region60
        $region59: #{tpu_custom_call.1} parent=47 // pred_region
          %429 = dma.done %s421, 96
        $region60: #{tpu_custom_call.1} parent=47 // pred_fallthru
          _
        %s430 = sand.u32 %s33, 1
        %s431 = scalar_lea.sflag [#allocation9], %s430
        %s432 = sand.u32 %s119, 1
        %s433 = smul.addr %s432, 6
        %s434 = scalar_lea.vmem [#allocation8], %s433
        // Predicated region
        $region61: #{tpu_custom_call.1} parent=47 // pred_check
          %p435 = pneg %p132
        $region62: #{tpu_custom_call.1} parent=47 // pred_check_branch
          %437 = sbr.rel (%p435) target = $region64
        $region63: #{tpu_custom_call.1} parent=47 // pred_region
          %439 = dma.done %s431, 96
        $region64: #{tpu_custom_call.1} parent=47 // pred_fallthru
          _
        %s440 = sand.u32 %s33, 1
        %s441 = scalar_lea.sflag [#allocation9], %s440
        %s442 = sand.u32 %s145, 1
        %s443 = smul.addr %s442, 384
        %s444 = scalar_lea.vmem [#allocation10], %s443
        // Predicated region
        $region65: #{tpu_custom_call.1} parent=47 // pred_check
          %p445 = pneg %p158
        $region66: #{tpu_custom_call.1} parent=47 // pred_check_branch
          %447 = sbr.rel (%p445) target = $region68
        $region67: #{tpu_custom_call.1} parent=47 // pred_region
          %449 = dma.done %s441, 6144
        $region68: #{tpu_custom_call.1} parent=47 // pred_fallthru
          _
        %s450 = sand.u32 %s33, 1
        %s451 = scalar_lea.sflag [#allocation12], %s450
        %s452 = sand.u32 %s171, 1
        %s453 = scalar_lea.vmem [#allocation11], %s452
        // Predicated region
        $region69: #{tpu_custom_call.1} parent=47 // pred_check
          %p454 = pneg %p184
        $region70: #{tpu_custom_call.1} parent=47 // pred_check_branch
          %456 = sbr.rel (%p454) target = $region72
        $region71: #{tpu_custom_call.1} parent=47 // pred_region
          %458 = dma.done %s451, 16
        $region72: #{tpu_custom_call.1} parent=47 // pred_fallthru
          _
        %s459 = sand.u32 %s33, 1
        %s460 = scalar_lea.sflag [#allocation12], %s459
        %s461 = sand.u32 %s197, 1
        %s462 = scalar_lea.vmem [#allocation13], %s461
        // Predicated region
        $region73: #{tpu_custom_call.1} parent=47 // pred_check
          %p463 = pneg %p210
        $region74: #{tpu_custom_call.1} parent=47 // pred_check_branch
          %465 = sbr.rel (%p463) target = $region76
        $region75: #{tpu_custom_call.1} parent=47 // pred_region
          %467 = dma.done %s460, 16
        $region76: #{tpu_custom_call.1} parent=47 // pred_fallthru
          _
        %s468 = sand.u32 %s41, 1
        %s469 = scalar_lea.sflag [#allocation3], %s468
        %s470 = sand.u32 %s41, 1
        %s471 = smul.addr %s470, 48
        %s472 = scalar_lea.vmem [#allocation2], %s471
        %p473 = pneg %p54
        %p474 = pneg %p51
        %s475 = sand.u32 %s33, 1
        %s476 = scalar_lea.sflag [#allocation6], %s475
        %s477 = sand.u32 %s67, 1
        %s478 = smul.addr %s477, 2304
        %s479 = scalar_lea.vmem [#allocation5], %s478
        %p480 = pneg %p80
        %p481 = pneg %p77
        %s482 = sand.u32 %s33, 1
        %s483 = scalar_lea.sflag [#allocation6], %s482
        %s484 = sand.u32 %s93, 1
        %s485 = smul.addr %s484, 6
        %s486 = scalar_lea.vmem [#allocation7], %s485
        %p487 = pneg %p106
        %p488 = pneg %p103
        %s489 = sand.u32 %s33, 1
        %s490 = scalar_lea.sflag [#allocation9], %s489
        %s491 = sand.u32 %s119, 1
        %s492 = smul.addr %s491, 6
        %s493 = scalar_lea.vmem [#allocation8], %s492
        %p494 = pneg %p132
        %p495 = pneg %p129
        %s496 = sand.u32 %s33, 1
        %s497 = scalar_lea.sflag [#allocation9], %s496
        %s498 = sand.u32 %s145, 1
        %s499 = smul.addr %s498, 384
        %s500 = scalar_lea.vmem [#allocation10], %s499
        %p501 = pneg %p158
        %p502 = pneg %p155
        %s503 = sand.u32 %s33, 1
        %s504 = scalar_lea.sflag [#allocation12], %s503
        %s505 = sand.u32 %s171, 1
        %s506 = scalar_lea.vmem [#allocation11], %s505
        %p507 = pneg %p184
        %p508 = pneg %p181
        %s509 = sand.u32 %s33, 1
        %s510 = scalar_lea.sflag [#allocation12], %s509
        %s511 = sand.u32 %s197, 1
        %s512 = scalar_lea.vmem [#allocation13], %s511
        %p513 = pneg %p210
        %p514 = pneg %p207
        %p515 = pneg %p236
        %p516 = pneg %p233
        %s517 = sand.u32 %s223, 1
        %s518 = scalar_lea.sflag [#allocation4], %s517
        %s519 = sand.u32 %s223, 1
        %s520 = smul.addr %s519, 16
        %s521 = scalar_lea.vmem [#allocation14], %s520
        %v522 = vld [vmem:[%s404] sm:$0xff]
        %v523 = vld [vmem:[%s404 + $0x8] sm:$0xff]
        %v524 = vld [vmem:[%s404 + $0x10] sm:$0xff]
        %v525 = vld [vmem:[%s404 + $0x18] sm:$0xff]
        %v526 = vld [vmem:[%s404 + $0x20] sm:$0xff]
        %v527 = vld [vmem:[%s404 + $0x28] sm:$0xff]
        %v528 = vld [vmem:[%s414] sm:$0xff]
        %v529 = vld [vmem:[%s414 + $0x8] sm:$0xff]
        %v530 = vld [vmem:[%s414 + $0x10] sm:$0xff]
        %v531 = vld [vmem:[%s414 + $0x18] sm:$0xff]
        %v532 = vld [vmem:[%s414 + $0x20] sm:$0xff]
        %v533 = vld [vmem:[%s414 + $0x28] sm:$0xff]
        %v534 = vld [vmem:[%s414 + $0x30] sm:$0xff]
        %v535 = vld [vmem:[%s414 + $0x38] sm:$0xff]
        %v536 = vld [vmem:[%s414 + $0x40] sm:$0xff]
        %v537 = vld [vmem:[%s414 + $0x48] sm:$0xff]
        %v538 = vld [vmem:[%s414 + $0x50] sm:$0xff]
        %v539 = vld [vmem:[%s414 + $0x58] sm:$0xff]
        %v540 = vld [vmem:[%s414 + $0x60] sm:$0xff]
        %v541 = vld [vmem:[%s414 + $0x68] sm:$0xff]
        %v542 = vld [vmem:[%s414 + $0x70] sm:$0xff]
        %v543 = vld [vmem:[%s414 + $0x78] sm:$0xff]
        %v544 = vld [vmem:[%s414 + $0x80] sm:$0xff]
        %v545 = vld [vmem:[%s414 + $0x88] sm:$0xff]
        %v546 = vld [vmem:[%s414 + $0x90] sm:$0xff]
        %v547 = vld [vmem:[%s414 + $0x98] sm:$0xff]
        %v548 = vld [vmem:[%s414 + $0xa0] sm:$0xff]
        %v549 = vld [vmem:[%s414 + $0xa8] sm:$0xff]
        %v550 = vld [vmem:[%s414 + $0xb0] sm:$0xff]
        %v551 = vld [vmem:[%s414 + $0xb8] sm:$0xff]
        %v552 = vld [vmem:[%s414 + $0xc0] sm:$0xff]
        %v553 = vld [vmem:[%s414 + $0xc8] sm:$0xff]
        %v554 = vld [vmem:[%s414 + $0xd0] sm:$0xff]
        %v555 = vld [vmem:[%s414 + $0xd8] sm:$0xff]
        %v556 = vld [vmem:[%s414 + $0xe0] sm:$0xff]
        %v557 = vld [vmem:[%s414 + $0xe8] sm:$0xff]
        %v558 = vld [vmem:[%s414 + $0xf0] sm:$0xff]
        %v559 = vld [vmem:[%s414 + $0xf8] sm:$0xff]
        %v560 = vld [vmem:[%s414 + $0x100] sm:$0xff]
        %v561 = vld [vmem:[%s414 + $0x108] sm:$0xff]
        %v562 = vld [vmem:[%s414 + $0x110] sm:$0xff]
        %v563 = vld [vmem:[%s414 + $0x118] sm:$0xff]
        %v564 = vld [vmem:[%s414 + $0x120] sm:$0xff]
        %v565 = vld [vmem:[%s414 + $0x128] sm:$0xff]
        %v566 = vld [vmem:[%s414 + $0x130] sm:$0xff]
        %v567 = vld [vmem:[%s414 + $0x138] sm:$0xff]
        %v568 = vld [vmem:[%s414 + $0x140] sm:$0xff]
        %v569 = vld [vmem:[%s414 + $0x148] sm:$0xff]
        %v570 = vld [vmem:[%s414 + $0x150] sm:$0xff]
        %v571 = vld [vmem:[%s414 + $0x158] sm:$0xff]
        %v572 = vld [vmem:[%s414 + $0x160] sm:$0xff]
        %v573 = vld [vmem:[%s414 + $0x168] sm:$0xff]
        %v574 = vld [vmem:[%s414 + $0x170] sm:$0xff]
        %v575 = vld [vmem:[%s414 + $0x178] sm:$0xff]
        %v576 = vld [vmem:[%s414 + $0x180] sm:$0xff]
        %v577 = vld [vmem:[%s414 + $0x188] sm:$0xff]
        %v578 = vld [vmem:[%s414 + $0x190] sm:$0xff]
        %v579 = vld [vmem:[%s414 + $0x198] sm:$0xff]
        %v580 = vld [vmem:[%s414 + $0x1a0] sm:$0xff]
        %v581 = vld [vmem:[%s414 + $0x1a8] sm:$0xff]
        %v582 = vld [vmem:[%s414 + $0x1b0] sm:$0xff]
        %v583 = vld [vmem:[%s414 + $0x1b8] sm:$0xff]
        %v584 = vld [vmem:[%s414 + $0x1c0] sm:$0xff]
        %v585 = vld [vmem:[%s414 + $0x1c8] sm:$0xff]
        %v586 = vld [vmem:[%s414 + $0x1d0] sm:$0xff]
        %v587 = vld [vmem:[%s414 + $0x1d8] sm:$0xff]
        %v588 = vld [vmem:[%s414 + $0x1e0] sm:$0xff]
        %v589 = vld [vmem:[%s414 + $0x1e8] sm:$0xff]
        %v590 = vld [vmem:[%s414 + $0x1f0] sm:$0xff]
        %v591 = vld [vmem:[%s414 + $0x1f8] sm:$0xff]
        %v592 = vld [vmem:[%s414 + $0x200] sm:$0xff]
        %v593 = vld [vmem:[%s414 + $0x208] sm:$0xff]
        %v594 = vld [vmem:[%s414 + $0x210] sm:$0xff]
        %v595 = vld [vmem:[%s414 + $0x218] sm:$0xff]
        %v596 = vld [vmem:[%s414 + $0x220] sm:$0xff]
        %v597 = vld [vmem:[%s414 + $0x228] sm:$0xff]
        %v598 = vld [vmem:[%s414 + $0x230] sm:$0xff]
        %v599 = vld [vmem:[%s414 + $0x238] sm:$0xff]
        %v600 = vld [vmem:[%s414 + $0x240] sm:$0xff]
        %v601 = vld [vmem:[%s414 + $0x248] sm:$0xff]
        %v602 = vld [vmem:[%s414 + $0x250] sm:$0xff]
        %v603 = vld [vmem:[%s414 + $0x258] sm:$0xff]
        %v604 = vld [vmem:[%s414 + $0x260] sm:$0xff]
        %v605 = vld [vmem:[%s414 + $0x268] sm:$0xff]
        %v606 = vld [vmem:[%s414 + $0x270] sm:$0xff]
        %v607 = vld [vmem:[%s414 + $0x278] sm:$0xff]
        %v608 = vld [vmem:[%s414 + $0x280] sm:$0xff]
        %v609 = vld [vmem:[%s414 + $0x288] sm:$0xff]
        %v610 = vld [vmem:[%s414 + $0x290] sm:$0xff]
        %v611 = vld [vmem:[%s414 + $0x298] sm:$0xff]
        %v612 = vld [vmem:[%s414 + $0x2a0] sm:$0xff]
        %v613 = vld [vmem:[%s414 + $0x2a8] sm:$0xff]
        %v614 = vld [vmem:[%s414 + $0x2b0] sm:$0xff]
        %v615 = vld [vmem:[%s414 + $0x2b8] sm:$0xff]
        %v616 = vld [vmem:[%s414 + $0x2c0] sm:$0xff]
        %v617 = vld [vmem:[%s414 + $0x2c8] sm:$0xff]
        %v618 = vld [vmem:[%s414 + $0x2d0] sm:$0xff]
        %v619 = vld [vmem:[%s414 + $0x2d8] sm:$0xff]
        %v620 = vld [vmem:[%s414 + $0x2e0] sm:$0xff]
        %v621 = vld [vmem:[%s414 + $0x2e8] sm:$0xff]
        %v622 = vld [vmem:[%s414 + $0x2f0] sm:$0xff]
        %v623 = vld [vmem:[%s414 + $0x2f8] sm:$0xff]
        %v624 = vld [vmem:[%s414 + $0x300] sm:$0xff]
        %v625 = vld [vmem:[%s414 + $0x308] sm:$0xff]
        %v626 = vld [vmem:[%s414 + $0x310] sm:$0xff]
        %v627 = vld [vmem:[%s414 + $0x318] sm:$0xff]
        %v628 = vld [vmem:[%s414 + $0x320] sm:$0xff]
        %v629 = vld [vmem:[%s414 + $0x328] sm:$0xff]
        %v630 = vld [vmem:[%s414 + $0x330] sm:$0xff]
        %v631 = vld [vmem:[%s414 + $0x338] sm:$0xff]
        %v632 = vld [vmem:[%s414 + $0x340] sm:$0xff]
        %v633 = vld [vmem:[%s414 + $0x348] sm:$0xff]
        %v634 = vld [vmem:[%s414 + $0x350] sm:$0xff]
        %v635 = vld [vmem:[%s414 + $0x358] sm:$0xff]
        %v636 = vld [vmem:[%s414 + $0x360] sm:$0xff]
        %v637 = vld [vmem:[%s414 + $0x368] sm:$0xff]
        %v638 = vld [vmem:[%s414 + $0x370] sm:$0xff]
        %v639 = vld [vmem:[%s414 + $0x378] sm:$0xff]
        %v640 = vld [vmem:[%s414 + $0x380] sm:$0xff]
        %v641 = vld [vmem:[%s414 + $0x388] sm:$0xff]
        %v642 = vld [vmem:[%s414 + $0x390] sm:$0xff]
        %v643 = vld [vmem:[%s414 + $0x398] sm:$0xff]
        %v644 = vld [vmem:[%s414 + $0x3a0] sm:$0xff]
        %v645 = vld [vmem:[%s414 + $0x3a8] sm:$0xff]
        %v646 = vld [vmem:[%s414 + $0x3b0] sm:$0xff]
        %v647 = vld [vmem:[%s414 + $0x3b8] sm:$0xff]
        %v648 = vld [vmem:[%s414 + $0x3c0] sm:$0xff]
        %v649 = vld [vmem:[%s414 + $0x3c8] sm:$0xff]
        %v650 = vld [vmem:[%s414 + $0x3d0] sm:$0xff]
        %v651 = vld [vmem:[%s414 + $0x3d8] sm:$0xff]
        %v652 = vld [vmem:[%s414 + $0x3e0] sm:$0xff]
        %v653 = vld [vmem:[%s414 + $0x3e8] sm:$0xff]
        %v654 = vld [vmem:[%s414 + $0x3f0] sm:$0xff]
        %v655 = vld [vmem:[%s414 + $0x3f8] sm:$0xff]
        %v656 = vld [vmem:[%s414 + $0x400] sm:$0xff]
        %v657 = vld [vmem:[%s414 + $0x408] sm:$0xff]
        %v658 = vld [vmem:[%s414 + $0x410] sm:$0xff]
        %v659 = vld [vmem:[%s414 + $0x418] sm:$0xff]
        %v660 = vld [vmem:[%s414 + $0x420] sm:$0xff]
        %v661 = vld [vmem:[%s414 + $0x428] sm:$0xff]
        %v662 = vld [vmem:[%s414 + $0x430] sm:$0xff]
        %v663 = vld [vmem:[%s414 + $0x438] sm:$0xff]
        %v664 = vld [vmem:[%s414 + $0x440] sm:$0xff]
        %v665 = vld [vmem:[%s414 + $0x448] sm:$0xff]
        %v666 = vld [vmem:[%s414 + $0x450] sm:$0xff]
        %v667 = vld [vmem:[%s414 + $0x458] sm:$0xff]
        %v668 = vld [vmem:[%s414 + $0x460] sm:$0xff]
        %v669 = vld [vmem:[%s414 + $0x468] sm:$0xff]
        %v670 = vld [vmem:[%s414 + $0x470] sm:$0xff]
        %v671 = vld [vmem:[%s414 + $0x478] sm:$0xff]
        %v672 = vld [vmem:[%s414 + $0x480] sm:$0xff]
        %v673 = vld [vmem:[%s414 + $0x488] sm:$0xff]
        %v674 = vld [vmem:[%s414 + $0x490] sm:$0xff]
        %v675 = vld [vmem:[%s414 + $0x498] sm:$0xff]
        %v676 = vld [vmem:[%s414 + $0x4a0] sm:$0xff]
        %v677 = vld [vmem:[%s414 + $0x4a8] sm:$0xff]
        %v678 = vld [vmem:[%s414 + $0x4b0] sm:$0xff]
        %v679 = vld [vmem:[%s414 + $0x4b8] sm:$0xff]
        %v680 = vld [vmem:[%s414 + $0x4c0] sm:$0xff]
        %v681 = vld [vmem:[%s414 + $0x4c8] sm:$0xff]
        %v682 = vld [vmem:[%s414 + $0x4d0] sm:$0xff]
        %v683 = vld [vmem:[%s414 + $0x4d8] sm:$0xff]
        %v684 = vld [vmem:[%s414 + $0x4e0] sm:$0xff]
        %v685 = vld [vmem:[%s414 + $0x4e8] sm:$0xff]
        %v686 = vld [vmem:[%s414 + $0x4f0] sm:$0xff]
        %v687 = vld [vmem:[%s414 + $0x4f8] sm:$0xff]
        %v688 = vld [vmem:[%s414 + $0x500] sm:$0xff]
        %v689 = vld [vmem:[%s414 + $0x508] sm:$0xff]
        %v690 = vld [vmem:[%s414 + $0x510] sm:$0xff]
        %v691 = vld [vmem:[%s414 + $0x518] sm:$0xff]
        %v692 = vld [vmem:[%s414 + $0x520] sm:$0xff]
        %v693 = vld [vmem:[%s414 + $0x528] sm:$0xff]
        %v694 = vld [vmem:[%s414 + $0x530] sm:$0xff]
        %v695 = vld [vmem:[%s414 + $0x538] sm:$0xff]
        %v696 = vld [vmem:[%s414 + $0x540] sm:$0xff]
        %v697 = vld [vmem:[%s414 + $0x548] sm:$0xff]
        %v698 = vld [vmem:[%s414 + $0x550] sm:$0xff]
        %v699 = vld [vmem:[%s414 + $0x558] sm:$0xff]
        %v700 = vld [vmem:[%s414 + $0x560] sm:$0xff]
        %v701 = vld [vmem:[%s414 + $0x568] sm:$0xff]
        %v702 = vld [vmem:[%s414 + $0x570] sm:$0xff]
        %v703 = vld [vmem:[%s414 + $0x578] sm:$0xff]
        %v704 = vld [vmem:[%s414 + $0x580] sm:$0xff]
        %v705 = vld [vmem:[%s414 + $0x588] sm:$0xff]
        %v706 = vld [vmem:[%s414 + $0x590] sm:$0xff]
        %v707 = vld [vmem:[%s414 + $0x598] sm:$0xff]
        %v708 = vld [vmem:[%s414 + $0x5a0] sm:$0xff]
        %v709 = vld [vmem:[%s414 + $0x5a8] sm:$0xff]
        %v710 = vld [vmem:[%s414 + $0x5b0] sm:$0xff]
        %v711 = vld [vmem:[%s414 + $0x5b8] sm:$0xff]
        %v712 = vld [vmem:[%s414 + $0x5c0] sm:$0xff]
        %v713 = vld [vmem:[%s414 + $0x5c8] sm:$0xff]
        %v714 = vld [vmem:[%s414 + $0x5d0] sm:$0xff]
        %v715 = vld [vmem:[%s414 + $0x5d8] sm:$0xff]
        %v716 = vld [vmem:[%s414 + $0x5e0] sm:$0xff]
        %v717 = vld [vmem:[%s414 + $0x5e8] sm:$0xff]
        %v718 = vld [vmem:[%s414 + $0x5f0] sm:$0xff]
        %v719 = vld [vmem:[%s414 + $0x5f8] sm:$0xff]
        %v720 = vld [vmem:[%s414 + $0x600] sm:$0xff]
        %v721 = vld [vmem:[%s414 + $0x608] sm:$0xff]
        %v722 = vld [vmem:[%s414 + $0x610] sm:$0xff]
        %v723 = vld [vmem:[%s414 + $0x618] sm:$0xff]
        %v724 = vld [vmem:[%s414 + $0x620] sm:$0xff]
        %v725 = vld [vmem:[%s414 + $0x628] sm:$0xff]
        %v726 = vld [vmem:[%s414 + $0x630] sm:$0xff]
        %v727 = vld [vmem:[%s414 + $0x638] sm:$0xff]
        %v728 = vld [vmem:[%s414 + $0x640] sm:$0xff]
        %v729 = vld [vmem:[%s414 + $0x648] sm:$0xff]
        %v730 = vld [vmem:[%s414 + $0x650] sm:$0xff]
        %v731 = vld [vmem:[%s414 + $0x658] sm:$0xff]
        %v732 = vld [vmem:[%s414 + $0x660] sm:$0xff]
        %v733 = vld [vmem:[%s414 + $0x668] sm:$0xff]
        %v734 = vld [vmem:[%s414 + $0x670] sm:$0xff]
        %v735 = vld [vmem:[%s414 + $0x678] sm:$0xff]
        %v736 = vld [vmem:[%s414 + $0x680] sm:$0xff]
        %v737 = vld [vmem:[%s414 + $0x688] sm:$0xff]
        %v738 = vld [vmem:[%s414 + $0x690] sm:$0xff]
        %v739 = vld [vmem:[%s414 + $0x698] sm:$0xff]
        %v740 = vld [vmem:[%s414 + $0x6a0] sm:$0xff]
        %v741 = vld [vmem:[%s414 + $0x6a8] sm:$0xff]
        %v742 = vld [vmem:[%s414 + $0x6b0] sm:$0xff]
        %v743 = vld [vmem:[%s414 + $0x6b8] sm:$0xff]
        %v744 = vld [vmem:[%s414 + $0x6c0] sm:$0xff]
        %v745 = vld [vmem:[%s414 + $0x6c8] sm:$0xff]
        %v746 = vld [vmem:[%s414 + $0x6d0] sm:$0xff]
        %v747 = vld [vmem:[%s414 + $0x6d8] sm:$0xff]
        %v748 = vld [vmem:[%s414 + $0x6e0] sm:$0xff]
        %v749 = vld [vmem:[%s414 + $0x6e8] sm:$0xff]
        %v750 = vld [vmem:[%s414 + $0x6f0] sm:$0xff]
        %v751 = vld [vmem:[%s414 + $0x6f8] sm:$0xff]
        %v752 = vld [vmem:[%s414 + $0x700] sm:$0xff]
        %v753 = vld [vmem:[%s414 + $0x708] sm:$0xff]
        %v754 = vld [vmem:[%s414 + $0x710] sm:$0xff]
        %v755 = vld [vmem:[%s414 + $0x718] sm:$0xff]
        %v756 = vld [vmem:[%s414 + $0x720] sm:$0xff]
        %v757 = vld [vmem:[%s414 + $0x728] sm:$0xff]
        %v758 = vld [vmem:[%s414 + $0x730] sm:$0xff]
        %v759 = vld [vmem:[%s414 + $0x738] sm:$0xff]
        %v760 = vld [vmem:[%s414 + $0x740] sm:$0xff]
        %v761 = vld [vmem:[%s414 + $0x748] sm:$0xff]
        %v762 = vld [vmem:[%s414 + $0x750] sm:$0xff]
        %v763 = vld [vmem:[%s414 + $0x758] sm:$0xff]
        %v764 = vld [vmem:[%s414 + $0x760] sm:$0xff]
        %v765 = vld [vmem:[%s414 + $0x768] sm:$0xff]
        %v766 = vld [vmem:[%s414 + $0x770] sm:$0xff]
        %v767 = vld [vmem:[%s414 + $0x778] sm:$0xff]
        %v768 = vld [vmem:[%s414 + $0x780] sm:$0xff]
        %v769 = vld [vmem:[%s414 + $0x788] sm:$0xff]
        %v770 = vld [vmem:[%s414 + $0x790] sm:$0xff]
        %v771 = vld [vmem:[%s414 + $0x798] sm:$0xff]
        %v772 = vld [vmem:[%s414 + $0x7a0] sm:$0xff]
        %v773 = vld [vmem:[%s414 + $0x7a8] sm:$0xff]
        %v774 = vld [vmem:[%s414 + $0x7b0] sm:$0xff]
        %v775 = vld [vmem:[%s414 + $0x7b8] sm:$0xff]
        %v776 = vld [vmem:[%s414 + $0x7c0] sm:$0xff]
        %v777 = vld [vmem:[%s414 + $0x7c8] sm:$0xff]
        %v778 = vld [vmem:[%s414 + $0x7d0] sm:$0xff]
        %v779 = vld [vmem:[%s414 + $0x7d8] sm:$0xff]
        %v780 = vld [vmem:[%s414 + $0x7e0] sm:$0xff]
        %v781 = vld [vmem:[%s414 + $0x7e8] sm:$0xff]
        %v782 = vld [vmem:[%s414 + $0x7f0] sm:$0xff]
        %v783 = vld [vmem:[%s414 + $0x7f8] sm:$0xff]
        %v784 = vld [vmem:[%s414 + $0x800] sm:$0xff]
        %v785 = vld [vmem:[%s414 + $0x808] sm:$0xff]
        %v786 = vld [vmem:[%s414 + $0x810] sm:$0xff]
        %v787 = vld [vmem:[%s414 + $0x818] sm:$0xff]
        %v788 = vld [vmem:[%s414 + $0x820] sm:$0xff]
        %v789 = vld [vmem:[%s414 + $0x828] sm:$0xff]
        %v790 = vld [vmem:[%s414 + $0x830] sm:$0xff]
        %v791 = vld [vmem:[%s414 + $0x838] sm:$0xff]
        %v792 = vld [vmem:[%s414 + $0x840] sm:$0xff]
        %v793 = vld [vmem:[%s414 + $0x848] sm:$0xff]
        %v794 = vld [vmem:[%s414 + $0x850] sm:$0xff]
        %v795 = vld [vmem:[%s414 + $0x858] sm:$0xff]
        %v796 = vld [vmem:[%s414 + $0x860] sm:$0xff]
        %v797 = vld [vmem:[%s414 + $0x868] sm:$0xff]
        %v798 = vld [vmem:[%s414 + $0x870] sm:$0xff]
        %v799 = vld [vmem:[%s414 + $0x878] sm:$0xff]
        %v800 = vld [vmem:[%s414 + $0x880] sm:$0xff]
        %v801 = vld [vmem:[%s414 + $0x888] sm:$0xff]
        %v802 = vld [vmem:[%s414 + $0x890] sm:$0xff]
        %v803 = vld [vmem:[%s414 + $0x898] sm:$0xff]
        %v804 = vld [vmem:[%s414 + $0x8a0] sm:$0xff]
        %v805 = vld [vmem:[%s414 + $0x8a8] sm:$0xff]
        %v806 = vld [vmem:[%s414 + $0x8b0] sm:$0xff]
        %v807 = vld [vmem:[%s414 + $0x8b8] sm:$0xff]
        %v808 = vld [vmem:[%s414 + $0x8c0] sm:$0xff]
        %v809 = vld [vmem:[%s414 + $0x8c8] sm:$0xff]
        %v810 = vld [vmem:[%s414 + $0x8d0] sm:$0xff]
        %v811 = vld [vmem:[%s414 + $0x8d8] sm:$0xff]
        %v812 = vld [vmem:[%s414 + $0x8e0] sm:$0xff]
        %v813 = vld [vmem:[%s414 + $0x8e8] sm:$0xff]
        %v814 = vld [vmem:[%s414 + $0x8f0] sm:$0xff]
        %v815 = vld [vmem:[%s414 + $0x8f8] sm:$0xff]
        %v822 = vunpack.c.l.b16 %v522
        %v823 = vunpack.c.h.b16 %v522
        %v824 = vunpack.c.l.b16 %v523
        %v825 = vunpack.c.h.b16 %v523
        %v826 = vunpack.c.l.b16 %v524
        %v827 = vunpack.c.h.b16 %v524
        %v828 = vunpack.c.l.b16 %v525
        %v829 = vunpack.c.h.b16 %v525
        %v830 = vunpack.c.l.b16 %v526
        %v831 = vunpack.c.h.b16 %v526
        %v832 = vunpack.c.l.b16 %v527
        %v833 = vunpack.c.h.b16 %v527
        %v834 = vpack.c.b16 %v828, %v822
        %v835 = vpack.c.b16 %v829, %v823
        %v836 = vpack.c.b16 %v830, %v824
        %v837 = vpack.c.b16 %v831, %v825
        %v838 = vpack.c.b16 %v832, %v826
        %v839 = vpack.c.b16 %v833, %v827
        %v1134 = vunpack.c.l.b16 %v528
        %v1135 = vunpack.c.h.b16 %v528
        %v1136 = vunpack.c.l.b16 %v529
        %v1137 = vunpack.c.h.b16 %v529
        %v1138 = vunpack.c.l.b16 %v530
        %v1139 = vunpack.c.h.b16 %v530
        %v1140 = vunpack.c.l.b16 %v531
        %v1141 = vunpack.c.h.b16 %v531
        %v1142 = vunpack.c.l.b16 %v532
        %v1143 = vunpack.c.h.b16 %v532
        %v1144 = vunpack.c.l.b16 %v533
        %v1145 = vunpack.c.h.b16 %v533
        %v1146 = vunpack.c.l.b16 %v534
        %v1147 = vunpack.c.h.b16 %v534
        %v1148 = vunpack.c.l.b16 %v535
        %v1149 = vunpack.c.h.b16 %v535
        %v1150 = vunpack.c.l.b16 %v536
        %v1151 = vunpack.c.h.b16 %v536
        %v1152 = vunpack.c.l.b16 %v537
        %v1153 = vunpack.c.h.b16 %v537
        %v1154 = vunpack.c.l.b16 %v538
        %v1155 = vunpack.c.h.b16 %v538
        %v1156 = vunpack.c.l.b16 %v539
        %v1157 = vunpack.c.h.b16 %v539
        %v1158 = vunpack.c.l.b16 %v540
        %v1159 = vunpack.c.h.b16 %v540
        %v1160 = vunpack.c.l.b16 %v541
        %v1161 = vunpack.c.h.b16 %v541
        %v1162 = vunpack.c.l.b16 %v542
        %v1163 = vunpack.c.h.b16 %v542
        %v1164 = vunpack.c.l.b16 %v543
        %v1165 = vunpack.c.h.b16 %v543
        %v1166 = vunpack.c.l.b16 %v544
        %v1167 = vunpack.c.h.b16 %v544
        %v1168 = vunpack.c.l.b16 %v545
        %v1169 = vunpack.c.h.b16 %v545
        %v1170 = vunpack.c.l.b16 %v546
        %v1171 = vunpack.c.h.b16 %v546
        %v1172 = vunpack.c.l.b16 %v547
        %v1173 = vunpack.c.h.b16 %v547
        %v1174 = vunpack.c.l.b16 %v548
        %v1175 = vunpack.c.h.b16 %v548
        %v1176 = vunpack.c.l.b16 %v549
        %v1177 = vunpack.c.h.b16 %v549
        %v1178 = vunpack.c.l.b16 %v550
        %v1179 = vunpack.c.h.b16 %v550
        %v1180 = vunpack.c.l.b16 %v551
        %v1181 = vunpack.c.h.b16 %v551
        %v1182 = vunpack.c.l.b16 %v552
        %v1183 = vunpack.c.h.b16 %v552
        %v1184 = vunpack.c.l.b16 %v553
        %v1185 = vunpack.c.h.b16 %v553
        %v1186 = vunpack.c.l.b16 %v554
        %v1187 = vunpack.c.h.b16 %v554
        %v1188 = vunpack.c.l.b16 %v555
        %v1189 = vunpack.c.h.b16 %v555
        %v1190 = vunpack.c.l.b16 %v556
        %v1191 = vunpack.c.h.b16 %v556
        %v1192 = vunpack.c.l.b16 %v557
        %v1193 = vunpack.c.h.b16 %v557
        %v1194 = vunpack.c.l.b16 %v558
        %v1195 = vunpack.c.h.b16 %v558
        %v1196 = vunpack.c.l.b16 %v559
        %v1197 = vunpack.c.h.b16 %v559
        %v1198 = vunpack.c.l.b16 %v560
        %v1199 = vunpack.c.h.b16 %v560
        %v1200 = vunpack.c.l.b16 %v561
        %v1201 = vunpack.c.h.b16 %v561
        %v1202 = vunpack.c.l.b16 %v562
        %v1203 = vunpack.c.h.b16 %v562
        %v1204 = vunpack.c.l.b16 %v563
        %v1205 = vunpack.c.h.b16 %v563
        %v1206 = vunpack.c.l.b16 %v564
        %v1207 = vunpack.c.h.b16 %v564
        %v1208 = vunpack.c.l.b16 %v565
        %v1209 = vunpack.c.h.b16 %v565
        %v1210 = vunpack.c.l.b16 %v566
        %v1211 = vunpack.c.h.b16 %v566
        %v1212 = vunpack.c.l.b16 %v567
        %v1213 = vunpack.c.h.b16 %v567
        %v1214 = vunpack.c.l.b16 %v568
        %v1215 = vunpack.c.h.b16 %v568
        %v1216 = vunpack.c.l.b16 %v569
        %v1217 = vunpack.c.h.b16 %v569
        %v1218 = vunpack.c.l.b16 %v570
        %v1219 = vunpack.c.h.b16 %v570
        %v1220 = vunpack.c.l.b16 %v571
        %v1221 = vunpack.c.h.b16 %v571
        %v1222 = vunpack.c.l.b16 %v572
        %v1223 = vunpack.c.h.b16 %v572
        %v1224 = vunpack.c.l.b16 %v573
        %v1225 = vunpack.c.h.b16 %v573
        %v1226 = vunpack.c.l.b16 %v574
        %v1227 = vunpack.c.h.b16 %v574
        %v1228 = vunpack.c.l.b16 %v575
        %v1229 = vunpack.c.h.b16 %v575
        %v1230 = vunpack.c.l.b16 %v576
        %v1231 = vunpack.c.h.b16 %v576
        %v1232 = vunpack.c.l.b16 %v577
        %v1233 = vunpack.c.h.b16 %v577
        %v1234 = vunpack.c.l.b16 %v578
        %v1235 = vunpack.c.h.b16 %v578
        %v1236 = vunpack.c.l.b16 %v579
        %v1237 = vunpack.c.h.b16 %v579
        %v1238 = vunpack.c.l.b16 %v580
        %v1239 = vunpack.c.h.b16 %v580
        %v1240 = vunpack.c.l.b16 %v581
        %v1241 = vunpack.c.h.b16 %v581
        %v1242 = vunpack.c.l.b16 %v582
        %v1243 = vunpack.c.h.b16 %v582
        %v1244 = vunpack.c.l.b16 %v583
        %v1245 = vunpack.c.h.b16 %v583
        %v1246 = vunpack.c.l.b16 %v584
        %v1247 = vunpack.c.h.b16 %v584
        %v1248 = vunpack.c.l.b16 %v585
        %v1249 = vunpack.c.h.b16 %v585
        %v1250 = vunpack.c.l.b16 %v586
        %v1251 = vunpack.c.h.b16 %v586
        %v1252 = vunpack.c.l.b16 %v587
        %v1253 = vunpack.c.h.b16 %v587
        %v1254 = vunpack.c.l.b16 %v588
        %v1255 = vunpack.c.h.b16 %v588
        %v1256 = vunpack.c.l.b16 %v589
        %v1257 = vunpack.c.h.b16 %v589
        %v1258 = vunpack.c.l.b16 %v590
        %v1259 = vunpack.c.h.b16 %v590
        %v1260 = vunpack.c.l.b16 %v591
        %v1261 = vunpack.c.h.b16 %v591
        %v1262 = vunpack.c.l.b16 %v592
        %v1263 = vunpack.c.h.b16 %v592
        %v1264 = vunpack.c.l.b16 %v593
        %v1265 = vunpack.c.h.b16 %v593
        %v1266 = vunpack.c.l.b16 %v594
        %v1267 = vunpack.c.h.b16 %v594
        %v1268 = vunpack.c.l.b16 %v595
        %v1269 = vunpack.c.h.b16 %v595
        %v1270 = vunpack.c.l.b16 %v596
        %v1271 = vunpack.c.h.b16 %v596
        %v1272 = vunpack.c.l.b16 %v597
        %v1273 = vunpack.c.h.b16 %v597
        %v1274 = vunpack.c.l.b16 %v598
        %v1275 = vunpack.c.h.b16 %v598
        %v1276 = vunpack.c.l.b16 %v599
        %v1277 = vunpack.c.h.b16 %v599
        %v1278 = vunpack.c.l.b16 %v600
        %v1279 = vunpack.c.h.b16 %v600
        %v1280 = vunpack.c.l.b16 %v601
        %v1281 = vunpack.c.h.b16 %v601
        %v1282 = vunpack.c.l.b16 %v602
        %v1283 = vunpack.c.h.b16 %v602
        %v1284 = vunpack.c.l.b16 %v603
        %v1285 = vunpack.c.h.b16 %v603
        %v1286 = vunpack.c.l.b16 %v604
        %v1287 = vunpack.c.h.b16 %v604
        %v1288 = vunpack.c.l.b16 %v605
        %v1289 = vunpack.c.h.b16 %v605
        %v1290 = vunpack.c.l.b16 %v606
        %v1291 = vunpack.c.h.b16 %v606
        %v1292 = vunpack.c.l.b16 %v607
        %v1293 = vunpack.c.h.b16 %v607
        %v1294 = vunpack.c.l.b16 %v608
        %v1295 = vunpack.c.h.b16 %v608
        %v1296 = vunpack.c.l.b16 %v609
        %v1297 = vunpack.c.h.b16 %v609
        %v1298 = vunpack.c.l.b16 %v610
        %v1299 = vunpack.c.h.b16 %v610
        %v1300 = vunpack.c.l.b16 %v611
        %v1301 = vunpack.c.h.b16 %v611
        %v1302 = vunpack.c.l.b16 %v612
        %v1303 = vunpack.c.h.b16 %v612
        %v1304 = vunpack.c.l.b16 %v613
        %v1305 = vunpack.c.h.b16 %v613
        %v1306 = vunpack.c.l.b16 %v614
        %v1307 = vunpack.c.h.b16 %v614
        %v1308 = vunpack.c.l.b16 %v615
        %v1309 = vunpack.c.h.b16 %v615
        %v1310 = vunpack.c.l.b16 %v616
        %v1311 = vunpack.c.h.b16 %v616
        %v1312 = vunpack.c.l.b16 %v617
        %v1313 = vunpack.c.h.b16 %v617
        %v1314 = vunpack.c.l.b16 %v618
        %v1315 = vunpack.c.h.b16 %v618
        %v1316 = vunpack.c.l.b16 %v619
        %v1317 = vunpack.c.h.b16 %v619
        %v1318 = vunpack.c.l.b16 %v620
        %v1319 = vunpack.c.h.b16 %v620
        %v1320 = vunpack.c.l.b16 %v621
        %v1321 = vunpack.c.h.b16 %v621
        %v1322 = vunpack.c.l.b16 %v622
        %v1323 = vunpack.c.h.b16 %v622
        %v1324 = vunpack.c.l.b16 %v623
        %v1325 = vunpack.c.h.b16 %v623
        %v1326 = vunpack.c.l.b16 %v624
        %v1327 = vunpack.c.h.b16 %v624
        %v1328 = vunpack.c.l.b16 %v625
        %v1329 = vunpack.c.h.b16 %v625
        %v1330 = vunpack.c.l.b16 %v626
        %v1331 = vunpack.c.h.b16 %v626
        %v1332 = vunpack.c.l.b16 %v627
        %v1333 = vunpack.c.h.b16 %v627
        %v1334 = vunpack.c.l.b16 %v628
        %v1335 = vunpack.c.h.b16 %v628
        %v1336 = vunpack.c.l.b16 %v629
        %v1337 = vunpack.c.h.b16 %v629
        %v1338 = vunpack.c.l.b16 %v630
        %v1339 = vunpack.c.h.b16 %v630
        %v1340 = vunpack.c.l.b16 %v631
        %v1341 = vunpack.c.h.b16 %v631
        %v1342 = vunpack.c.l.b16 %v632
        %v1343 = vunpack.c.h.b16 %v632
        %v1344 = vunpack.c.l.b16 %v633
        %v1345 = vunpack.c.h.b16 %v633
        %v1346 = vunpack.c.l.b16 %v634
        %v1347 = vunpack.c.h.b16 %v634
        %v1348 = vunpack.c.l.b16 %v635
        %v1349 = vunpack.c.h.b16 %v635
        %v1350 = vunpack.c.l.b16 %v636
        %v1351 = vunpack.c.h.b16 %v636
        %v1352 = vunpack.c.l.b16 %v637
        %v1353 = vunpack.c.h.b16 %v637
        %v1354 = vunpack.c.l.b16 %v638
        %v1355 = vunpack.c.h.b16 %v638
        %v1356 = vunpack.c.l.b16 %v639
        %v1357 = vunpack.c.h.b16 %v639
        %v1358 = vunpack.c.l.b16 %v640
        %v1359 = vunpack.c.h.b16 %v640
        %v1360 = vunpack.c.l.b16 %v641
        %v1361 = vunpack.c.h.b16 %v641
        %v1362 = vunpack.c.l.b16 %v642
        %v1363 = vunpack.c.h.b16 %v642
        %v1364 = vunpack.c.l.b16 %v643
        %v1365 = vunpack.c.h.b16 %v643
        %v1366 = vunpack.c.l.b16 %v644
        %v1367 = vunpack.c.h.b16 %v644
        %v1368 = vunpack.c.l.b16 %v645
        %v1369 = vunpack.c.h.b16 %v645
        %v1370 = vunpack.c.l.b16 %v646
        %v1371 = vunpack.c.h.b16 %v646
        %v1372 = vunpack.c.l.b16 %v647
        %v1373 = vunpack.c.h.b16 %v647
        %v1374 = vunpack.c.l.b16 %v648
        %v1375 = vunpack.c.h.b16 %v648
        %v1376 = vunpack.c.l.b16 %v649
        %v1377 = vunpack.c.h.b16 %v649
        %v1378 = vunpack.c.l.b16 %v650
        %v1379 = vunpack.c.h.b16 %v650
        %v1380 = vunpack.c.l.b16 %v651
        %v1381 = vunpack.c.h.b16 %v651
        %v1382 = vunpack.c.l.b16 %v652
        %v1383 = vunpack.c.h.b16 %v652
        %v1384 = vunpack.c.l.b16 %v653
        %v1385 = vunpack.c.h.b16 %v653
        %v1386 = vunpack.c.l.b16 %v654
        %v1387 = vunpack.c.h.b16 %v654
        %v1388 = vunpack.c.l.b16 %v655
        %v1389 = vunpack.c.h.b16 %v655
        %v1390 = vunpack.c.l.b16 %v656
        %v1391 = vunpack.c.h.b16 %v656
        %v1392 = vunpack.c.l.b16 %v657
        %v1393 = vunpack.c.h.b16 %v657
        %v1394 = vunpack.c.l.b16 %v658
        %v1395 = vunpack.c.h.b16 %v658
        %v1396 = vunpack.c.l.b16 %v659
        %v1397 = vunpack.c.h.b16 %v659
        %v1398 = vunpack.c.l.b16 %v660
        %v1399 = vunpack.c.h.b16 %v660
        %v1400 = vunpack.c.l.b16 %v661
        %v1401 = vunpack.c.h.b16 %v661
        %v1402 = vunpack.c.l.b16 %v662
        %v1403 = vunpack.c.h.b16 %v662
        %v1404 = vunpack.c.l.b16 %v663
        %v1405 = vunpack.c.h.b16 %v663
        %v1406 = vunpack.c.l.b16 %v664
        %v1407 = vunpack.c.h.b16 %v664
        %v1408 = vunpack.c.l.b16 %v665
        %v1409 = vunpack.c.h.b16 %v665
        %v1410 = vunpack.c.l.b16 %v666
        %v1411 = vunpack.c.h.b16 %v666
        %v1412 = vunpack.c.l.b16 %v667
        %v1413 = vunpack.c.h.b16 %v667
        %v1414 = vunpack.c.l.b16 %v668
        %v1415 = vunpack.c.h.b16 %v668
        %v1416 = vunpack.c.l.b16 %v669
        %v1417 = vunpack.c.h.b16 %v669
        %v1418 = vunpack.c.l.b16 %v670
        %v1419 = vunpack.c.h.b16 %v670
        %v1420 = vunpack.c.l.b16 %v671
        %v1421 = vunpack.c.h.b16 %v671
        %v1422 = vunpack.c.l.b16 %v672
        %v1423 = vunpack.c.h.b16 %v672
        %v1424 = vunpack.c.l.b16 %v673
        %v1425 = vunpack.c.h.b16 %v673
        %v1426 = vunpack.c.l.b16 %v674
        %v1427 = vunpack.c.h.b16 %v674
        %v1428 = vunpack.c.l.b16 %v675
        %v1429 = vunpack.c.h.b16 %v675
        %v1430 = vunpack.c.l.b16 %v676
        %v1431 = vunpack.c.h.b16 %v676
        %v1432 = vunpack.c.l.b16 %v677
        %v1433 = vunpack.c.h.b16 %v677
        %v1434 = vunpack.c.l.b16 %v678
        %v1435 = vunpack.c.h.b16 %v678
        %v1436 = vunpack.c.l.b16 %v679
        %v1437 = vunpack.c.h.b16 %v679
        %v1438 = vunpack.c.l.b16 %v680
        %v1439 = vunpack.c.h.b16 %v680
        %v1440 = vunpack.c.l.b16 %v681
        %v1441 = vunpack.c.h.b16 %v681
        %v1442 = vunpack.c.l.b16 %v682
        %v1443 = vunpack.c.h.b16 %v682
        %v1444 = vunpack.c.l.b16 %v683
        %v1445 = vunpack.c.h.b16 %v683
        %v1446 = vunpack.c.l.b16 %v684
        %v1447 = vunpack.c.h.b16 %v684
        %v1448 = vunpack.c.l.b16 %v685
        %v1449 = vunpack.c.h.b16 %v685
        %v1450 = vunpack.c.l.b16 %v686
        %v1451 = vunpack.c.h.b16 %v686
        %v1452 = vunpack.c.l.b16 %v687
        %v1453 = vunpack.c.h.b16 %v687
        %v1454 = vunpack.c.l.b16 %v688
        %v1455 = vunpack.c.h.b16 %v688
        %v1456 = vunpack.c.l.b16 %v689
        %v1457 = vunpack.c.h.b16 %v689
        %v1458 = vunpack.c.l.b16 %v690
        %v1459 = vunpack.c.h.b16 %v690
        %v1460 = vunpack.c.l.b16 %v691
        %v1461 = vunpack.c.h.b16 %v691
        %v1462 = vunpack.c.l.b16 %v692
        %v1463 = vunpack.c.h.b16 %v692
        %v1464 = vunpack.c.l.b16 %v693
        %v1465 = vunpack.c.h.b16 %v693
        %v1466 = vunpack.c.l.b16 %v694
        %v1467 = vunpack.c.h.b16 %v694
        %v1468 = vunpack.c.l.b16 %v695
        %v1469 = vunpack.c.h.b16 %v695
        %v1470 = vunpack.c.l.b16 %v696
        %v1471 = vunpack.c.h.b16 %v696
        %v1472 = vunpack.c.l.b16 %v697
        %v1473 = vunpack.c.h.b16 %v697
        %v1474 = vunpack.c.l.b16 %v698
        %v1475 = vunpack.c.h.b16 %v698
        %v1476 = vunpack.c.l.b16 %v699
        %v1477 = vunpack.c.h.b16 %v699
        %v1478 = vunpack.c.l.b16 %v700
        %v1479 = vunpack.c.h.b16 %v700
        %v1480 = vunpack.c.l.b16 %v701
        %v1481 = vunpack.c.h.b16 %v701
        %v1482 = vunpack.c.l.b16 %v702
        %v1483 = vunpack.c.h.b16 %v702
        %v1484 = vunpack.c.l.b16 %v703
        %v1485 = vunpack.c.h.b16 %v703
        %v1486 = vunpack.c.l.b16 %v704
        %v1487 = vunpack.c.h.b16 %v704
        %v1488 = vunpack.c.l.b16 %v705
        %v1489 = vunpack.c.h.b16 %v705
        %v1490 = vunpack.c.l.b16 %v706
        %v1491 = vunpack.c.h.b16 %v706
        %v1492 = vunpack.c.l.b16 %v707
        %v1493 = vunpack.c.h.b16 %v707
        %v1494 = vunpack.c.l.b16 %v708
        %v1495 = vunpack.c.h.b16 %v708
        %v1496 = vunpack.c.l.b16 %v709
        %v1497 = vunpack.c.h.b16 %v709
        %v1498 = vunpack.c.l.b16 %v710
        %v1499 = vunpack.c.h.b16 %v710
        %v1500 = vunpack.c.l.b16 %v711
        %v1501 = vunpack.c.h.b16 %v711
        %v1502 = vunpack.c.l.b16 %v712
        %v1503 = vunpack.c.h.b16 %v712
        %v1504 = vunpack.c.l.b16 %v713
        %v1505 = vunpack.c.h.b16 %v713
        %v1506 = vunpack.c.l.b16 %v714
        %v1507 = vunpack.c.h.b16 %v714
        %v1508 = vunpack.c.l.b16 %v715
        %v1509 = vunpack.c.h.b16 %v715
        %v1510 = vunpack.c.l.b16 %v716
        %v1511 = vunpack.c.h.b16 %v716
        %v1512 = vunpack.c.l.b16 %v717
        %v1513 = vunpack.c.h.b16 %v717
        %v1514 = vunpack.c.l.b16 %v718
        %v1515 = vunpack.c.h.b16 %v718
        %v1516 = vunpack.c.l.b16 %v719
        %v1517 = vunpack.c.h.b16 %v719
        %v1518 = vunpack.c.l.b16 %v720
        %v1519 = vunpack.c.h.b16 %v720
        %v1520 = vunpack.c.l.b16 %v721
        %v1521 = vunpack.c.h.b16 %v721
        %v1522 = vunpack.c.l.b16 %v722
        %v1523 = vunpack.c.h.b16 %v722
        %v1524 = vunpack.c.l.b16 %v723
        %v1525 = vunpack.c.h.b16 %v723
        %v1526 = vunpack.c.l.b16 %v724
        %v1527 = vunpack.c.h.b16 %v724
        %v1528 = vunpack.c.l.b16 %v725
        %v1529 = vunpack.c.h.b16 %v725
        %v1530 = vunpack.c.l.b16 %v726
        %v1531 = vunpack.c.h.b16 %v726
        %v1532 = vunpack.c.l.b16 %v727
        %v1533 = vunpack.c.h.b16 %v727
        %v1534 = vunpack.c.l.b16 %v728
        %v1535 = vunpack.c.h.b16 %v728
        %v1536 = vunpack.c.l.b16 %v729
        %v1537 = vunpack.c.h.b16 %v729
        %v1538 = vunpack.c.l.b16 %v730
        %v1539 = vunpack.c.h.b16 %v730
        %v1540 = vunpack.c.l.b16 %v731
        %v1541 = vunpack.c.h.b16 %v731
        %v1542 = vunpack.c.l.b16 %v732
        %v1543 = vunpack.c.h.b16 %v732
        %v1544 = vunpack.c.l.b16 %v733
        %v1545 = vunpack.c.h.b16 %v733
        %v1546 = vunpack.c.l.b16 %v734
        %v1547 = vunpack.c.h.b16 %v734
        %v1548 = vunpack.c.l.b16 %v735
        %v1549 = vunpack.c.h.b16 %v735
        %v1550 = vunpack.c.l.b16 %v736
        %v1551 = vunpack.c.h.b16 %v736
        %v1552 = vunpack.c.l.b16 %v737
        %v1553 = vunpack.c.h.b16 %v737
        %v1554 = vunpack.c.l.b16 %v738
        %v1555 = vunpack.c.h.b16 %v738
        %v1556 = vunpack.c.l.b16 %v739
        %v1557 = vunpack.c.h.b16 %v739
        %v1558 = vunpack.c.l.b16 %v740
        %v1559 = vunpack.c.h.b16 %v740
        %v1560 = vunpack.c.l.b16 %v741
        %v1561 = vunpack.c.h.b16 %v741
        %v1562 = vunpack.c.l.b16 %v742
        %v1563 = vunpack.c.h.b16 %v742
        %v1564 = vunpack.c.l.b16 %v743
        %v1565 = vunpack.c.h.b16 %v743
        %v1566 = vunpack.c.l.b16 %v744
        %v1567 = vunpack.c.h.b16 %v744
        %v1568 = vunpack.c.l.b16 %v745
        %v1569 = vunpack.c.h.b16 %v745
        %v1570 = vunpack.c.l.b16 %v746
        %v1571 = vunpack.c.h.b16 %v746
        %v1572 = vunpack.c.l.b16 %v747
        %v1573 = vunpack.c.h.b16 %v747
        %v1574 = vunpack.c.l.b16 %v748
        %v1575 = vunpack.c.h.b16 %v748
        %v1576 = vunpack.c.l.b16 %v749
        %v1577 = vunpack.c.h.b16 %v749
        %v1578 = vunpack.c.l.b16 %v750
        %v1579 = vunpack.c.h.b16 %v750
        %v1580 = vunpack.c.l.b16 %v751
        %v1581 = vunpack.c.h.b16 %v751
        %v1582 = vunpack.c.l.b16 %v752
        %v1583 = vunpack.c.h.b16 %v752
        %v1584 = vunpack.c.l.b16 %v753
        %v1585 = vunpack.c.h.b16 %v753
        %v1586 = vunpack.c.l.b16 %v754
        %v1587 = vunpack.c.h.b16 %v754
        %v1588 = vunpack.c.l.b16 %v755
        %v1589 = vunpack.c.h.b16 %v755
        %v1590 = vunpack.c.l.b16 %v756
        %v1591 = vunpack.c.h.b16 %v756
        %v1592 = vunpack.c.l.b16 %v757
        %v1593 = vunpack.c.h.b16 %v757
        %v1594 = vunpack.c.l.b16 %v758
        %v1595 = vunpack.c.h.b16 %v758
        %v1596 = vunpack.c.l.b16 %v759
        %v1597 = vunpack.c.h.b16 %v759
        %v1598 = vunpack.c.l.b16 %v760
        %v1599 = vunpack.c.h.b16 %v760
        %v1600 = vunpack.c.l.b16 %v761
        %v1601 = vunpack.c.h.b16 %v761
        %v1602 = vunpack.c.l.b16 %v762
        %v1603 = vunpack.c.h.b16 %v762
        %v1604 = vunpack.c.l.b16 %v763
        %v1605 = vunpack.c.h.b16 %v763
        %v1606 = vunpack.c.l.b16 %v764
        %v1607 = vunpack.c.h.b16 %v764
        %v1608 = vunpack.c.l.b16 %v765
        %v1609 = vunpack.c.h.b16 %v765
        %v1610 = vunpack.c.l.b16 %v766
        %v1611 = vunpack.c.h.b16 %v766
        %v1612 = vunpack.c.l.b16 %v767
        %v1613 = vunpack.c.h.b16 %v767
        %v1614 = vunpack.c.l.b16 %v768
        %v1615 = vunpack.c.h.b16 %v768
        %v1616 = vunpack.c.l.b16 %v769
        %v1617 = vunpack.c.h.b16 %v769
        %v1618 = vunpack.c.l.b16 %v770
        %v1619 = vunpack.c.h.b16 %v770
        %v1620 = vunpack.c.l.b16 %v771
        %v1621 = vunpack.c.h.b16 %v771
        %v1622 = vunpack.c.l.b16 %v772
        %v1623 = vunpack.c.h.b16 %v772
        %v1624 = vunpack.c.l.b16 %v773
        %v1625 = vunpack.c.h.b16 %v773
        %v1626 = vunpack.c.l.b16 %v774
        %v1627 = vunpack.c.h.b16 %v774
        %v1628 = vunpack.c.l.b16 %v775
        %v1629 = vunpack.c.h.b16 %v775
        %v1630 = vunpack.c.l.b16 %v776
        %v1631 = vunpack.c.h.b16 %v776
        %v1632 = vunpack.c.l.b16 %v777
        %v1633 = vunpack.c.h.b16 %v777
        %v1634 = vunpack.c.l.b16 %v778
        %v1635 = vunpack.c.h.b16 %v778
        %v1636 = vunpack.c.l.b16 %v779
        %v1637 = vunpack.c.h.b16 %v779
        %v1638 = vunpack.c.l.b16 %v780
        %v1639 = vunpack.c.h.b16 %v780
        %v1640 = vunpack.c.l.b16 %v781
        %v1641 = vunpack.c.h.b16 %v781
        %v1642 = vunpack.c.l.b16 %v782
        %v1643 = vunpack.c.h.b16 %v782
        %v1644 = vunpack.c.l.b16 %v783
        %v1645 = vunpack.c.h.b16 %v783
        %v1646 = vunpack.c.l.b16 %v784
        %v1647 = vunpack.c.h.b16 %v784
        %v1648 = vunpack.c.l.b16 %v785
        %v1649 = vunpack.c.h.b16 %v785
        %v1650 = vunpack.c.l.b16 %v786
        %v1651 = vunpack.c.h.b16 %v786
        %v1652 = vunpack.c.l.b16 %v787
        %v1653 = vunpack.c.h.b16 %v787
        %v1654 = vunpack.c.l.b16 %v788
        %v1655 = vunpack.c.h.b16 %v788
        %v1656 = vunpack.c.l.b16 %v789
        %v1657 = vunpack.c.h.b16 %v789
        %v1658 = vunpack.c.l.b16 %v790
        %v1659 = vunpack.c.h.b16 %v790
        %v1660 = vunpack.c.l.b16 %v791
        %v1661 = vunpack.c.h.b16 %v791
        %v1662 = vunpack.c.l.b16 %v792
        %v1663 = vunpack.c.h.b16 %v792
        %v1664 = vunpack.c.l.b16 %v793
        %v1665 = vunpack.c.h.b16 %v793
        %v1666 = vunpack.c.l.b16 %v794
        %v1667 = vunpack.c.h.b16 %v794
        %v1668 = vunpack.c.l.b16 %v795
        %v1669 = vunpack.c.h.b16 %v795
        %v1670 = vunpack.c.l.b16 %v796
        %v1671 = vunpack.c.h.b16 %v796
        %v1672 = vunpack.c.l.b16 %v797
        %v1673 = vunpack.c.h.b16 %v797
        %v1674 = vunpack.c.l.b16 %v798
        %v1675 = vunpack.c.h.b16 %v798
        %v1676 = vunpack.c.l.b16 %v799
        %v1677 = vunpack.c.h.b16 %v799
        %v1678 = vunpack.c.l.b16 %v800
        %v1679 = vunpack.c.h.b16 %v800
        %v1680 = vunpack.c.l.b16 %v801
        %v1681 = vunpack.c.h.b16 %v801
        %v1682 = vunpack.c.l.b16 %v802
        %v1683 = vunpack.c.h.b16 %v802
        %v1684 = vunpack.c.l.b16 %v803
        %v1685 = vunpack.c.h.b16 %v803
        %v1686 = vunpack.c.l.b16 %v804
        %v1687 = vunpack.c.h.b16 %v804
        %v1688 = vunpack.c.l.b16 %v805
        %v1689 = vunpack.c.h.b16 %v805
        %v1690 = vunpack.c.l.b16 %v806
        %v1691 = vunpack.c.h.b16 %v806
        %v1692 = vunpack.c.l.b16 %v807
        %v1693 = vunpack.c.h.b16 %v807
        %v1694 = vunpack.c.l.b16 %v808
        %v1695 = vunpack.c.h.b16 %v808
        %v1696 = vunpack.c.l.b16 %v809
        %v1697 = vunpack.c.h.b16 %v809
        %v1698 = vunpack.c.l.b16 %v810
        %v1699 = vunpack.c.h.b16 %v810
        %v1700 = vunpack.c.l.b16 %v811
        %v1701 = vunpack.c.h.b16 %v811
        %v1702 = vunpack.c.l.b16 %v812
        %v1703 = vunpack.c.h.b16 %v812
        %v1704 = vunpack.c.l.b16 %v813
        %v1705 = vunpack.c.h.b16 %v813
        %v1706 = vunpack.c.l.b16 %v814
        %v1707 = vunpack.c.h.b16 %v814
        %v1708 = vunpack.c.l.b16 %v815
        %v1709 = vunpack.c.h.b16 %v815
        %v1710 = vpack.c.b16 %v1140, %v1134
        %v1711 = vpack.c.b16 %v1141, %v1135
        %v1712 = vpack.c.b16 %v1142, %v1136
        %v1713 = vpack.c.b16 %v1143, %v1137
        %v1714 = vpack.c.b16 %v1144, %v1138
        %v1715 = vpack.c.b16 %v1145, %v1139
        %v1716 = vpack.c.b16 %v1152, %v1146
        %v1717 = vpack.c.b16 %v1153, %v1147
        %v1718 = vpack.c.b16 %v1154, %v1148
        %v1719 = vpack.c.b16 %v1155, %v1149
        %v1720 = vpack.c.b16 %v1156, %v1150
        %v1721 = vpack.c.b16 %v1157, %v1151
        %v1722 = vpack.c.b16 %v1164, %v1158
        %v1723 = vpack.c.b16 %v1165, %v1159
        %v1724 = vpack.c.b16 %v1166, %v1160
        %v1725 = vpack.c.b16 %v1167, %v1161
        %v1726 = vpack.c.b16 %v1168, %v1162
        %v1727 = vpack.c.b16 %v1169, %v1163
        %v1728 = vpack.c.b16 %v1176, %v1170
        %v1729 = vpack.c.b16 %v1177, %v1171
        %v1730 = vpack.c.b16 %v1178, %v1172
        %v1731 = vpack.c.b16 %v1179, %v1173
        %v1732 = vpack.c.b16 %v1180, %v1174
        %v1733 = vpack.c.b16 %v1181, %v1175
        %v1734 = vpack.c.b16 %v1188, %v1182
        %v1735 = vpack.c.b16 %v1189, %v1183
        %v1736 = vpack.c.b16 %v1190, %v1184
        %v1737 = vpack.c.b16 %v1191, %v1185
        %v1738 = vpack.c.b16 %v1192, %v1186
        %v1739 = vpack.c.b16 %v1193, %v1187
        %v1740 = vpack.c.b16 %v1200, %v1194
        %v1741 = vpack.c.b16 %v1201, %v1195
        %v1742 = vpack.c.b16 %v1202, %v1196
        %v1743 = vpack.c.b16 %v1203, %v1197
        %v1744 = vpack.c.b16 %v1204, %v1198
        %v1745 = vpack.c.b16 %v1205, %v1199
        %v1746 = vpack.c.b16 %v1212, %v1206
        %v1747 = vpack.c.b16 %v1213, %v1207
        %v1748 = vpack.c.b16 %v1214, %v1208
        %v1749 = vpack.c.b16 %v1215, %v1209
        %v1750 = vpack.c.b16 %v1216, %v1210
        %v1751 = vpack.c.b16 %v1217, %v1211
        %v1752 = vpack.c.b16 %v1224, %v1218
        %v1753 = vpack.c.b16 %v1225, %v1219
        %v1754 = vpack.c.b16 %v1226, %v1220
        %v1755 = vpack.c.b16 %v1227, %v1221
        %v1756 = vpack.c.b16 %v1228, %v1222
        %v1757 = vpack.c.b16 %v1229, %v1223
        %v1758 = vpack.c.b16 %v1236, %v1230
        %v1759 = vpack.c.b16 %v1237, %v1231
        %v1760 = vpack.c.b16 %v1238, %v1232
        %v1761 = vpack.c.b16 %v1239, %v1233
        %v1762 = vpack.c.b16 %v1240, %v1234
        %v1763 = vpack.c.b16 %v1241, %v1235
        %v1764 = vpack.c.b16 %v1248, %v1242
        %v1765 = vpack.c.b16 %v1249, %v1243
        %v1766 = vpack.c.b16 %v1250, %v1244
        %v1767 = vpack.c.b16 %v1251, %v1245
        %v1768 = vpack.c.b16 %v1252, %v1246
        %v1769 = vpack.c.b16 %v1253, %v1247
        %v1770 = vpack.c.b16 %v1260, %v1254
        %v1771 = vpack.c.b16 %v1261, %v1255
        %v1772 = vpack.c.b16 %v1262, %v1256
        %v1773 = vpack.c.b16 %v1263, %v1257
        %v1774 = vpack.c.b16 %v1264, %v1258
        %v1775 = vpack.c.b16 %v1265, %v1259
        %v1776 = vpack.c.b16 %v1272, %v1266
        %v1777 = vpack.c.b16 %v1273, %v1267
        %v1778 = vpack.c.b16 %v1274, %v1268
        %v1779 = vpack.c.b16 %v1275, %v1269
        %v1780 = vpack.c.b16 %v1276, %v1270
        %v1781 = vpack.c.b16 %v1277, %v1271
        %v1782 = vpack.c.b16 %v1284, %v1278
        %v1783 = vpack.c.b16 %v1285, %v1279
        %v1784 = vpack.c.b16 %v1286, %v1280
        %v1785 = vpack.c.b16 %v1287, %v1281
        %v1786 = vpack.c.b16 %v1288, %v1282
        %v1787 = vpack.c.b16 %v1289, %v1283
        %v1788 = vpack.c.b16 %v1296, %v1290
        %v1789 = vpack.c.b16 %v1297, %v1291
        %v1790 = vpack.c.b16 %v1298, %v1292
        %v1791 = vpack.c.b16 %v1299, %v1293
        %v1792 = vpack.c.b16 %v1300, %v1294
        %v1793 = vpack.c.b16 %v1301, %v1295
        %v1794 = vpack.c.b16 %v1308, %v1302
        %v1795 = vpack.c.b16 %v1309, %v1303
        %v1796 = vpack.c.b16 %v1310, %v1304
        %v1797 = vpack.c.b16 %v1311, %v1305
        %v1798 = vpack.c.b16 %v1312, %v1306
        %v1799 = vpack.c.b16 %v1313, %v1307
        %v1800 = vpack.c.b16 %v1320, %v1314
        %v1801 = vpack.c.b16 %v1321, %v1315
        %v1802 = vpack.c.b16 %v1322, %v1316
        %v1803 = vpack.c.b16 %v1323, %v1317
        %v1804 = vpack.c.b16 %v1324, %v1318
        %v1805 = vpack.c.b16 %v1325, %v1319
        %v1806 = vpack.c.b16 %v1332, %v1326
        %v1807 = vpack.c.b16 %v1333, %v1327
        %v1808 = vpack.c.b16 %v1334, %v1328
        %v1809 = vpack.c.b16 %v1335, %v1329
        %v1810 = vpack.c.b16 %v1336, %v1330
        %v1811 = vpack.c.b16 %v1337, %v1331
        %v1812 = vpack.c.b16 %v1344, %v1338
        %v1813 = vpack.c.b16 %v1345, %v1339
        %v1814 = vpack.c.b16 %v1346, %v1340
        %v1815 = vpack.c.b16 %v1347, %v1341
        %v1816 = vpack.c.b16 %v1348, %v1342
        %v1817 = vpack.c.b16 %v1349, %v1343
        %v1818 = vpack.c.b16 %v1356, %v1350
        %v1819 = vpack.c.b16 %v1357, %v1351
        %v1820 = vpack.c.b16 %v1358, %v1352
        %v1821 = vpack.c.b16 %v1359, %v1353
        %v1822 = vpack.c.b16 %v1360, %v1354
        %v1823 = vpack.c.b16 %v1361, %v1355
        %v1824 = vpack.c.b16 %v1368, %v1362
        %v1825 = vpack.c.b16 %v1369, %v1363
        %v1826 = vpack.c.b16 %v1370, %v1364
        %v1827 = vpack.c.b16 %v1371, %v1365
        %v1828 = vpack.c.b16 %v1372, %v1366
        %v1829 = vpack.c.b16 %v1373, %v1367
        %v1830 = vpack.c.b16 %v1380, %v1374
        %v1831 = vpack.c.b16 %v1381, %v1375
        %v1832 = vpack.c.b16 %v1382, %v1376
        %v1833 = vpack.c.b16 %v1383, %v1377
        %v1834 = vpack.c.b16 %v1384, %v1378
        %v1835 = vpack.c.b16 %v1385, %v1379
        %v1836 = vpack.c.b16 %v1392, %v1386
        %v1837 = vpack.c.b16 %v1393, %v1387
        %v1838 = vpack.c.b16 %v1394, %v1388
        %v1839 = vpack.c.b16 %v1395, %v1389
        %v1840 = vpack.c.b16 %v1396, %v1390
        %v1841 = vpack.c.b16 %v1397, %v1391
        %v1842 = vpack.c.b16 %v1404, %v1398
        %v1843 = vpack.c.b16 %v1405, %v1399
        %v1844 = vpack.c.b16 %v1406, %v1400
        %v1845 = vpack.c.b16 %v1407, %v1401
        %v1846 = vpack.c.b16 %v1408, %v1402
        %v1847 = vpack.c.b16 %v1409, %v1403
        %v1848 = vpack.c.b16 %v1416, %v1410
        %v1849 = vpack.c.b16 %v1417, %v1411
        %v1850 = vpack.c.b16 %v1418, %v1412
        %v1851 = vpack.c.b16 %v1419, %v1413
        %v1852 = vpack.c.b16 %v1420, %v1414
        %v1853 = vpack.c.b16 %v1421, %v1415
        %v1854 = vpack.c.b16 %v1428, %v1422
        %v1855 = vpack.c.b16 %v1429, %v1423
        %v1856 = vpack.c.b16 %v1430, %v1424
        %v1857 = vpack.c.b16 %v1431, %v1425
        %v1858 = vpack.c.b16 %v1432, %v1426
        %v1859 = vpack.c.b16 %v1433, %v1427
        %v1860 = vpack.c.b16 %v1440, %v1434
        %v1861 = vpack.c.b16 %v1441, %v1435
        %v1862 = vpack.c.b16 %v1442, %v1436
        %v1863 = vpack.c.b16 %v1443, %v1437
        %v1864 = vpack.c.b16 %v1444, %v1438
        %v1865 = vpack.c.b16 %v1445, %v1439
        %v1866 = vpack.c.b16 %v1452, %v1446
        %v1867 = vpack.c.b16 %v1453, %v1447
        %v1868 = vpack.c.b16 %v1454, %v1448
        %v1869 = vpack.c.b16 %v1455, %v1449
        %v1870 = vpack.c.b16 %v1456, %v1450
        %v1871 = vpack.c.b16 %v1457, %v1451
        %v1872 = vpack.c.b16 %v1464, %v1458
        %v1873 = vpack.c.b16 %v1465, %v1459
        %v1874 = vpack.c.b16 %v1466, %v1460
        %v1875 = vpack.c.b16 %v1467, %v1461
        %v1876 = vpack.c.b16 %v1468, %v1462
        %v1877 = vpack.c.b16 %v1469, %v1463
        %v1878 = vpack.c.b16 %v1476, %v1470
        %v1879 = vpack.c.b16 %v1477, %v1471
        %v1880 = vpack.c.b16 %v1478, %v1472
        %v1881 = vpack.c.b16 %v1479, %v1473
        %v1882 = vpack.c.b16 %v1480, %v1474
        %v1883 = vpack.c.b16 %v1481, %v1475
        %v1884 = vpack.c.b16 %v1488, %v1482
        %v1885 = vpack.c.b16 %v1489, %v1483
        %v1886 = vpack.c.b16 %v1490, %v1484
        %v1887 = vpack.c.b16 %v1491, %v1485
        %v1888 = vpack.c.b16 %v1492, %v1486
        %v1889 = vpack.c.b16 %v1493, %v1487
        %v1890 = vpack.c.b16 %v1500, %v1494
        %v1891 = vpack.c.b16 %v1501, %v1495
        %v1892 = vpack.c.b16 %v1502, %v1496
        %v1893 = vpack.c.b16 %v1503, %v1497
        %v1894 = vpack.c.b16 %v1504, %v1498
        %v1895 = vpack.c.b16 %v1505, %v1499
        %v1896 = vpack.c.b16 %v1512, %v1506
        %v1897 = vpack.c.b16 %v1513, %v1507
        %v1898 = vpack.c.b16 %v1514, %v1508
        %v1899 = vpack.c.b16 %v1515, %v1509
        %v1900 = vpack.c.b16 %v1516, %v1510
        %v1901 = vpack.c.b16 %v1517, %v1511
        %v1902 = vpack.c.b16 %v1524, %v1518
        %v1903 = vpack.c.b16 %v1525, %v1519
        %v1904 = vpack.c.b16 %v1526, %v1520
        %v1905 = vpack.c.b16 %v1527, %v1521
        %v1906 = vpack.c.b16 %v1528, %v1522
        %v1907 = vpack.c.b16 %v1529, %v1523
        %v1908 = vpack.c.b16 %v1536, %v1530
        %v1909 = vpack.c.b16 %v1537, %v1531
        %v1910 = vpack.c.b16 %v1538, %v1532
        %v1911 = vpack.c.b16 %v1539, %v1533
        %v1912 = vpack.c.b16 %v1540, %v1534
        %v1913 = vpack.c.b16 %v1541, %v1535
        %v1914 = vpack.c.b16 %v1548, %v1542
        %v1915 = vpack.c.b16 %v1549, %v1543
        %v1916 = vpack.c.b16 %v1550, %v1544
        %v1917 = vpack.c.b16 %v1551, %v1545
        %v1918 = vpack.c.b16 %v1552, %v1546
        %v1919 = vpack.c.b16 %v1553, %v1547
        %v1920 = vpack.c.b16 %v1560, %v1554
        %v1921 = vpack.c.b16 %v1561, %v1555
        %v1922 = vpack.c.b16 %v1562, %v1556
        %v1923 = vpack.c.b16 %v1563, %v1557
        %v1924 = vpack.c.b16 %v1564, %v1558
        %v1925 = vpack.c.b16 %v1565, %v1559
        %v1926 = vpack.c.b16 %v1572, %v1566
        %v1927 = vpack.c.b16 %v1573, %v1567
        %v1928 = vpack.c.b16 %v1574, %v1568
        %v1929 = vpack.c.b16 %v1575, %v1569
        %v1930 = vpack.c.b16 %v1576, %v1570
        %v1931 = vpack.c.b16 %v1577, %v1571
        %v1932 = vpack.c.b16 %v1584, %v1578
        %v1933 = vpack.c.b16 %v1585, %v1579
        %v1934 = vpack.c.b16 %v1586, %v1580
        %v1935 = vpack.c.b16 %v1587, %v1581
        %v1936 = vpack.c.b16 %v1588, %v1582
        %v1937 = vpack.c.b16 %v1589, %v1583
        %v1938 = vpack.c.b16 %v1596, %v1590
        %v1939 = vpack.c.b16 %v1597, %v1591
        %v1940 = vpack.c.b16 %v1598, %v1592
        %v1941 = vpack.c.b16 %v1599, %v1593
        %v1942 = vpack.c.b16 %v1600, %v1594
        %v1943 = vpack.c.b16 %v1601, %v1595
        %v1944 = vpack.c.b16 %v1608, %v1602
        %v1945 = vpack.c.b16 %v1609, %v1603
        %v1946 = vpack.c.b16 %v1610, %v1604
        %v1947 = vpack.c.b16 %v1611, %v1605
        %v1948 = vpack.c.b16 %v1612, %v1606
        %v1949 = vpack.c.b16 %v1613, %v1607
        %v1950 = vpack.c.b16 %v1620, %v1614
        %v1951 = vpack.c.b16 %v1621, %v1615
        %v1952 = vpack.c.b16 %v1622, %v1616
        %v1953 = vpack.c.b16 %v1623, %v1617
        %v1954 = vpack.c.b16 %v1624, %v1618
        %v1955 = vpack.c.b16 %v1625, %v1619
        %v1956 = vpack.c.b16 %v1632, %v1626
        %v1957 = vpack.c.b16 %v1633, %v1627
        %v1958 = vpack.c.b16 %v1634, %v1628
        %v1959 = vpack.c.b16 %v1635, %v1629
        %v1960 = vpack.c.b16 %v1636, %v1630
        %v1961 = vpack.c.b16 %v1637, %v1631
        %v1962 = vpack.c.b16 %v1644, %v1638
        %v1963 = vpack.c.b16 %v1645, %v1639
        %v1964 = vpack.c.b16 %v1646, %v1640
        %v1965 = vpack.c.b16 %v1647, %v1641
        %v1966 = vpack.c.b16 %v1648, %v1642
        %v1967 = vpack.c.b16 %v1649, %v1643
        %v1968 = vpack.c.b16 %v1656, %v1650
        %v1969 = vpack.c.b16 %v1657, %v1651
        %v1970 = vpack.c.b16 %v1658, %v1652
        %v1971 = vpack.c.b16 %v1659, %v1653
        %v1972 = vpack.c.b16 %v1660, %v1654
        %v1973 = vpack.c.b16 %v1661, %v1655
        %v1974 = vpack.c.b16 %v1668, %v1662
        %v1975 = vpack.c.b16 %v1669, %v1663
        %v1976 = vpack.c.b16 %v1670, %v1664
        %v1977 = vpack.c.b16 %v1671, %v1665
        %v1978 = vpack.c.b16 %v1672, %v1666
        %v1979 = vpack.c.b16 %v1673, %v1667
        %v1980 = vpack.c.b16 %v1680, %v1674
        %v1981 = vpack.c.b16 %v1681, %v1675
        %v1982 = vpack.c.b16 %v1682, %v1676
        %v1983 = vpack.c.b16 %v1683, %v1677
        %v1984 = vpack.c.b16 %v1684, %v1678
        %v1985 = vpack.c.b16 %v1685, %v1679
        %v1986 = vpack.c.b16 %v1692, %v1686
        %v1987 = vpack.c.b16 %v1693, %v1687
        %v1988 = vpack.c.b16 %v1694, %v1688
        %v1989 = vpack.c.b16 %v1695, %v1689
        %v1990 = vpack.c.b16 %v1696, %v1690
        %v1991 = vpack.c.b16 %v1697, %v1691
        %v1992 = vpack.c.b16 %v1704, %v1698
        %v1993 = vpack.c.b16 %v1705, %v1699
        %v1994 = vpack.c.b16 %v1706, %v1700
        %v1995 = vpack.c.b16 %v1707, %v1701
        %v1996 = vpack.c.b16 %v1708, %v1702
        %v1997 = vpack.c.b16 %v1709, %v1703
        %2286 = vmatpush.bf16.msra.mxu0 %v1752
        %2287 = vmatpush.bf16.msra.mxu0 %v1746
        %2288 = vmatpush.bf16.msra.mxu0 %v1740
        %2289 = vmatpush.bf16.msra.mxu0 %v1734
        %2290 = vmatpush.bf16.msra.mxu0 %v1728
        %2291 = vmatpush.bf16.msra.mxu0 %v1722
        %2292 = vmatpush.bf16.msra.mxu0 %v1716
        %2293 = vmatpush.bf16.msra.mxu0 %v1710
        %2294 = vmatmul.bf16.gmra.mxu0 %v834
        %v2295 = vpop.f32.mrf.mxu0
        %v2296 = vadd.f32 0.0, %v2295
        %v2297 = vpop.f32.mrf.mxu0
        %v2298 = vadd.f32 0.0, %v2297
        %2299 = vdwg.mxu0
        %2300 = vmatpush.bf16.msra.mxu0 %v1800
        %2301 = vmatpush.bf16.msra.mxu0 %v1794
        %2302 = vmatpush.bf16.msra.mxu0 %v1788
        %2303 = vmatpush.bf16.msra.mxu0 %v1782
        %2304 = vmatpush.bf16.msra.mxu0 %v1776
        %2305 = vmatpush.bf16.msra.mxu0 %v1770
        %2306 = vmatpush.bf16.msra.mxu0 %v1764
        %2307 = vmatpush.bf16.msra.mxu0 %v1758
        %2308 = vmatmul.bf16.gmra.mxu0 %v835
        %v2309 = vpop.f32.mrf.mxu0
        %v2310 = vadd.f32 %v2296, %v2309
        %v2311 = vpop.f32.mrf.mxu0
        %v2312 = vadd.f32 %v2298, %v2311
        %2313 = vdwg.mxu0
        %2314 = vmatpush.bf16.msra.mxu0 %v1848
        %2315 = vmatpush.bf16.msra.mxu0 %v1842
        %2316 = vmatpush.bf16.msra.mxu0 %v1836
        %2317 = vmatpush.bf16.msra.mxu0 %v1830
        %2318 = vmatpush.bf16.msra.mxu0 %v1824
        %2319 = vmatpush.bf16.msra.mxu0 %v1818
        %2320 = vmatpush.bf16.msra.mxu0 %v1812
        %2321 = vmatpush.bf16.msra.mxu0 %v1806
        %2322 = vmatmul.bf16.gmra.mxu0 %v836
        %v2323 = vpop.f32.mrf.mxu0
        %v2324 = vadd.f32 %v2310, %v2323
        %v2325 = vpop.f32.mrf.mxu0
        %v2326 = vadd.f32 %v2312, %v2325
        %2327 = vdwg.mxu0
        %2328 = vmatpush.bf16.msra.mxu0 %v1896
        %2329 = vmatpush.bf16.msra.mxu0 %v1890
        %2330 = vmatpush.bf16.msra.mxu0 %v1884
        %2331 = vmatpush.bf16.msra.mxu0 %v1878
        %2332 = vmatpush.bf16.msra.mxu0 %v1872
        %2333 = vmatpush.bf16.msra.mxu0 %v1866
        %2334 = vmatpush.bf16.msra.mxu0 %v1860
        %2335 = vmatpush.bf16.msra.mxu0 %v1854
        %2336 = vmatmul.bf16.gmra.mxu0 %v837
        %v2337 = vpop.f32.mrf.mxu0
        %v2338 = vadd.f32 %v2324, %v2337
        %v2339 = vpop.f32.mrf.mxu0
        %v2340 = vadd.f32 %v2326, %v2339
        %2341 = vdwg.mxu0
        %2342 = vmatpush.bf16.msra.mxu0 %v1944
        %2343 = vmatpush.bf16.msra.mxu0 %v1938
        %2344 = vmatpush.bf16.msra.mxu0 %v1932
        %2345 = vmatpush.bf16.msra.mxu0 %v1926
        %2346 = vmatpush.bf16.msra.mxu0 %v1920
        %2347 = vmatpush.bf16.msra.mxu0 %v1914
        %2348 = vmatpush.bf16.msra.mxu0 %v1908
        %2349 = vmatpush.bf16.msra.mxu0 %v1902
        %2350 = vmatmul.bf16.gmra.mxu0 %v838
        %v2351 = vpop.f32.mrf.mxu0
        %v2352 = vadd.f32 %v2338, %v2351
        %v2353 = vpop.f32.mrf.mxu0
        %v2354 = vadd.f32 %v2340, %v2353
        %2355 = vdwg.mxu0
        %2356 = vmatpush.bf16.msra.mxu0 %v1992
        %2357 = vmatpush.bf16.msra.mxu0 %v1986
        %2358 = vmatpush.bf16.msra.mxu0 %v1980
        %2359 = vmatpush.bf16.msra.mxu0 %v1974
        %2360 = vmatpush.bf16.msra.mxu0 %v1968
        %2361 = vmatpush.bf16.msra.mxu0 %v1962
        %2362 = vmatpush.bf16.msra.mxu0 %v1956
        %2363 = vmatpush.bf16.msra.mxu0 %v1950
        %2364 = vmatmul.bf16.gmra.mxu0 %v839
        %v2365 = vpop.f32.mrf.mxu0
        %v2366 = vadd.f32 %v2352, %v2365
        %v2367 = vpop.f32.mrf.mxu0
        %v2368 = vadd.f32 %v2354, %v2367
        %2369 = vdwg.mxu0
        %2370 = vmatpush.bf16.msra.mxu0 %v1753
        %2371 = vmatpush.bf16.msra.mxu0 %v1747
        %2372 = vmatpush.bf16.msra.mxu0 %v1741
        %2373 = vmatpush.bf16.msra.mxu0 %v1735
        %2374 = vmatpush.bf16.msra.mxu0 %v1729
        %2375 = vmatpush.bf16.msra.mxu0 %v1723
        %2376 = vmatpush.bf16.msra.mxu0 %v1717
        %2377 = vmatpush.bf16.msra.mxu0 %v1711
        %2378 = vmatmul.bf16.gmra.mxu0 %v834
        %v2379 = vpop.f32.mrf.mxu0
        %v2380 = vadd.f32 0.0, %v2379
        %v2381 = vpop.f32.mrf.mxu0
        %v2382 = vadd.f32 0.0, %v2381
        %2383 = vdwg.mxu0
        %2384 = vmatpush.bf16.msra.mxu0 %v1801
        %2385 = vmatpush.bf16.msra.mxu0 %v1795
        %2386 = vmatpush.bf16.msra.mxu0 %v1789
        %2387 = vmatpush.bf16.msra.mxu0 %v1783
        %2388 = vmatpush.bf16.msra.mxu0 %v1777
        %2389 = vmatpush.bf16.msra.mxu0 %v1771
        %2390 = vmatpush.bf16.msra.mxu0 %v1765
        %2391 = vmatpush.bf16.msra.mxu0 %v1759
        %2392 = vmatmul.bf16.gmra.mxu0 %v835
        %v2393 = vpop.f32.mrf.mxu0
        %v2394 = vadd.f32 %v2380, %v2393
        %v2395 = vpop.f32.mrf.mxu0
        %v2396 = vadd.f32 %v2382, %v2395
        %2397 = vdwg.mxu0
        %2398 = vmatpush.bf16.msra.mxu0 %v1849
        %2399 = vmatpush.bf16.msra.mxu0 %v1843
        %2400 = vmatpush.bf16.msra.mxu0 %v1837
        %2401 = vmatpush.bf16.msra.mxu0 %v1831
        %2402 = vmatpush.bf16.msra.mxu0 %v1825
        %2403 = vmatpush.bf16.msra.mxu0 %v1819
        %2404 = vmatpush.bf16.msra.mxu0 %v1813
        %2405 = vmatpush.bf16.msra.mxu0 %v1807
        %2406 = vmatmul.bf16.gmra.mxu0 %v836
        %v2407 = vpop.f32.mrf.mxu0
        %v2408 = vadd.f32 %v2394, %v2407
        %v2409 = vpop.f32.mrf.mxu0
        %v2410 = vadd.f32 %v2396, %v2409
        %2411 = vdwg.mxu0
        %2412 = vmatpush.bf16.msra.mxu0 %v1897
        %2413 = vmatpush.bf16.msra.mxu0 %v1891
        %2414 = vmatpush.bf16.msra.mxu0 %v1885
        %2415 = vmatpush.bf16.msra.mxu0 %v1879
        %2416 = vmatpush.bf16.msra.mxu0 %v1873
        %2417 = vmatpush.bf16.msra.mxu0 %v1867
        %2418 = vmatpush.bf16.msra.mxu0 %v1861
        %2419 = vmatpush.bf16.msra.mxu0 %v1855
        %2420 = vmatmul.bf16.gmra.mxu0 %v837
        %v2421 = vpop.f32.mrf.mxu0
        %v2422 = vadd.f32 %v2408, %v2421
        %v2423 = vpop.f32.mrf.mxu0
        %v2424 = vadd.f32 %v2410, %v2423
        %2425 = vdwg.mxu0
        %2426 = vmatpush.bf16.msra.mxu0 %v1945
        %2427 = vmatpush.bf16.msra.mxu0 %v1939
        %2428 = vmatpush.bf16.msra.mxu0 %v1933
        %2429 = vmatpush.bf16.msra.mxu0 %v1927
        %2430 = vmatpush.bf16.msra.mxu0 %v1921
        %2431 = vmatpush.bf16.msra.mxu0 %v1915
        %2432 = vmatpush.bf16.msra.mxu0 %v1909
        %2433 = vmatpush.bf16.msra.mxu0 %v1903
        %2434 = vmatmul.bf16.gmra.mxu0 %v838
        %v2435 = vpop.f32.mrf.mxu0
        %v2436 = vadd.f32 %v2422, %v2435
        %v2437 = vpop.f32.mrf.mxu0
        %v2438 = vadd.f32 %v2424, %v2437
        %2439 = vdwg.mxu0
        %2440 = vmatpush.bf16.msra.mxu0 %v1993
        %2441 = vmatpush.bf16.msra.mxu0 %v1987
        %2442 = vmatpush.bf16.msra.mxu0 %v1981
        %2443 = vmatpush.bf16.msra.mxu0 %v1975
        %2444 = vmatpush.bf16.msra.mxu0 %v1969
        %2445 = vmatpush.bf16.msra.mxu0 %v1963
        %2446 = vmatpush.bf16.msra.mxu0 %v1957
        %2447 = vmatpush.bf16.msra.mxu0 %v1951
        %2448 = vmatmul.bf16.gmra.mxu0 %v839
        %v2449 = vpop.f32.mrf.mxu0
        %v2450 = vadd.f32 %v2436, %v2449
        %v2451 = vpop.f32.mrf.mxu0
        %v2452 = vadd.f32 %v2438, %v2451
        %2453 = vdwg.mxu0
        %2454 = vmatpush.bf16.msra.mxu0 %v1754
        %2455 = vmatpush.bf16.msra.mxu0 %v1748
        %2456 = vmatpush.bf16.msra.mxu0 %v1742
        %2457 = vmatpush.bf16.msra.mxu0 %v1736
        %2458 = vmatpush.bf16.msra.mxu0 %v1730
        %2459 = vmatpush.bf16.msra.mxu0 %v1724
        %2460 = vmatpush.bf16.msra.mxu0 %v1718
        %2461 = vmatpush.bf16.msra.mxu0 %v1712
        %2462 = vmatmul.bf16.gmra.mxu0 %v834
        %v2463 = vpop.f32.mrf.mxu0
        %v2464 = vadd.f32 0.0, %v2463
        %v2465 = vpop.f32.mrf.mxu0
        %v2466 = vadd.f32 0.0, %v2465
        %2467 = vdwg.mxu0
        %2468 = vmatpush.bf16.msra.mxu0 %v1802
        %2469 = vmatpush.bf16.msra.mxu0 %v1796
        %2470 = vmatpush.bf16.msra.mxu0 %v1790
        %2471 = vmatpush.bf16.msra.mxu0 %v1784
        %2472 = vmatpush.bf16.msra.mxu0 %v1778
        %2473 = vmatpush.bf16.msra.mxu0 %v1772
        %2474 = vmatpush.bf16.msra.mxu0 %v1766
        %2475 = vmatpush.bf16.msra.mxu0 %v1760
        %2476 = vmatmul.bf16.gmra.mxu0 %v835
        %v2477 = vpop.f32.mrf.mxu0
        %v2478 = vadd.f32 %v2464, %v2477
        %v2479 = vpop.f32.mrf.mxu0
        %v2480 = vadd.f32 %v2466, %v2479
        %2481 = vdwg.mxu0
        %2482 = vmatpush.bf16.msra.mxu0 %v1850
        %2483 = vmatpush.bf16.msra.mxu0 %v1844
        %2484 = vmatpush.bf16.msra.mxu0 %v1838
        %2485 = vmatpush.bf16.msra.mxu0 %v1832
        %2486 = vmatpush.bf16.msra.mxu0 %v1826
        %2487 = vmatpush.bf16.msra.mxu0 %v1820
        %2488 = vmatpush.bf16.msra.mxu0 %v1814
        %2489 = vmatpush.bf16.msra.mxu0 %v1808
        %2490 = vmatmul.bf16.gmra.mxu0 %v836
        %v2491 = vpop.f32.mrf.mxu0
        %v2492 = vadd.f32 %v2478, %v2491
        %v2493 = vpop.f32.mrf.mxu0
        %v2494 = vadd.f32 %v2480, %v2493
        %2495 = vdwg.mxu0
        %2496 = vmatpush.bf16.msra.mxu0 %v1898
        %2497 = vmatpush.bf16.msra.mxu0 %v1892
        %2498 = vmatpush.bf16.msra.mxu0 %v1886
        %2499 = vmatpush.bf16.msra.mxu0 %v1880
        %2500 = vmatpush.bf16.msra.mxu0 %v1874
        %2501 = vmatpush.bf16.msra.mxu0 %v1868
        %2502 = vmatpush.bf16.msra.mxu0 %v1862
        %2503 = vmatpush.bf16.msra.mxu0 %v1856
        %2504 = vmatmul.bf16.gmra.mxu0 %v837
        %v2505 = vpop.f32.mrf.mxu0
        %v2506 = vadd.f32 %v2492, %v2505
        %v2507 = vpop.f32.mrf.mxu0
        %v2508 = vadd.f32 %v2494, %v2507
        %2509 = vdwg.mxu0
        %2510 = vmatpush.bf16.msra.mxu0 %v1946
        %2511 = vmatpush.bf16.msra.mxu0 %v1940
        %2512 = vmatpush.bf16.msra.mxu0 %v1934
        %2513 = vmatpush.bf16.msra.mxu0 %v1928
        %2514 = vmatpush.bf16.msra.mxu0 %v1922
        %2515 = vmatpush.bf16.msra.mxu0 %v1916
        %2516 = vmatpush.bf16.msra.mxu0 %v1910
        %2517 = vmatpush.bf16.msra.mxu0 %v1904
        %2518 = vmatmul.bf16.gmra.mxu0 %v838
        %v2519 = vpop.f32.mrf.mxu0
        %v2520 = vadd.f32 %v2506, %v2519
        %v2521 = vpop.f32.mrf.mxu0
        %v2522 = vadd.f32 %v2508, %v2521
        %2523 = vdwg.mxu0
        %2524 = vmatpush.bf16.msra.mxu0 %v1994
        %2525 = vmatpush.bf16.msra.mxu0 %v1988
        %2526 = vmatpush.bf16.msra.mxu0 %v1982
        %2527 = vmatpush.bf16.msra.mxu0 %v1976
        %2528 = vmatpush.bf16.msra.mxu0 %v1970
        %2529 = vmatpush.bf16.msra.mxu0 %v1964
        %2530 = vmatpush.bf16.msra.mxu0 %v1958
        %2531 = vmatpush.bf16.msra.mxu0 %v1952
        %2532 = vmatmul.bf16.gmra.mxu0 %v839
        %v2533 = vpop.f32.mrf.mxu0
        %v2534 = vadd.f32 %v2520, %v2533
        %v2535 = vpop.f32.mrf.mxu0
        %v2536 = vadd.f32 %v2522, %v2535
        %2537 = vdwg.mxu0
        %2538 = vmatpush.bf16.msra.mxu0 %v1755
        %2539 = vmatpush.bf16.msra.mxu0 %v1749
        %2540 = vmatpush.bf16.msra.mxu0 %v1743
        %2541 = vmatpush.bf16.msra.mxu0 %v1737
        %2542 = vmatpush.bf16.msra.mxu0 %v1731
        %2543 = vmatpush.bf16.msra.mxu0 %v1725
        %2544 = vmatpush.bf16.msra.mxu0 %v1719
        %2545 = vmatpush.bf16.msra.mxu0 %v1713
        %2546 = vmatmul.bf16.gmra.mxu0 %v834
        %v2547 = vpop.f32.mrf.mxu0
        %v2548 = vadd.f32 0.0, %v2547
        %v2549 = vpop.f32.mrf.mxu0
        %v2550 = vadd.f32 0.0, %v2549
        %2551 = vdwg.mxu0
        %2552 = vmatpush.bf16.msra.mxu0 %v1803
        %2553 = vmatpush.bf16.msra.mxu0 %v1797
        %2554 = vmatpush.bf16.msra.mxu0 %v1791
        %2555 = vmatpush.bf16.msra.mxu0 %v1785
        %2556 = vmatpush.bf16.msra.mxu0 %v1779
        %2557 = vmatpush.bf16.msra.mxu0 %v1773
        %2558 = vmatpush.bf16.msra.mxu0 %v1767
        %2559 = vmatpush.bf16.msra.mxu0 %v1761
        %2560 = vmatmul.bf16.gmra.mxu0 %v835
        %v2561 = vpop.f32.mrf.mxu0
        %v2562 = vadd.f32 %v2548, %v2561
        %v2563 = vpop.f32.mrf.mxu0
        %v2564 = vadd.f32 %v2550, %v2563
        %2565 = vdwg.mxu0
        %2566 = vmatpush.bf16.msra.mxu0 %v1851
        %2567 = vmatpush.bf16.msra.mxu0 %v1845
        %2568 = vmatpush.bf16.msra.mxu0 %v1839
        %2569 = vmatpush.bf16.msra.mxu0 %v1833
        %2570 = vmatpush.bf16.msra.mxu0 %v1827
        %2571 = vmatpush.bf16.msra.mxu0 %v1821
        %2572 = vmatpush.bf16.msra.mxu0 %v1815
        %2573 = vmatpush.bf16.msra.mxu0 %v1809
        %2574 = vmatmul.bf16.gmra.mxu0 %v836
        %v2575 = vpop.f32.mrf.mxu0
        %v2576 = vadd.f32 %v2562, %v2575
        %v2577 = vpop.f32.mrf.mxu0
        %v2578 = vadd.f32 %v2564, %v2577
        %2579 = vdwg.mxu0
        %2580 = vmatpush.bf16.msra.mxu0 %v1899
        %2581 = vmatpush.bf16.msra.mxu0 %v1893
        %2582 = vmatpush.bf16.msra.mxu0 %v1887
        %2583 = vmatpush.bf16.msra.mxu0 %v1881
        %2584 = vmatpush.bf16.msra.mxu0 %v1875
        %2585 = vmatpush.bf16.msra.mxu0 %v1869
        %2586 = vmatpush.bf16.msra.mxu0 %v1863
        %2587 = vmatpush.bf16.msra.mxu0 %v1857
        %2588 = vmatmul.bf16.gmra.mxu0 %v837
        %v2589 = vpop.f32.mrf.mxu0
        %v2590 = vadd.f32 %v2576, %v2589
        %v2591 = vpop.f32.mrf.mxu0
        %v2592 = vadd.f32 %v2578, %v2591
        %2593 = vdwg.mxu0
        %2594 = vmatpush.bf16.msra.mxu0 %v1947
        %2595 = vmatpush.bf16.msra.mxu0 %v1941
        %2596 = vmatpush.bf16.msra.mxu0 %v1935
        %2597 = vmatpush.bf16.msra.mxu0 %v1929
        %2598 = vmatpush.bf16.msra.mxu0 %v1923
        %2599 = vmatpush.bf16.msra.mxu0 %v1917
        %2600 = vmatpush.bf16.msra.mxu0 %v1911
        %2601 = vmatpush.bf16.msra.mxu0 %v1905
        %2602 = vmatmul.bf16.gmra.mxu0 %v838
        %v2603 = vpop.f32.mrf.mxu0
        %v2604 = vadd.f32 %v2590, %v2603
        %v2605 = vpop.f32.mrf.mxu0
        %v2606 = vadd.f32 %v2592, %v2605
        %2607 = vdwg.mxu0
        %2608 = vmatpush.bf16.msra.mxu0 %v1995
        %2609 = vmatpush.bf16.msra.mxu0 %v1989
        %2610 = vmatpush.bf16.msra.mxu0 %v1983
        %2611 = vmatpush.bf16.msra.mxu0 %v1977
        %2612 = vmatpush.bf16.msra.mxu0 %v1971
        %2613 = vmatpush.bf16.msra.mxu0 %v1965
        %2614 = vmatpush.bf16.msra.mxu0 %v1959
        %2615 = vmatpush.bf16.msra.mxu0 %v1953
        %2616 = vmatmul.bf16.gmra.mxu0 %v839
        %v2617 = vpop.f32.mrf.mxu0
        %v2618 = vadd.f32 %v2604, %v2617
        %v2619 = vpop.f32.mrf.mxu0
        %v2620 = vadd.f32 %v2606, %v2619
        %2621 = vdwg.mxu0
        %2622 = vmatpush.bf16.msra.mxu0 %v1756
        %2623 = vmatpush.bf16.msra.mxu0 %v1750
        %2624 = vmatpush.bf16.msra.mxu0 %v1744
        %2625 = vmatpush.bf16.msra.mxu0 %v1738
        %2626 = vmatpush.bf16.msra.mxu0 %v1732
        %2627 = vmatpush.bf16.msra.mxu0 %v1726
        %2628 = vmatpush.bf16.msra.mxu0 %v1720
        %2629 = vmatpush.bf16.msra.mxu0 %v1714
        %2630 = vmatmul.bf16.gmra.mxu0 %v834
        %v2631 = vpop.f32.mrf.mxu0
        %v2632 = vadd.f32 0.0, %v2631
        %v2633 = vpop.f32.mrf.mxu0
        %v2634 = vadd.f32 0.0, %v2633
        %2635 = vdwg.mxu0
        %2636 = vmatpush.bf16.msra.mxu0 %v1804
        %2637 = vmatpush.bf16.msra.mxu0 %v1798
        %2638 = vmatpush.bf16.msra.mxu0 %v1792
        %2639 = vmatpush.bf16.msra.mxu0 %v1786
        %2640 = vmatpush.bf16.msra.mxu0 %v1780
        %2641 = vmatpush.bf16.msra.mxu0 %v1774
        %2642 = vmatpush.bf16.msra.mxu0 %v1768
        %2643 = vmatpush.bf16.msra.mxu0 %v1762
        %2644 = vmatmul.bf16.gmra.mxu0 %v835
        %v2645 = vpop.f32.mrf.mxu0
        %v2646 = vadd.f32 %v2632, %v2645
        %v2647 = vpop.f32.mrf.mxu0
        %v2648 = vadd.f32 %v2634, %v2647
        %2649 = vdwg.mxu0
        %2650 = vmatpush.bf16.msra.mxu0 %v1852
        %2651 = vmatpush.bf16.msra.mxu0 %v1846
        %2652 = vmatpush.bf16.msra.mxu0 %v1840
        %2653 = vmatpush.bf16.msra.mxu0 %v1834
        %2654 = vmatpush.bf16.msra.mxu0 %v1828
        %2655 = vmatpush.bf16.msra.mxu0 %v1822
        %2656 = vmatpush.bf16.msra.mxu0 %v1816
        %2657 = vmatpush.bf16.msra.mxu0 %v1810
        %2658 = vmatmul.bf16.gmra.mxu0 %v836
        %v2659 = vpop.f32.mrf.mxu0
        %v2660 = vadd.f32 %v2646, %v2659
        %v2661 = vpop.f32.mrf.mxu0
        %v2662 = vadd.f32 %v2648, %v2661
        %2663 = vdwg.mxu0
        %2664 = vmatpush.bf16.msra.mxu0 %v1900
        %2665 = vmatpush.bf16.msra.mxu0 %v1894
        %2666 = vmatpush.bf16.msra.mxu0 %v1888
        %2667 = vmatpush.bf16.msra.mxu0 %v1882
        %2668 = vmatpush.bf16.msra.mxu0 %v1876
        %2669 = vmatpush.bf16.msra.mxu0 %v1870
        %2670 = vmatpush.bf16.msra.mxu0 %v1864
        %2671 = vmatpush.bf16.msra.mxu0 %v1858
        %2672 = vmatmul.bf16.gmra.mxu0 %v837
        %v2673 = vpop.f32.mrf.mxu0
        %v2674 = vadd.f32 %v2660, %v2673
        %v2675 = vpop.f32.mrf.mxu0
        %v2676 = vadd.f32 %v2662, %v2675
        %2677 = vdwg.mxu0
        %2678 = vmatpush.bf16.msra.mxu0 %v1948
        %2679 = vmatpush.bf16.msra.mxu0 %v1942
        %2680 = vmatpush.bf16.msra.mxu0 %v1936
        %2681 = vmatpush.bf16.msra.mxu0 %v1930
        %2682 = vmatpush.bf16.msra.mxu0 %v1924
        %2683 = vmatpush.bf16.msra.mxu0 %v1918
        %2684 = vmatpush.bf16.msra.mxu0 %v1912
        %2685 = vmatpush.bf16.msra.mxu0 %v1906
        %2686 = vmatmul.bf16.gmra.mxu0 %v838
        %v2687 = vpop.f32.mrf.mxu0
        %v2688 = vadd.f32 %v2674, %v2687
        %v2689 = vpop.f32.mrf.mxu0
        %v2690 = vadd.f32 %v2676, %v2689
        %2691 = vdwg.mxu0
        %2692 = vmatpush.bf16.msra.mxu0 %v1996
        %2693 = vmatpush.bf16.msra.mxu0 %v1990
        %2694 = vmatpush.bf16.msra.mxu0 %v1984
        %2695 = vmatpush.bf16.msra.mxu0 %v1978
        %2696 = vmatpush.bf16.msra.mxu0 %v1972
        %2697 = vmatpush.bf16.msra.mxu0 %v1966
        %2698 = vmatpush.bf16.msra.mxu0 %v1960
        %2699 = vmatpush.bf16.msra.mxu0 %v1954
        %2700 = vmatmul.bf16.gmra.mxu0 %v839
        %v2701 = vpop.f32.mrf.mxu0
        %v2702 = vadd.f32 %v2688, %v2701
        %v2703 = vpop.f32.mrf.mxu0
        %v2704 = vadd.f32 %v2690, %v2703
        %2705 = vdwg.mxu0
        %2706 = vmatpush.bf16.msra.mxu0 %v1757
        %2707 = vmatpush.bf16.msra.mxu0 %v1751
        %2708 = vmatpush.bf16.msra.mxu0 %v1745
        %2709 = vmatpush.bf16.msra.mxu0 %v1739
        %2710 = vmatpush.bf16.msra.mxu0 %v1733
        %2711 = vmatpush.bf16.msra.mxu0 %v1727
        %2712 = vmatpush.bf16.msra.mxu0 %v1721
        %2713 = vmatpush.bf16.msra.mxu0 %v1715
        %2714 = vmatmul.bf16.gmra.mxu0 %v834
        %v2715 = vpop.f32.mrf.mxu0
        %v2716 = vadd.f32 0.0, %v2715
        %v2717 = vpop.f32.mrf.mxu0
        %v2718 = vadd.f32 0.0, %v2717
        %2719 = vdwg.mxu0
        %2720 = vmatpush.bf16.msra.mxu0 %v1805
        %2721 = vmatpush.bf16.msra.mxu0 %v1799
        %2722 = vmatpush.bf16.msra.mxu0 %v1793
        %2723 = vmatpush.bf16.msra.mxu0 %v1787
        %2724 = vmatpush.bf16.msra.mxu0 %v1781
        %2725 = vmatpush.bf16.msra.mxu0 %v1775
        %2726 = vmatpush.bf16.msra.mxu0 %v1769
        %2727 = vmatpush.bf16.msra.mxu0 %v1763
        %2728 = vmatmul.bf16.gmra.mxu0 %v835
        %v2729 = vpop.f32.mrf.mxu0
        %v2730 = vadd.f32 %v2716, %v2729
        %v2731 = vpop.f32.mrf.mxu0
        %v2732 = vadd.f32 %v2718, %v2731
        %2733 = vdwg.mxu0
        %2734 = vmatpush.bf16.msra.mxu0 %v1853
        %2735 = vmatpush.bf16.msra.mxu0 %v1847
        %2736 = vmatpush.bf16.msra.mxu0 %v1841
        %2737 = vmatpush.bf16.msra.mxu0 %v1835
        %2738 = vmatpush.bf16.msra.mxu0 %v1829
        %2739 = vmatpush.bf16.msra.mxu0 %v1823
        %2740 = vmatpush.bf16.msra.mxu0 %v1817
        %2741 = vmatpush.bf16.msra.mxu0 %v1811
        %2742 = vmatmul.bf16.gmra.mxu0 %v836
        %v2743 = vpop.f32.mrf.mxu0
        %v2744 = vadd.f32 %v2730, %v2743
        %v2745 = vpop.f32.mrf.mxu0
        %v2746 = vadd.f32 %v2732, %v2745
        %2747 = vdwg.mxu0
        %2748 = vmatpush.bf16.msra.mxu0 %v1901
        %2749 = vmatpush.bf16.msra.mxu0 %v1895
        %2750 = vmatpush.bf16.msra.mxu0 %v1889
        %2751 = vmatpush.bf16.msra.mxu0 %v1883
        %2752 = vmatpush.bf16.msra.mxu0 %v1877
        %2753 = vmatpush.bf16.msra.mxu0 %v1871
        %2754 = vmatpush.bf16.msra.mxu0 %v1865
        %2755 = vmatpush.bf16.msra.mxu0 %v1859
        %2756 = vmatmul.bf16.gmra.mxu0 %v837
        %v2757 = vpop.f32.mrf.mxu0
        %v2758 = vadd.f32 %v2744, %v2757
        %v2759 = vpop.f32.mrf.mxu0
        %v2760 = vadd.f32 %v2746, %v2759
        %2761 = vdwg.mxu0
        %2762 = vmatpush.bf16.msra.mxu0 %v1949
        %2763 = vmatpush.bf16.msra.mxu0 %v1943
        %2764 = vmatpush.bf16.msra.mxu0 %v1937
        %2765 = vmatpush.bf16.msra.mxu0 %v1931
        %2766 = vmatpush.bf16.msra.mxu0 %v1925
        %2767 = vmatpush.bf16.msra.mxu0 %v1919
        %2768 = vmatpush.bf16.msra.mxu0 %v1913
        %2769 = vmatpush.bf16.msra.mxu0 %v1907
        %2770 = vmatmul.bf16.gmra.mxu0 %v838
        %v2771 = vpop.f32.mrf.mxu0
        %v2772 = vadd.f32 %v2758, %v2771
        %v2773 = vpop.f32.mrf.mxu0
        %v2774 = vadd.f32 %v2760, %v2773
        %2775 = vdwg.mxu0
        %2776 = vmatpush.bf16.msra.mxu0 %v1997
        %2777 = vmatpush.bf16.msra.mxu0 %v1991
        %2778 = vmatpush.bf16.msra.mxu0 %v1985
        %2779 = vmatpush.bf16.msra.mxu0 %v1979
        %2780 = vmatpush.bf16.msra.mxu0 %v1973
        %2781 = vmatpush.bf16.msra.mxu0 %v1967
        %2782 = vmatpush.bf16.msra.mxu0 %v1961
        %2783 = vmatpush.bf16.msra.mxu0 %v1955
        %2784 = vmatmul.bf16.gmra.mxu0 %v839
        %v2785 = vpop.f32.mrf.mxu0
        %v2786 = vadd.f32 %v2772, %v2785
        %v2787 = vpop.f32.mrf.mxu0
        %v2788 = vadd.f32 %v2774, %v2787
        %2789 = vdwg.mxu0
        %v2790 = vadd.f32 %v2366, %v2368
        %v2791 = vrot.slane %v2790, 4
        %v2792 = vadd.f32 %v2790, %v2791
        %v2793 = vrot.slane %v2792, 2
        %v2794 = vadd.f32 %v2792, %v2793
        %v2795 = vrot.slane %v2794, 1
        %v2796 = vadd.f32 %v2794, %v2795
        %v2797 = vadd.f32 %v2450, %v2452
        %v2798 = vrot.slane %v2797, 4
        %v2799 = vadd.f32 %v2797, %v2798
        %v2800 = vrot.slane %v2799, 2
        %v2801 = vadd.f32 %v2799, %v2800
        %v2802 = vrot.slane %v2801, 1
        %v2803 = vadd.f32 %v2801, %v2802
        %v2804 = vadd.f32 %v2534, %v2536
        %v2805 = vrot.slane %v2804, 4
        %v2806 = vadd.f32 %v2804, %v2805
        %v2807 = vrot.slane %v2806, 2
        %v2808 = vadd.f32 %v2806, %v2807
        %v2809 = vrot.slane %v2808, 1
        %v2810 = vadd.f32 %v2808, %v2809
        %v2811 = vadd.f32 %v2618, %v2620
        %v2812 = vrot.slane %v2811, 4
        %v2813 = vadd.f32 %v2811, %v2812
        %v2814 = vrot.slane %v2813, 2
        %v2815 = vadd.f32 %v2813, %v2814
        %v2816 = vrot.slane %v2815, 1
        %v2817 = vadd.f32 %v2815, %v2816
        %v2818 = vadd.f32 %v2702, %v2704
        %v2819 = vrot.slane %v2818, 4
        %v2820 = vadd.f32 %v2818, %v2819
        %v2821 = vrot.slane %v2820, 2
        %v2822 = vadd.f32 %v2820, %v2821
        %v2823 = vrot.slane %v2822, 1
        %v2824 = vadd.f32 %v2822, %v2823
        %v2825 = vadd.f32 %v2786, %v2788
        %v2826 = vrot.slane %v2825, 4
        %v2827 = vadd.f32 %v2825, %v2826
        %v2828 = vrot.slane %v2827, 2
        %v2829 = vadd.f32 %v2827, %v2828
        %v2830 = vrot.slane %v2829, 1
        %v2831 = vadd.f32 %v2829, %v2830
        %v2832 = vmul.f32 %v2366, %v2366
        %v2833 = vmul.f32 %v2450, %v2450
        %v2834 = vmul.f32 %v2534, %v2534
        %v2835 = vmul.f32 %v2618, %v2618
        %v2836 = vmul.f32 %v2702, %v2702
        %v2837 = vmul.f32 %v2786, %v2786
        %v2838 = vmul.f32 %v2368, %v2368
        %v2839 = vmul.f32 %v2452, %v2452
        %v2840 = vmul.f32 %v2536, %v2536
        %v2841 = vmul.f32 %v2620, %v2620
        %v2842 = vmul.f32 %v2704, %v2704
        %v2843 = vmul.f32 %v2788, %v2788
        %v2844 = vadd.f32 %v2832, %v2838
        %v2845 = vrot.slane %v2844, 4
        %v2846 = vadd.f32 %v2844, %v2845
        %v2847 = vrot.slane %v2846, 2
        %v2848 = vadd.f32 %v2846, %v2847
        %v2849 = vrot.slane %v2848, 1
        %v2850 = vadd.f32 %v2848, %v2849
        %v2851 = vadd.f32 %v2833, %v2839
        %v2852 = vrot.slane %v2851, 4
        %v2853 = vadd.f32 %v2851, %v2852
        %v2854 = vrot.slane %v2853, 2
        %v2855 = vadd.f32 %v2853, %v2854
        %v2856 = vrot.slane %v2855, 1
        %v2857 = vadd.f32 %v2855, %v2856
        %v2858 = vadd.f32 %v2834, %v2840
        %v2859 = vrot.slane %v2858, 4
        %v2860 = vadd.f32 %v2858, %v2859
        %v2861 = vrot.slane %v2860, 2
        %v2862 = vadd.f32 %v2860, %v2861
        %v2863 = vrot.slane %v2862, 1
        %v2864 = vadd.f32 %v2862, %v2863
        %v2865 = vadd.f32 %v2835, %v2841
        %v2866 = vrot.slane %v2865, 4
        %v2867 = vadd.f32 %v2865, %v2866
        %v2868 = vrot.slane %v2867, 2
        %v2869 = vadd.f32 %v2867, %v2868
        %v2870 = vrot.slane %v2869, 1
        %v2871 = vadd.f32 %v2869, %v2870
        %v2872 = vadd.f32 %v2836, %v2842
        %v2873 = vrot.slane %v2872, 4
        %v2874 = vadd.f32 %v2872, %v2873
        %v2875 = vrot.slane %v2874, 2
        %v2876 = vadd.f32 %v2874, %v2875
        %v2877 = vrot.slane %v2876, 1
        %v2878 = vadd.f32 %v2876, %v2877
        %v2879 = vadd.f32 %v2837, %v2843
        %v2880 = vrot.slane %v2879, 4
        %v2881 = vadd.f32 %v2879, %v2880
        %v2882 = vrot.slane %v2881, 2
        %v2883 = vadd.f32 %v2881, %v2882
        %v2884 = vrot.slane %v2883, 1
        %v2885 = vadd.f32 %v2883, %v2884
        %v2886 = vmul.f32 %v2796, 0.0625
        %v2887 = vmul.f32 %v2803, 0.0625
        %v2888 = vmul.f32 %v2810, 0.0625
        %v2889 = vmul.f32 %v2817, 0.0625
        %v2890 = vmul.f32 %v2824, 0.0625
        %v2891 = vmul.f32 %v2831, 0.0625
        %v2892 = vmul.f32 %v2850, 0.0625
        %v2893 = vmul.f32 %v2857, 0.0625
        %v2894 = vmul.f32 %v2864, 0.0625
        %v2895 = vmul.f32 %v2871, 0.0625
        %v2896 = vmul.f32 %v2878, 0.0625
        %v2897 = vmul.f32 %v2885, 0.0625
        %v2898 = vmul.f32 %v2886, %v2886
        %v2899 = vmul.f32 %v2887, %v2887
        %v2900 = vmul.f32 %v2888, %v2888
        %v2901 = vmul.f32 %v2889, %v2889
        %v2902 = vmul.f32 %v2890, %v2890
        %v2903 = vmul.f32 %v2891, %v2891
        %v2904 = vsub.f32 %v2892, %v2898
        %v2905 = vsub.f32 %v2893, %v2899
        %v2906 = vsub.f32 %v2894, %v2900
        %v2907 = vsub.f32 %v2895, %v2901
        %v2908 = vsub.f32 %v2896, %v2902
        %v2909 = vsub.f32 %v2897, %v2903
        %v2910 = vmax.f32 %v2904, 0.0
        %v2911 = vmax.f32 %v2905, 0.0
        %v2912 = vmax.f32 %v2906, 0.0
        %v2913 = vmax.f32 %v2907, 0.0
        %v2914 = vmax.f32 %v2908, 0.0
        %v2915 = vmax.f32 %v2909, 0.0
        %v2916 = vsub.f32 %v2366, %v2886
        %v2917 = vsub.f32 %v2450, %v2887
        %v2918 = vsub.f32 %v2534, %v2888
        %v2919 = vsub.f32 %v2618, %v2889
        %v2920 = vsub.f32 %v2702, %v2890
        %v2921 = vsub.f32 %v2786, %v2891
        %v2922 = vsub.f32 %v2368, %v2886
        %v2923 = vsub.f32 %v2452, %v2887
        %v2924 = vsub.f32 %v2536, %v2888
        %v2925 = vsub.f32 %v2620, %v2889
        %v2926 = vsub.f32 %v2704, %v2890
        %v2927 = vsub.f32 %v2788, %v2891
        %v2928 = vadd.f32 %v2910, 1e-05
        %v2929 = vadd.f32 %v2911, 1e-05
        %v2930 = vadd.f32 %v2912, 1e-05
        %v2931 = vadd.f32 %v2913, 1e-05
        %v2932 = vadd.f32 %v2914, 1e-05
        %v2933 = vadd.f32 %v2915, 1e-05
        %v2934 = vrsqrt.pop %v2928
        %v2935 = vmul.f32 %v2934, %v2928
        %v2936 = vmul.f32 %v2935, %v2934
        %v2937 = vmul.f32 0.5, %v2936
        %v2938 = vsub.f32 1.5, %v2937
        %v2939 = vmul.f32 %v2934, %v2938
        %vm2940 = vweird.f32 %v2928
        %vm2941 = vweird.f32 %v2934
        %vm2942 = vmor %vm2940, %vm2941
        %v2943 = vsel %vm2942, %v2934, %v2939
        %v2944 = vrsqrt.pop %v2929
        %v2945 = vmul.f32 %v2944, %v2929
        %v2946 = vmul.f32 %v2945, %v2944
        %v2947 = vmul.f32 0.5, %v2946
        %v2948 = vsub.f32 1.5, %v2947
        %v2949 = vmul.f32 %v2944, %v2948
        %vm2950 = vweird.f32 %v2929
        %vm2951 = vweird.f32 %v2944
        %vm2952 = vmor %vm2950, %vm2951
        %v2953 = vsel %vm2952, %v2944, %v2949
        %v2954 = vrsqrt.pop %v2930
        %v2955 = vmul.f32 %v2954, %v2930
        %v2956 = vmul.f32 %v2955, %v2954
        %v2957 = vmul.f32 0.5, %v2956
        %v2958 = vsub.f32 1.5, %v2957
        %v2959 = vmul.f32 %v2954, %v2958
        %vm2960 = vweird.f32 %v2930
        %vm2961 = vweird.f32 %v2954
        %vm2962 = vmor %vm2960, %vm2961
        %v2963 = vsel %vm2962, %v2954, %v2959
        %v2964 = vrsqrt.pop %v2931
        %v2965 = vmul.f32 %v2964, %v2931
        %v2966 = vmul.f32 %v2965, %v2964
        %v2967 = vmul.f32 0.5, %v2966
        %v2968 = vsub.f32 1.5, %v2967
        %v2969 = vmul.f32 %v2964, %v2968
        %vm2970 = vweird.f32 %v2931
        %vm2971 = vweird.f32 %v2964
        %vm2972 = vmor %vm2970, %vm2971
        %v2973 = vsel %vm2972, %v2964, %v2969
        %v2974 = vrsqrt.pop %v2932
        %v2975 = vmul.f32 %v2974, %v2932
        %v2976 = vmul.f32 %v2975, %v2974
        %v2977 = vmul.f32 0.5, %v2976
        %v2978 = vsub.f32 1.5, %v2977
        %v2979 = vmul.f32 %v2974, %v2978
        %vm2980 = vweird.f32 %v2932
        %vm2981 = vweird.f32 %v2974
        %vm2982 = vmor %vm2980, %vm2981
        %v2983 = vsel %vm2982, %v2974, %v2979
        %v2984 = vrsqrt.pop %v2933
        %v2985 = vmul.f32 %v2984, %v2933
        %v2986 = vmul.f32 %v2985, %v2984
        %v2987 = vmul.f32 0.5, %v2986
        %v2988 = vsub.f32 1.5, %v2987
        %v2989 = vmul.f32 %v2984, %v2988
        %vm2990 = vweird.f32 %v2933
        %vm2991 = vweird.f32 %v2984
        %vm2992 = vmor %vm2990, %vm2991
        %v2993 = vsel %vm2992, %v2984, %v2989
        %v2994 = vld [vmem:[%s424] sm:$0x3f]
        %v2996 = vperm.slane %v2994, 0
        %v2997 = vperm.slane %v2994, 1
        %v2998 = vperm.slane %v2994, 2
        %v2999 = vperm.slane %v2994, 3
        %v3000 = vperm.slane %v2994, 4
        %v3001 = vperm.slane %v2994, 5
        %v3008 = vmul.f32 %v2943, %v2996
        %v3009 = vmul.f32 %v2953, %v2997
        %v3010 = vmul.f32 %v2963, %v2998
        %v3011 = vmul.f32 %v2973, %v2999
        %v3012 = vmul.f32 %v2983, %v3000
        %v3013 = vmul.f32 %v2993, %v3001
        %v3014 = vperm.slane %v3008, 0
        %v3015 = vperm.slane %v3009, 0
        %v3016 = vperm.slane %v3010, 0
        %v3017 = vperm.slane %v3011, 0
        %v3018 = vperm.slane %v3012, 0
        %v3019 = vperm.slane %v3013, 0
        %v3020 = vmul.f32 %v2916, %v3014
        %v3021 = vmul.f32 %v2917, %v3015
        %v3022 = vmul.f32 %v2918, %v3016
        %v3023 = vmul.f32 %v2919, %v3017
        %v3024 = vmul.f32 %v2920, %v3018
        %v3025 = vmul.f32 %v2921, %v3019
        %v3026 = vmul.f32 %v2922, %v3014
        %v3027 = vmul.f32 %v2923, %v3015
        %v3028 = vmul.f32 %v2924, %v3016
        %v3029 = vmul.f32 %v2925, %v3017
        %v3030 = vmul.f32 %v2926, %v3018
        %v3031 = vmul.f32 %v2927, %v3019
        %v3032 = vld [vmem:[%s434] sm:$0x3f]
        %v3034 = vperm.slane %v3032, 0
        %v3035 = vperm.slane %v3032, 1
        %v3036 = vperm.slane %v3032, 2
        %v3037 = vperm.slane %v3032, 3
        %v3038 = vperm.slane %v3032, 4
        %v3039 = vperm.slane %v3032, 5
        %v3046 = vadd.f32 %v3020, %v3034
        %v3047 = vadd.f32 %v3021, %v3035
        %v3048 = vadd.f32 %v3022, %v3036
        %v3049 = vadd.f32 %v3023, %v3037
        %v3050 = vadd.f32 %v3024, %v3038
        %v3051 = vadd.f32 %v3025, %v3039
        %v3052 = vadd.f32 %v3026, %v3034
        %v3053 = vadd.f32 %v3027, %v3035
        %v3054 = vadd.f32 %v3028, %v3036
        %v3055 = vadd.f32 %v3029, %v3037
        %v3056 = vadd.f32 %v3030, %v3038
        %v3057 = vadd.f32 %v3031, %v3039
        %v3058 = vmax.f32 %v3046, 0.0
        %v3059 = vmax.f32 %v3047, 0.0
        %v3060 = vmax.f32 %v3048, 0.0
        %v3061 = vmax.f32 %v3049, 0.0
        %v3062 = vmax.f32 %v3050, 0.0
        %v3063 = vmax.f32 %v3051, 0.0
        %v3064 = vmax.f32 %v3052, 0.0
        %v3065 = vmax.f32 %v3053, 0.0
        %v3066 = vmax.f32 %v3054, 0.0
        %v3067 = vmax.f32 %v3055, 0.0
        %v3068 = vmax.f32 %v3056, 0.0
        %v3069 = vmax.f32 %v3057, 0.0
        %v3070 = vpack.c.bf16 %v3064, %v3058
        %v3071 = vpack.c.bf16 %v3065, %v3059
        %v3072 = vpack.c.bf16 %v3066, %v3060
        %v3073 = vpack.c.bf16 %v3067, %v3061
        %v3074 = vpack.c.bf16 %v3068, %v3062
        %v3075 = vpack.c.bf16 %v3069, %v3063
        %v3076 = vld [vmem:[%s444] sm:$0xf]
        %v3077 = vld [vmem:[%s444 + $0x4] sm:$0xf]
        %v3078 = vld [vmem:[%s444 + $0x8] sm:$0xf]
        %v3079 = vld [vmem:[%s444 + $0xc] sm:$0xf]
        %v3080 = vld [vmem:[%s444 + $0x10] sm:$0xf]
        %v3081 = vld [vmem:[%s444 + $0x14] sm:$0xf]
        %v3082 = vld [vmem:[%s444 + $0x18] sm:$0xf]
        %v3083 = vld [vmem:[%s444 + $0x1c] sm:$0xf]
        %v3084 = vld [vmem:[%s444 + $0x20] sm:$0xf]
        %v3085 = vld [vmem:[%s444 + $0x24] sm:$0xf]
        %v3086 = vld [vmem:[%s444 + $0x28] sm:$0xf]
        %v3087 = vld [vmem:[%s444 + $0x2c] sm:$0xf]
        %v3088 = vld [vmem:[%s444 + $0x30] sm:$0xf]
        %v3089 = vld [vmem:[%s444 + $0x34] sm:$0xf]
        %v3090 = vld [vmem:[%s444 + $0x38] sm:$0xf]
        %v3091 = vld [vmem:[%s444 + $0x3c] sm:$0xf]
        %v3092 = vld [vmem:[%s444 + $0x40] sm:$0xf]
        %v3093 = vld [vmem:[%s444 + $0x44] sm:$0xf]
        %v3094 = vld [vmem:[%s444 + $0x48] sm:$0xf]
        %v3095 = vld [vmem:[%s444 + $0x4c] sm:$0xf]
        %v3096 = vld [vmem:[%s444 + $0x50] sm:$0xf]
        %v3097 = vld [vmem:[%s444 + $0x54] sm:$0xf]
        %v3098 = vld [vmem:[%s444 + $0x58] sm:$0xf]
        %v3099 = vld [vmem:[%s444 + $0x5c] sm:$0xf]
        %v3100 = vld [vmem:[%s444 + $0x60] sm:$0xf]
        %v3101 = vld [vmem:[%s444 + $0x64] sm:$0xf]
        %v3102 = vld [vmem:[%s444 + $0x68] sm:$0xf]
        %v3103 = vld [vmem:[%s444 + $0x6c] sm:$0xf]
        %v3104 = vld [vmem:[%s444 + $0x70] sm:$0xf]
        %v3105 = vld [vmem:[%s444 + $0x74] sm:$0xf]
        %v3106 = vld [vmem:[%s444 + $0x78] sm:$0xf]
        %v3107 = vld [vmem:[%s444 + $0x7c] sm:$0xf]
        %v3108 = vld [vmem:[%s444 + $0x80] sm:$0xf]
        %v3109 = vld [vmem:[%s444 + $0x84] sm:$0xf]
        %v3110 = vld [vmem:[%s444 + $0x88] sm:$0xf]
        %v3111 = vld [vmem:[%s444 + $0x8c] sm:$0xf]
        %v3112 = vld [vmem:[%s444 + $0x90] sm:$0xf]
        %v3113 = vld [vmem:[%s444 + $0x94] sm:$0xf]
        %v3114 = vld [vmem:[%s444 + $0x98] sm:$0xf]
        %v3115 = vld [vmem:[%s444 + $0x9c] sm:$0xf]
        %v3116 = vld [vmem:[%s444 + $0xa0] sm:$0xf]
        %v3117 = vld [vmem:[%s444 + $0xa4] sm:$0xf]
        %v3118 = vld [vmem:[%s444 + $0xa8] sm:$0xf]
        %v3119 = vld [vmem:[%s444 + $0xac] sm:$0xf]
        %v3120 = vld [vmem:[%s444 + $0xb0] sm:$0xf]
        %v3121 = vld [vmem:[%s444 + $0xb4] sm:$0xf]
        %v3122 = vld [vmem:[%s444 + $0xb8] sm:$0xf]
        %v3123 = vld [vmem:[%s444 + $0xbc] sm:$0xf]
        %v3124 = vld [vmem:[%s444 + $0xc0] sm:$0xf]
        %v3125 = vld [vmem:[%s444 + $0xc4] sm:$0xf]
        %v3126 = vld [vmem:[%s444 + $0xc8] sm:$0xf]
        %v3127 = vld [vmem:[%s444 + $0xcc] sm:$0xf]
        %v3128 = vld [vmem:[%s444 + $0xd0] sm:$0xf]
        %v3129 = vld [vmem:[%s444 + $0xd4] sm:$0xf]
        %v3130 = vld [vmem:[%s444 + $0xd8] sm:$0xf]
        %v3131 = vld [vmem:[%s444 + $0xdc] sm:$0xf]
        %v3132 = vld [vmem:[%s444 + $0xe0] sm:$0xf]
        %v3133 = vld [vmem:[%s444 + $0xe4] sm:$0xf]
        %v3134 = vld [vmem:[%s444 + $0xe8] sm:$0xf]
        %v3135 = vld [vmem:[%s444 + $0xec] sm:$0xf]
        %v3136 = vld [vmem:[%s444 + $0xf0] sm:$0xf]
        %v3137 = vld [vmem:[%s444 + $0xf4] sm:$0xf]
        %v3138 = vld [vmem:[%s444 + $0xf8] sm:$0xf]
        %v3139 = vld [vmem:[%s444 + $0xfc] sm:$0xf]
        %v3140 = vld [vmem:[%s444 + $0x100] sm:$0xf]
        %v3141 = vld [vmem:[%s444 + $0x104] sm:$0xf]
        %v3142 = vld [vmem:[%s444 + $0x108] sm:$0xf]
        %v3143 = vld [vmem:[%s444 + $0x10c] sm:$0xf]
        %v3144 = vld [vmem:[%s444 + $0x110] sm:$0xf]
        %v3145 = vld [vmem:[%s444 + $0x114] sm:$0xf]
        %v3146 = vld [vmem:[%s444 + $0x118] sm:$0xf]
        %v3147 = vld [vmem:[%s444 + $0x11c] sm:$0xf]
        %v3148 = vld [vmem:[%s444 + $0x120] sm:$0xf]
        %v3149 = vld [vmem:[%s444 + $0x124] sm:$0xf]
        %v3150 = vld [vmem:[%s444 + $0x128] sm:$0xf]
        %v3151 = vld [vmem:[%s444 + $0x12c] sm:$0xf]
        %v3152 = vld [vmem:[%s444 + $0x130] sm:$0xf]
        %v3153 = vld [vmem:[%s444 + $0x134] sm:$0xf]
        %v3154 = vld [vmem:[%s444 + $0x138] sm:$0xf]
        %v3155 = vld [vmem:[%s444 + $0x13c] sm:$0xf]
        %v3156 = vld [vmem:[%s444 + $0x140] sm:$0xf]
        %v3157 = vld [vmem:[%s444 + $0x144] sm:$0xf]
        %v3158 = vld [vmem:[%s444 + $0x148] sm:$0xf]
        %v3159 = vld [vmem:[%s444 + $0x14c] sm:$0xf]
        %v3160 = vld [vmem:[%s444 + $0x150] sm:$0xf]
        %v3161 = vld [vmem:[%s444 + $0x154] sm:$0xf]
        %v3162 = vld [vmem:[%s444 + $0x158] sm:$0xf]
        %v3163 = vld [vmem:[%s444 + $0x15c] sm:$0xf]
        %v3164 = vld [vmem:[%s444 + $0x160] sm:$0xf]
        %v3165 = vld [vmem:[%s444 + $0x164] sm:$0xf]
        %v3166 = vld [vmem:[%s444 + $0x168] sm:$0xf]
        %v3167 = vld [vmem:[%s444 + $0x16c] sm:$0xf]
        %v3168 = vld [vmem:[%s444 + $0x170] sm:$0xf]
        %v3169 = vld [vmem:[%s444 + $0x174] sm:$0xf]
        %v3170 = vld [vmem:[%s444 + $0x178] sm:$0xf]
        %v3171 = vld [vmem:[%s444 + $0x17c] sm:$0xf]
        %v3268 = vunpack.c.l.b16 %v3076
        %v3269 = vunpack.c.l.b16 %v3077
        %v3270 = vunpack.c.l.b16 %v3078
        %v3271 = vunpack.c.l.b16 %v3079
        %v3272 = vunpack.c.l.b16 %v3080
        %v3273 = vunpack.c.l.b16 %v3081
        %v3274 = vunpack.c.l.b16 %v3082
        %v3275 = vunpack.c.l.b16 %v3083
        %v3276 = vunpack.c.l.b16 %v3084
        %v3277 = vunpack.c.l.b16 %v3085
        %v3278 = vunpack.c.l.b16 %v3086
        %v3279 = vunpack.c.l.b16 %v3087
        %v3280 = vunpack.c.l.b16 %v3088
        %v3281 = vunpack.c.l.b16 %v3089
        %v3282 = vunpack.c.l.b16 %v3090
        %v3283 = vunpack.c.l.b16 %v3091
        %v3284 = vunpack.c.l.b16 %v3092
        %v3285 = vunpack.c.l.b16 %v3093
        %v3286 = vunpack.c.l.b16 %v3094
        %v3287 = vunpack.c.l.b16 %v3095
        %v3288 = vunpack.c.l.b16 %v3096
        %v3289 = vunpack.c.l.b16 %v3097
        %v3290 = vunpack.c.l.b16 %v3098
        %v3291 = vunpack.c.l.b16 %v3099
        %v3292 = vunpack.c.l.b16 %v3100
        %v3293 = vunpack.c.l.b16 %v3101
        %v3294 = vunpack.c.l.b16 %v3102
        %v3295 = vunpack.c.l.b16 %v3103
        %v3296 = vunpack.c.l.b16 %v3104
        %v3297 = vunpack.c.l.b16 %v3105
        %v3298 = vunpack.c.l.b16 %v3106
        %v3299 = vunpack.c.l.b16 %v3107
        %v3300 = vunpack.c.l.b16 %v3108
        %v3301 = vunpack.c.l.b16 %v3109
        %v3302 = vunpack.c.l.b16 %v3110
        %v3303 = vunpack.c.l.b16 %v3111
        %v3304 = vunpack.c.l.b16 %v3112
        %v3305 = vunpack.c.l.b16 %v3113
        %v3306 = vunpack.c.l.b16 %v3114
        %v3307 = vunpack.c.l.b16 %v3115
        %v3308 = vunpack.c.l.b16 %v3116
        %v3309 = vunpack.c.l.b16 %v3117
        %v3310 = vunpack.c.l.b16 %v3118
        %v3311 = vunpack.c.l.b16 %v3119
        %v3312 = vunpack.c.l.b16 %v3120
        %v3313 = vunpack.c.l.b16 %v3121
        %v3314 = vunpack.c.l.b16 %v3122
        %v3315 = vunpack.c.l.b16 %v3123
        %v3316 = vunpack.c.l.b16 %v3124
        %v3317 = vunpack.c.l.b16 %v3125
        %v3318 = vunpack.c.l.b16 %v3126
        %v3319 = vunpack.c.l.b16 %v3127
        %v3320 = vunpack.c.l.b16 %v3128
        %v3321 = vunpack.c.l.b16 %v3129
        %v3322 = vunpack.c.l.b16 %v3130
        %v3323 = vunpack.c.l.b16 %v3131
        %v3324 = vunpack.c.l.b16 %v3132
        %v3325 = vunpack.c.l.b16 %v3133
        %v3326 = vunpack.c.l.b16 %v3134
        %v3327 = vunpack.c.l.b16 %v3135
        %v3328 = vunpack.c.l.b16 %v3136
        %v3329 = vunpack.c.l.b16 %v3137
        %v3330 = vunpack.c.l.b16 %v3138
        %v3331 = vunpack.c.l.b16 %v3139
        %v3332 = vunpack.c.l.b16 %v3140
        %v3333 = vunpack.c.l.b16 %v3141
        %v3334 = vunpack.c.l.b16 %v3142
        %v3335 = vunpack.c.l.b16 %v3143
        %v3336 = vunpack.c.l.b16 %v3144
        %v3337 = vunpack.c.l.b16 %v3145
        %v3338 = vunpack.c.l.b16 %v3146
        %v3339 = vunpack.c.l.b16 %v3147
        %v3340 = vunpack.c.l.b16 %v3148
        %v3341 = vunpack.c.l.b16 %v3149
        %v3342 = vunpack.c.l.b16 %v3150
        %v3343 = vunpack.c.l.b16 %v3151
        %v3344 = vunpack.c.l.b16 %v3152
        %v3345 = vunpack.c.l.b16 %v3153
        %v3346 = vunpack.c.l.b16 %v3154
        %v3347 = vunpack.c.l.b16 %v3155
        %v3348 = vunpack.c.l.b16 %v3156
        %v3349 = vunpack.c.l.b16 %v3157
        %v3350 = vunpack.c.l.b16 %v3158
        %v3351 = vunpack.c.l.b16 %v3159
        %v3352 = vunpack.c.l.b16 %v3160
        %v3353 = vunpack.c.l.b16 %v3161
        %v3354 = vunpack.c.l.b16 %v3162
        %v3355 = vunpack.c.l.b16 %v3163
        %v3356 = vunpack.c.l.b16 %v3164
        %v3357 = vunpack.c.l.b16 %v3165
        %v3358 = vunpack.c.l.b16 %v3166
        %v3359 = vunpack.c.l.b16 %v3167
        %v3360 = vunpack.c.l.b16 %v3168
        %v3361 = vunpack.c.l.b16 %v3169
        %v3362 = vunpack.c.l.b16 %v3170
        %v3363 = vunpack.c.l.b16 %v3171
        %v3364 = vpack.c.b16 %v3269, %v3268
        %v3365 = vpack.c.b16 %v3271, %v3270
        %v3366 = vpack.c.b16 %v3273, %v3272
        %v3367 = vpack.c.b16 %v3275, %v3274
        %v3368 = vpack.c.b16 %v3277, %v3276
        %v3369 = vpack.c.b16 %v3279, %v3278
        %v3370 = vpack.c.b16 %v3281, %v3280
        %v3371 = vpack.c.b16 %v3283, %v3282
        %v3372 = vpack.c.b16 %v3285, %v3284
        %v3373 = vpack.c.b16 %v3287, %v3286
        %v3374 = vpack.c.b16 %v3289, %v3288
        %v3375 = vpack.c.b16 %v3291, %v3290
        %v3376 = vpack.c.b16 %v3293, %v3292
        %v3377 = vpack.c.b16 %v3295, %v3294
        %v3378 = vpack.c.b16 %v3297, %v3296
        %v3379 = vpack.c.b16 %v3299, %v3298
        %v3380 = vpack.c.b16 %v3301, %v3300
        %v3381 = vpack.c.b16 %v3303, %v3302
        %v3382 = vpack.c.b16 %v3305, %v3304
        %v3383 = vpack.c.b16 %v3307, %v3306
        %v3384 = vpack.c.b16 %v3309, %v3308
        %v3385 = vpack.c.b16 %v3311, %v3310
        %v3386 = vpack.c.b16 %v3313, %v3312
        %v3387 = vpack.c.b16 %v3315, %v3314
        %v3388 = vpack.c.b16 %v3317, %v3316
        %v3389 = vpack.c.b16 %v3319, %v3318
        %v3390 = vpack.c.b16 %v3321, %v3320
        %v3391 = vpack.c.b16 %v3323, %v3322
        %v3392 = vpack.c.b16 %v3325, %v3324
        %v3393 = vpack.c.b16 %v3327, %v3326
        %v3394 = vpack.c.b16 %v3329, %v3328
        %v3395 = vpack.c.b16 %v3331, %v3330
        %v3396 = vpack.c.b16 %v3333, %v3332
        %v3397 = vpack.c.b16 %v3335, %v3334
        %v3398 = vpack.c.b16 %v3337, %v3336
        %v3399 = vpack.c.b16 %v3339, %v3338
        %v3400 = vpack.c.b16 %v3341, %v3340
        %v3401 = vpack.c.b16 %v3343, %v3342
        %v3402 = vpack.c.b16 %v3345, %v3344
        %v3403 = vpack.c.b16 %v3347, %v3346
        %v3404 = vpack.c.b16 %v3349, %v3348
        %v3405 = vpack.c.b16 %v3351, %v3350
        %v3406 = vpack.c.b16 %v3353, %v3352
        %v3407 = vpack.c.b16 %v3355, %v3354
        %v3408 = vpack.c.b16 %v3357, %v3356
        %v3409 = vpack.c.b16 %v3359, %v3358
        %v3410 = vpack.c.b16 %v3361, %v3360
        %v3411 = vpack.c.b16 %v3363, %v3362
        %3460 = vmatpush.bf16.msra.mxu0 %v3371
        %3461 = vmatpush.bf16.msra.mxu0 %v3370
        %3462 = vmatpush.bf16.msra.mxu0 %v3369
        %3463 = vmatpush.bf16.msra.mxu0 %v3368
        %3464 = vmatpush.bf16.msra.mxu0 %v3367
        %3465 = vmatpush.bf16.msra.mxu0 %v3366
        %3466 = vmatpush.bf16.msra.mxu0 %v3365
        %3467 = vmatpush.bf16.msra.mxu0 %v3364
        %3468 = vmatmul.bf16.gmra.mxu0 %v3070
        %v3469 = vpop.f32.mrf.mxu0
        %v3470 = vadd.f32 0.0, %v3469
        %v3471 = vpop.f32.mrf.mxu0
        %v3472 = vadd.f32 0.0, %v3471
        %3473 = vdwg.mxu0
        %3474 = vmatpush.bf16.msra.mxu0 %v3379
        %3475 = vmatpush.bf16.msra.mxu0 %v3378
        %3476 = vmatpush.bf16.msra.mxu0 %v3377
        %3477 = vmatpush.bf16.msra.mxu0 %v3376
        %3478 = vmatpush.bf16.msra.mxu0 %v3375
        %3479 = vmatpush.bf16.msra.mxu0 %v3374
        %3480 = vmatpush.bf16.msra.mxu0 %v3373
        %3481 = vmatpush.bf16.msra.mxu0 %v3372
        %3482 = vmatmul.bf16.gmra.mxu0 %v3071
        %v3483 = vpop.f32.mrf.mxu0
        %v3484 = vadd.f32 %v3470, %v3483
        %v3485 = vpop.f32.mrf.mxu0
        %v3486 = vadd.f32 %v3472, %v3485
        %3487 = vdwg.mxu0
        %3488 = vmatpush.bf16.msra.mxu0 %v3387
        %3489 = vmatpush.bf16.msra.mxu0 %v3386
        %3490 = vmatpush.bf16.msra.mxu0 %v3385
        %3491 = vmatpush.bf16.msra.mxu0 %v3384
        %3492 = vmatpush.bf16.msra.mxu0 %v3383
        %3493 = vmatpush.bf16.msra.mxu0 %v3382
        %3494 = vmatpush.bf16.msra.mxu0 %v3381
        %3495 = vmatpush.bf16.msra.mxu0 %v3380
        %3496 = vmatmul.bf16.gmra.mxu0 %v3072
        %v3497 = vpop.f32.mrf.mxu0
        %v3498 = vadd.f32 %v3484, %v3497
        %v3499 = vpop.f32.mrf.mxu0
        %v3500 = vadd.f32 %v3486, %v3499
        %3501 = vdwg.mxu0
        %3502 = vmatpush.bf16.msra.mxu0 %v3395
        %3503 = vmatpush.bf16.msra.mxu0 %v3394
        %3504 = vmatpush.bf16.msra.mxu0 %v3393
        %3505 = vmatpush.bf16.msra.mxu0 %v3392
        %3506 = vmatpush.bf16.msra.mxu0 %v3391
        %3507 = vmatpush.bf16.msra.mxu0 %v3390
        %3508 = vmatpush.bf16.msra.mxu0 %v3389
        %3509 = vmatpush.bf16.msra.mxu0 %v3388
        %3510 = vmatmul.bf16.gmra.mxu0 %v3073
        %v3511 = vpop.f32.mrf.mxu0
        %v3512 = vadd.f32 %v3498, %v3511
        %v3513 = vpop.f32.mrf.mxu0
        %v3514 = vadd.f32 %v3500, %v3513
        %3515 = vdwg.mxu0
        %3516 = vmatpush.bf16.msra.mxu0 %v3403
        %3517 = vmatpush.bf16.msra.mxu0 %v3402
        %3518 = vmatpush.bf16.msra.mxu0 %v3401
        %3519 = vmatpush.bf16.msra.mxu0 %v3400
        %3520 = vmatpush.bf16.msra.mxu0 %v3399
        %3521 = vmatpush.bf16.msra.mxu0 %v3398
        %3522 = vmatpush.bf16.msra.mxu0 %v3397
        %3523 = vmatpush.bf16.msra.mxu0 %v3396
        %3524 = vmatmul.bf16.gmra.mxu0 %v3074
        %v3525 = vpop.f32.mrf.mxu0
        %v3526 = vadd.f32 %v3512, %v3525
        %v3527 = vpop.f32.mrf.mxu0
        %v3528 = vadd.f32 %v3514, %v3527
        %3529 = vdwg.mxu0
        %3530 = vmatpush.bf16.msra.mxu0 %v3411
        %3531 = vmatpush.bf16.msra.mxu0 %v3410
        %3532 = vmatpush.bf16.msra.mxu0 %v3409
        %3533 = vmatpush.bf16.msra.mxu0 %v3408
        %3534 = vmatpush.bf16.msra.mxu0 %v3407
        %3535 = vmatpush.bf16.msra.mxu0 %v3406
        %3536 = vmatpush.bf16.msra.mxu0 %v3405
        %3537 = vmatpush.bf16.msra.mxu0 %v3404
        %3538 = vmatmul.bf16.gmra.mxu0 %v3075
        %v3539 = vpop.f32.mrf.mxu0
        %v3540 = vadd.f32 %v3526, %v3539
        %v3541 = vpop.f32.mrf.mxu0
        %v3542 = vadd.f32 %v3528, %v3541
        %3543 = vdwg.mxu0
        %v3544 = vadd.f32 %v3540, %v3542
        %v3545 = vrot.slane %v3544, 4
        %v3546 = vadd.f32 %v3544, %v3545
        %v3547 = vrot.slane %v3546, 2
        %v3548 = vadd.f32 %v3546, %v3547
        %v3549 = vrot.slane %v3548, 1
        %v3550 = vadd.f32 %v3548, %v3549
        %v3551 = vmul.f32 %v3540, %v3540
        %v3552 = vmul.f32 %v3542, %v3542
        %v3553 = vadd.f32 %v3551, %v3552
        %v3554 = vrot.slane %v3553, 4
        %v3555 = vadd.f32 %v3553, %v3554
        %v3556 = vrot.slane %v3555, 2
        %v3557 = vadd.f32 %v3555, %v3556
        %v3558 = vrot.slane %v3557, 1
        %v3559 = vadd.f32 %v3557, %v3558
        %v3560 = vmul.f32 %v3550, 0.0625
        %v3561 = vmul.f32 %v3559, 0.0625
        %v3562 = vmul.f32 %v3560, %v3560
        %v3563 = vsub.f32 %v3561, %v3562
        %v3564 = vmax.f32 %v3563, 0.0
        %v3565 = vsub.f32 %v3540, %v3560
        %v3566 = vsub.f32 %v3542, %v3560
        %v3567 = vadd.f32 %v3564, 1e-05
        %v3568 = vrsqrt.pop %v3567
        %v3569 = vmul.f32 %v3568, %v3567
        %v3570 = vmul.f32 %v3569, %v3568
        %v3571 = vmul.f32 0.5, %v3570
        %v3572 = vsub.f32 1.5, %v3571
        %v3573 = vmul.f32 %v3568, %v3572
        %vm3574 = vweird.f32 %v3567
        %vm3575 = vweird.f32 %v3568
        %vm3576 = vmor %vm3574, %vm3575
        %v3577 = vsel %vm3576, %v3568, %v3573
        %v3578 = vld [vmem:[%s453] sm:$0x1]
        %v3579 = vmul.f32 %v3577, %v3578
        %v3580 = vperm.slane %v3579, 0
        %v3581 = vmul.f32 %v3565, %v3580
        %v3582 = vmul.f32 %v3566, %v3580
        %v3583 = vld [vmem:[%s462] sm:$0x1]
        %v3585 = vperm.slane %v3583, 0
        %v3587 = vadd.f32 %v3581, %v3585
        %v3588 = vadd.f32 %v3582, %v3585
        %3589 = vst [vmem:[%s521] sm:$0xff] %v3587
        %3590 = vst [vmem:[%s521 + $0x8] sm:$0xff] %v3588
        %s3591 = sand.u32 %s223, 1
        %s3592 = scalar_lea.sflag [#allocation4], %s3591
        %s3593 = sand.u32 %s223, 1
        %s3594 = smul.addr %s3593, 16
        %s3595 = scalar_lea.vmem [#allocation14], %s3594
        // Predicated region
        $region77: #{tpu_custom_call.1} parent=47 // pred_check
          %p3596 = pneg %p233
        $region78: #{tpu_custom_call.1} parent=47 // pred_check_branch
          %3598 = sbr.rel (%p3596) target = $region80
        $region79: #{tpu_custom_call.1} parent=47 // pred_region
          %3600 = vsyncadd %s3592, 0
          %s3601 = smul.addr %s33, 2
          %s3602 = smul.addr %s3601, 8
          %s3603 = scalar_lea.hbm %s7, %s3602
          %s3604 = sshll.u32 %s3595, 4
          %s3605 = int_to_ptr.vmem [resolvable:$true] %s3604
          %s3606 = sshll.u32 %s3603, 4
          %s3607 = int_to_ptr.hbm [resolvable:$true] %s3606
          %3612 = dma.vmem_to_hbm [thread:$0]  %s3605, 256, %s3607, %s3592, 128, 128, 8
        $region80: #{tpu_custom_call.1} parent=47 // pred_fallthru
          _
      $region48: #{tpu_custom_call.1} parent=5 // pred_fallthru
        _
      %p3613 = scmp.le.s32.totalorder 2, %s28
      // Predicated region
      $region81: #{tpu_custom_call.1} parent=5 // pred_check
        %p3614 = pneg %p3613
      $region82: #{tpu_custom_call.1} parent=5 // pred_check_branch
        %3616 = sbr.rel (%p3614) target = $region84
      $region83: #{tpu_custom_call.1} parent=5 // pred_region
        %s3617 = ssub.s32 %s28, 2
        // Predicated region
        $region85: #{tpu_custom_call.1} parent=83 // pred_check
          %p3618 = pneg %p239
        $region86: #{tpu_custom_call.1} parent=83 // pred_check_branch
          %3620 = sbr.rel (%p3618) target = $region88
        $region87: #{tpu_custom_call.1} parent=83 // pred_region
          %s3621 = sand.u32 %s224, 1
          %s3622 = scalar_lea.sflag [#allocation4], %s3621
          %s3623 = sand.u32 %s224, 1
          %s3624 = smul.addr %s3623, 16
          %s3625 = scalar_lea.vmem [#allocation14], %s3624
          %3627 = dma.done %s3622, 256
        $region88: #{tpu_custom_call.1} parent=83 // pred_fallthru
          _
      $region84: #{tpu_custom_call.1} parent=5 // pred_fallthru
        _
    $region6: #{tpu_custom_call.1} parent=1 // loop_footer
      %s32 = sadd.s32 1, %s28
    $region7: #{tpu_custom_call.1} parent=1 // loop_footer_branch
      %27 = sbr.rel target = $region3
    $region8: #{tpu_custom_call.1} parent=1 // loop_exit
      _
    %3628 = vsyncpa [#allocation3], 1
    %s3629 = scalar_lea.sflag [#allocation3], 1
    %3630 = vsyncpa %s3629, 1
    %3631 = vsyncpa [#allocation6], 1
    %s3632 = scalar_lea.sflag [#allocation6], 1
    %3633 = vsyncpa %s3632, 1
    %3634 = vsyncpa [#allocation9], 1
    %s3635 = scalar_lea.sflag [#allocation9], 1
    %3636 = vsyncpa %s3635, 1
    %3637 = vsyncpa [#allocation12], 1
    %s3638 = scalar_lea.sflag [#allocation12], 1
    %3639 = vsyncpa %s3638, 1
    %3640 = vsyncpa [#allocation4], 1
    %s3641 = scalar_lea.sflag [#allocation4], 1
    %3642 = vsyncpa %s3641, 1

</llo_original>
